<compile_context>
chip_gen: v6e
topology: v6e:2x2x1
jax: 0.10.0
libtpu: 0.0.40
codegen_flags: <defaults>
</compile_context>

<pallas_src>
import functools

import jax
import jax.numpy as jnp
from jax.experimental import pallas as pl
from jax.experimental.pallas import tpu as pltpu

EPS = 1e-5
CPAD = 128      # channel padding -> lane-dense outputs
TM_MAX = 256    # max M-tile for the parallel grid axis


def _pick_tile(m, tmax=TM_MAX):
    """Largest divisor of m that is <= tmax and a multiple of 8 (else m itself)."""
    if m <= tmax:
        return m
    for tm in range(tmax, 7, -8):
        if m % tm == 0:
            return tm
    return m


# --------------------------------------------------------------------------------------
# Pallas kernels
# --------------------------------------------------------------------------------------
def _conv_bn_act_kernel(*refs, apply_relu, add_residual):
    """Fused im2col-conv matmul + (folded-BN) bias + optional residual + optional ReLU.

    x_ref:   (TM, K)      bf16 im2col patches
    w_ref:   (K, CPAD)    bf16 conv weight with BN scale folded in (zero-padded cols)
    b_ref:   (1, CPAD)    f32  folded BN bias
    res_ref: (TM, CPAD)   f32  optional residual (already channel-padded)
    o_ref:   (TM, CPAD)   f32  lane-dense output
    """
    if add_residual:
        x_ref, w_ref, b_ref, res_ref, o_ref = refs
    else:
        x_ref, w_ref, b_ref, o_ref = refs
        res_ref = None

    y = jnp.dot(x_ref[...], w_ref[...], preferred_element_type=jnp.float32)
    y = y + b_ref[...]
    if add_residual:
        y = y + res_ref[...]
    if apply_relu:
        y = jnp.maximum(y, 0.0)
    o_ref[...] = y


def _final_conv_pool_fc_kernel(x_ref, w_ref, b_ref, res_ref, pool_ref, fcw_ref, fcb_ref,
                               o_ref):
    """Last conv2+bn2+residual+ReLU fused with global-average-pool + fc.

    x_ref:    (M, K)        bf16 im2col patches of the last conv (M = N*H*W, tiny)
    w_ref:    (K, CPAD)     bf16 folded conv weight
    b_ref:    (1, CPAD)     f32  folded BN bias
    res_ref:  (M, CPAD)     f32  residual
    pool_ref: (N, M)        f32  average-pool matrix (1/HW in the right positions)
    fcw_ref:  (CPAD, CPAD)  f32  fc weight (zero-padded rows/cols)
    fcb_ref:  (1, CPAD)     f32  fc bias (zero-padded)
    o_ref:    (N, CPAD)     f32  padded logits
    """
    y = jnp.dot(x_ref[...], w_ref[...], preferred_element_type=jnp.float32)
    y = jnp.maximum(y + b_ref[...] + res_ref[...], 0.0)                      # (M, CPAD)
    pooled = jnp.dot(pool_ref[...], y, preferred_element_type=jnp.float32)   # (N, CPAD)
    o_ref[...] = (
        jnp.dot(pooled, fcw_ref[...], preferred_element_type=jnp.float32) + fcb_ref[...]
    )


# --------------------------------------------------------------------------------------
# Wrappers (XLA glue: padding, im2col with *static* strides, reshapes)
# --------------------------------------------------------------------------------------
def _im2col(x, ksize, stride, padding):
    """x: (N, H, W, C) NHWC -> (N*out_h*out_w, ksize*ksize*C), out_h, out_w.

    `ksize`, `stride`, `padding` MUST be Python ints (static) — they come from the static
    network config, never from a traced value.
    """
    n, h, w, c = x.shape
    xp = (jnp.pad(x, ((0, 0), (padding, padding), (padding, padding), (0, 0)))
          if padding > 0 else x)
    oh = (h + 2 * padding - ksize) // stride + 1
    ow = (w + 2 * padding - ksize) // stride + 1
    cols = []
    for i in range(ksize):
        for j in range(ksize):
            cols.append(xp[:,
                           i: i + stride * (oh - 1) + 1: stride,
                           j: j + stride * (ow - 1) + 1: stride,
                           :])
    patches = cols[0] if len(cols) == 1 else jnp.concatenate(cols, axis=-1)
    return patches.reshape(n * oh * ow, ksize * ksize * c), oh, ow


def conv_bn_act(x, w_folded, bias, *, ksize, stride, padding, relu=True, residual=None):
    """Fused Conv2d(bias=False) + BatchNorm(eval, folded) + optional residual + ReLU.

    x: (N, H, W, Cin) NHWC (true channel count).
    w_folded: (ksize*ksize*Cin, CPAD) bf16.   bias: (1, CPAD) f32.
    residual (optional): (N, out_h, out_w, CPAD) f32.
    Returns (N, out_h, out_w, CPAD) f32 (channel-padded).
    """
    n = x.shape[0]
    patches, oh, ow = _im2col(x, ksize, stride, padding)
    m, k = patches.shape
    cpad = w_folded.shape[-1]
    patches = patches.astype(jnp.bfloat16)

    # M-tiling: parallel grid axis (sharded across TensorCores on v7x).
    tm = _pick_tile(m)
    grid = (m // tm,)

    args = [patches, w_folded, bias]
    in_specs = [
        pl.BlockSpec((tm, k), lambda i: (i, 0)),
        pl.BlockSpec((k, cpad), lambda i: (0, 0)),
        pl.BlockSpec((1, cpad), lambda i: (0, 0)),
    ]
    add_res = residual is not None
    if add_res:
        args.append(residual.reshape(m, cpad).astype(jnp.float32))
        in_specs.append(pl.BlockSpec((tm, cpad), lambda i: (i, 0)))

    kernel = functools.partial(_conv_bn_act_kernel, apply_relu=relu, add_residual=add_res)
    out = pl.pallas_call(
        kernel,
        grid=grid,
        in_specs=in_specs,
        out_specs=pl.BlockSpec((tm, cpad), lambda i: (i, 0)),
        out_shape=jax.ShapeDtypeStruct((m, cpad), jnp.float32),
        compiler_params=pltpu.CompilerParams(dimension_semantics=("parallel",)),
    )(*args)
    return out.reshape(n, oh, ow, cpad)


def final_conv_pool_fc(x, w_folded, bias, residual, fc_w, fc_b):
    """Last conv2+bn2+residual+ReLU + AdaptiveAvgPool2d((1,1)) + Linear, one kernel."""
    n = x.shape[0]
    patches, oh, ow = _im2col(x, 3, 1, 1)
    m, _ = patches.shape
    hw = oh * ow
    cpad = w_folded.shape[-1]
    patches = patches.astype(jnp.bfloat16)
    res = residual.reshape(m, cpad).astype(jnp.float32)
    # pool_mat[i, j] = 1/hw iff row j belongs to batch element i (rows ordered b*hw + s).
    pool_mat = jnp.repeat(jnp.eye(n, dtype=jnp.float32), hw, axis=1) / float(hw)
    return pl.pallas_call(
        _final_conv_pool_fc_kernel,
        out_shape=jax.ShapeDtypeStruct((n, cpad), jnp.float32),
    )(patches, w_folded, bias, res, pool_mat, fc_w, fc_b)


# --------------------------------------------------------------------------------------
# Parameter construction (deterministic; BN folding + channel padding hoisted here)
# --------------------------------------------------------------------------------------
def _kaiming_conv(key, kh, kw, cin, cout):
    # kaiming_normal_(mode='fan_out', nonlinearity='relu'): std = sqrt(2 / (cout*kh*kw))
    std = (2.0 / (cout * kh * kw)) ** 0.5
    return jax.random.normal(key, (kh, kw, cin, cout), jnp.float32) * std


def _fold_bn_into_conv(w_hwio, cpad=CPAD):
    """Eval-mode BN (gamma=1, beta=0, mean=0, var=1) folded into the conv weight."""
    kh, kw, cin, cout = w_hwio.shape
    assert cout <= cpad, (cout, cpad)
    gamma = jnp.ones((cout,), jnp.float32)
    beta = jnp.zeros((cout,), jnp.float32)
    mean = jnp.zeros((cout,), jnp.float32)
    var = jnp.ones((cout,), jnp.float32)
    scale = gamma * jax.lax.rsqrt(var + EPS)
    bias = beta - mean * scale
    w2 = w_hwio.reshape(kh * kw * cin, cout) * scale[None, :]
    w2 = jnp.pad(w2, ((0, 0), (0, cpad - cout))).astype(jnp.bfloat16)
    b2 = jnp.pad(bias, (0, cpad - cout)).reshape(1, cpad).astype(jnp.float32)
    return w2, b2


def init_resnet(key, *, inplanes=8, scales=(2, 2, 2), layers=(1, 1, 1, 1), num_classes=10):
    """Mirrors ResNet(BasicBlock, layers, num_classes=10, inplanes, scales) __init__."""
    keys = iter(jax.random.split(key, 64))
    params = {}

    # Stem: num_classes==10 -> Conv2d(3, inplanes, 3, stride=1, pad=1) + BN + ReLU,
    # maxpool = Identity.
    params["stem_w"], params["stem_b"] = _fold_bn_into_conv(
        _kaiming_conv(next(keys), 3, 3, 3, inplanes))

    plane_list = [
        inplanes,
        inplanes * scales[0],
        inplanes * scales[0] * scales[1],
        inplanes * scales[0] * scales[1] * scales[2],
    ]
    stride_list = [1, 2, 2, 2]

    blocks, cfgs = [], []
    cur_in = inplanes
    for planes, lstride, nblk in zip(plane_list, stride_list, layers):
        for b in range(nblk):
            stride = lstride if b == 0 else 1
            cin = cur_in
            has_down = (stride != 1 or cin != planes)
            p = {}
            p["conv1_w"], p["conv1_b"] = _fold_bn_into_conv(
                _kaiming_conv(next(keys), 3, 3, cin, planes))
            p["conv2_w"], p["conv2_b"] = _fold_bn_into_conv(
                _kaiming_conv(next(keys), 3, 3, planes, planes))
            if has_down:
                # downsample = conv1x1(stride) + BN (down_block_type='default')
                p["down_w"], p["down_b"] = _fold_bn_into_conv(
                    _kaiming_conv(next(keys), 1, 1, cin, planes))
            blocks.append(p)
            cfgs.append((stride, cin, planes, has_down))
            cur_in = planes
    params["blocks"] = blocks

    # fc: Linear(final_planes, num_classes), padded to (CPAD, CPAD) / (1, CPAD).
    c_final = plane_list[-1]
    bound = 1.0 / (c_final ** 0.5)
    fc_w = jax.random.uniform(next(keys), (c_final, num_classes), jnp.float32,
                              minval=-bound, maxval=bound)
    fc_b = jax.random.uniform(next(keys), (num_classes,), jnp.float32,
                              minval=-bound, maxval=bound)
    params["fc_w"] = jnp.pad(fc_w, ((0, CPAD - c_final), (0, CPAD - num_classes)))
    params["fc_b"] = jnp.pad(fc_b, (0, CPAD - num_classes)).reshape(1, CPAD)

    # Static config (Python ints/bools only — never traced under jit).
    config = {"blocks": tuple(cfgs), "num_classes": num_classes, "inplanes": inplanes}
    return params, config


# --------------------------------------------------------------------------------------
# Forward pass (BasicBlock, default flags: use_bn=True, use_relu=True,
# skip_last_relu=False, use_dual_skip=False, post_res_bn=False)
# --------------------------------------------------------------------------------------
def resnet_forward(x_nchw, params, config):
    # PyTorch input is NCHW; kernels use NHWC.
    x = jnp.transpose(x_nchw, (0, 2, 3, 1)).astype(jnp.float32)

    # stem: conv1 -> bn1 -> relu -> maxpool(Identity for num_classes=10)
    x = conv_bn_act(x, params["stem_w"], params["stem_b"],
                    ksize=3, stride=1, padding=1, relu=True)     # (N, H, W, CPAD)

    cfgs = config["blocks"]
    nb = len(cfgs)
    logits_pad = None
    for bi, (cfg, p) in enumerate(zip(cfgs, params["blocks"])):
        stride, cin, planes, has_down = cfg
        x_true = x[..., :cin]
        identity = x                                             # already channel-padded
        # conv1 -> bn1 -> relu
        out = conv_bn_act(x_true, p["conv1_w"], p["conv1_b"],
                          ksize=3, stride=stride, padding=1, relu=True)
        # downsample(x) = conv1x1(stride) -> bn
        if has_down:
            identity = conv_bn_act(x_true, p["down_w"], p["down_b"],
                                   ksize=1, stride=stride, padding=0, relu=False)
        out_true = out[..., :planes]
        if bi == nb - 1:
            # Last block: conv2 -> bn2 -> (+identity) -> relu -> avgpool -> fc, one kernel.
            logits_pad = final_conv_pool_fc(out_true, p["conv2_w"], p["conv2_b"],
                                            identity, params["fc_w"], params["fc_b"])
        else:
            # conv2 -> bn2 -> (+identity) -> relu  (fused in one kernel call)
            x = conv_bn_act(out_true, p["conv2_w"], p["conv2_b"],
                            ksize=3, stride=1, padding=1, relu=True, residual=identity)

    return logits_pad[:, :config["num_classes"]]


# --------------------------------------------------------------------------------------
if __name__ == "__main__":
    key = jax.random.PRNGKey(0)
    k_param, k_input = jax.random.split(key)

    # Small configuration consistent with the module:
    #   ResNet(BasicBlock, layers=[1,1,1,1], num_classes=10, inplanes=8, scales=[2,2,2])
    params, config = init_resnet(k_param, inplanes=8, scales=(2, 2, 2),
                                 layers=(1, 1, 1, 1), num_classes=10)

    # Input: NCHW, 3 channels (RGB), 16x16 spatial, batch 2.
    x = jax.random.normal(k_input, (2, 3, 16, 16), jnp.float32)

    fwd = jax.jit(functools.partial(resnet_forward, config=config))
    out = jax.block_until_ready(fwd(x, params))
    assert out.shape == (2, 10), out.shape
    assert bool(jnp.all(jnp.isfinite(out)))
    print("KERNEL_OK")
</pallas_src>

<mosaic_0001>
module attributes {stable_mosaic.version = 11 : i64} {
  func.func @_conv_bn_act_kernel(%arg0: i32, %arg1: memref<256x27xbf16, #tpu.memory_space<vmem>>, %arg2: memref<27x128xbf16, #tpu.memory_space<vmem>>, %arg3: memref<1x128xf32, #tpu.memory_space<vmem>>, %arg4: memref<256x128xf32, #tpu.memory_space<vmem>>) attributes {dimension_semantics = [#tpu.dimension_semantics<parallel>], iteration_bounds = array<i64: 2>, scalar_prefetch = 0 : i64, scratch_operands = 0 : i64, tpu.core_type = #tpu.core_type<tc>, window_params = [{transform_indices = @transform_0, window_bounds = array<i64: 256, 27>}, {pipeline_mode = #tpu.pipeline_mode<synchronous>, transform_indices = @transform_1, window_bounds = array<i64: 27, 128>}, {pipeline_mode = #tpu.pipeline_mode<synchronous>, transform_indices = @transform_2, window_bounds = array<i64: 1, 128>}, {transform_indices = @transform_3, window_bounds = array<i64: 256, 128>}]} {
    %c0 = arith.constant 0 : index
    %c0_0 = arith.constant 0 : index
    %0 = vector.load %arg1[%c0, %c0_0] : memref<256x27xbf16, #tpu.memory_space<vmem>>, vector<256x27xbf16>
    %c0_1 = arith.constant 0 : index
    %c0_2 = arith.constant 0 : index
    %1 = vector.load %arg2[%c0_1, %c0_2] : memref<27x128xbf16, #tpu.memory_space<vmem>>, vector<27x128xbf16>
    %cst = arith.constant dense<0.000000e+00> : vector<256x128xf32>
    %2 = tpu.matmul %0, %1, %cst {dimension_numbers = #tpu.dot_dimension_numbers<[1], [0], [0], [1], [0, 0, 1, 1], [], []>} : vector<256x27xbf16>, vector<27x128xbf16>, vector<256x128xf32> -> vector<256x128xf32>
    %c0_3 = arith.constant 0 : index
    %c0_4 = arith.constant 0 : index
    %3 = vector.load %arg3[%c0_3, %c0_4] : memref<1x128xf32, #tpu.memory_space<vmem>>, vector<1x128xf32>
    %4 = vector.broadcast %3 : vector<1x128xf32> to vector<256x128xf32>
    %5 = arith.addf %2, %4 : vector<256x128xf32>
    %cst_5 = arith.constant 0.000000e+00 : f32
    %6 = vector.broadcast %cst_5 : f32 to vector<256x128xf32>
    %7 = arith.maximumf %5, %6 : vector<256x128xf32>
    %c0_6 = arith.constant 0 : index
    %c0_7 = arith.constant 0 : index
    %8 = vector.load %arg4[%c0_6, %c0_7] : memref<256x128xf32, #tpu.memory_space<vmem>>, vector<256x128xf32>
    tpu.vector_store %arg4[%c0_6, %c0_7], %7 {strides = array<i32>} : memref<256x128xf32, #tpu.memory_space<vmem>>, vector<256x128xf32>,
    return
  }
  func.func @transform_0(%arg0: i32) -> (i32, i32) {
    %c0_i32 = arith.constant 0 : i32
    %c0_i32_0 = arith.constant 0 : i32
    return %arg0, %c0_i32 : i32, i32
  }
  func.func @transform_1(%arg0: i32) -> (i32, i32) {
    %c0_i32 = arith.constant 0 : i32
    %c0_i32_0 = arith.constant 0 : i32
    %c0_i32_1 = arith.constant 0 : i32
    return %c0_i32, %c0_i32_0 : i32, i32
  }
  func.func @transform_2(%arg0: i32) -> (i32, i32) {
    %c0_i32 = arith.constant 0 : i32
    %c0_i32_0 = arith.constant 0 : i32
    %c0_i32_1 = arith.constant 0 : i32
    return %c0_i32, %c0_i32_0 : i32, i32
  }
  func.func @transform_3(%arg0: i32) -> (i32, i32) {
    %c0_i32 = arith.constant 0 : i32
    %c0_i32_0 = arith.constant 0 : i32
    return %arg0, %c0_i32 : i32, i32
  }
}

module attributes {stable_mosaic.version = 11 : i64} {
  func.func @_conv_bn_act_kernel(%arg0: i32, %arg1: memref<256x72xbf16, #tpu.memory_space<vmem>>, %arg2: memref<72x128xbf16, #tpu.memory_space<vmem>>, %arg3: memref<1x128xf32, #tpu.memory_space<vmem>>, %arg4: memref<256x128xf32, #tpu.memory_space<vmem>>) attributes {dimension_semantics = [#tpu.dimension_semantics<parallel>], iteration_bounds = array<i64: 2>, scalar_prefetch = 0 : i64, scratch_operands = 0 : i64, tpu.core_type = #tpu.core_type<tc>, window_params = [{transform_indices = @transform_0, window_bounds = array<i64: 256, 72>}, {pipeline_mode = #tpu.pipeline_mode<synchronous>, transform_indices = @transform_1, window_bounds = array<i64: 72, 128>}, {pipeline_mode = #tpu.pipeline_mode<synchronous>, transform_indices = @transform_2, window_bounds = array<i64: 1, 128>}, {transform_indices = @transform_3, window_bounds = array<i64: 256, 128>}]} {
    %c0 = arith.constant 0 : index
    %c0_0 = arith.constant 0 : index
    %0 = vector.load %arg1[%c0, %c0_0] : memref<256x72xbf16, #tpu.memory_space<vmem>>, vector<256x72xbf16>
    %c0_1 = arith.constant 0 : index
    %c0_2 = arith.constant 0 : index
    %1 = vector.load %arg2[%c0_1, %c0_2] : memref<72x128xbf16, #tpu.memory_space<vmem>>, vector<72x128xbf16>
    %cst = arith.constant dense<0.000000e+00> : vector<256x128xf32>
    %2 = tpu.matmul %0, %1, %cst {dimension_numbers = #tpu.dot_dimension_numbers<[1], [0], [0], [1], [0, 0, 1, 1], [], []>} : vector<256x72xbf16>, vector<72x128xbf16>, vector<256x128xf32> -> vector<256x128xf32>
    %c0_3 = arith.constant 0 : index
    %c0_4 = arith.constant 0 : index
    %3 = vector.load %arg3[%c0_3, %c0_4] : memref<1x128xf32, #tpu.memory_space<vmem>>, vector<1x128xf32>
    %4 = vector.broadcast %3 : vector<1x128xf32> to vector<256x128xf32>
    %5 = arith.addf %2, %4 : vector<256x128xf32>
    %cst_5 = arith.constant 0.000000e+00 : f32
    %6 = vector.broadcast %cst_5 : f32 to vector<256x128xf32>
    %7 = arith.maximumf %5, %6 : vector<256x128xf32>
    %c0_6 = arith.constant 0 : index
    %c0_7 = arith.constant 0 : index
    %8 = vector.load %arg4[%c0_6, %c0_7] : memref<256x128xf32, #tpu.memory_space<vmem>>, vector<256x128xf32>
    tpu.vector_store %arg4[%c0_6, %c0_7], %7 {strides = array<i32>} : memref<256x128xf32, #tpu.memory_space<vmem>>, vector<256x128xf32>,
    return
  }
  func.func @transform_0(%arg0: i32) -> (i32, i32) {
    %c0_i32 = arith.constant 0 : i32
    %c0_i32_0 = arith.constant 0 : i32
    return %arg0, %c0_i32 : i32, i32
  }
  func.func @transform_1(%arg0: i32) -> (i32, i32) {
    %c0_i32 = arith.constant 0 : i32
    %c0_i32_0 = arith.constant 0 : i32
    %c0_i32_1 = arith.constant 0 : i32
    return %c0_i32, %c0_i32_0 : i32, i32
  }
  func.func @transform_2(%arg0: i32) -> (i32, i32) {
    %c0_i32 = arith.constant 0 : i32
    %c0_i32_0 = arith.constant 0 : i32
    %c0_i32_1 = arith.constant 0 : i32
    return %c0_i32, %c0_i32_0 : i32, i32
  }
  func.func @transform_3(%arg0: i32) -> (i32, i32) {
    %c0_i32 = arith.constant 0 : i32
    %c0_i32_0 = arith.constant 0 : i32
    return %arg0, %c0_i32 : i32, i32
  }
}

module attributes {stable_mosaic.version = 11 : i64} {
  func.func @_conv_bn_act_kernel(%arg0: i32, %arg1: memref<256x72xbf16, #tpu.memory_space<vmem>>, %arg2: memref<72x128xbf16, #tpu.memory_space<vmem>>, %arg3: memref<1x128xf32, #tpu.memory_space<vmem>>, %arg4: memref<256x128xf32, #tpu.memory_space<vmem>>, %arg5: memref<256x128xf32, #tpu.memory_space<vmem>>) attributes {dimension_semantics = [#tpu.dimension_semantics<parallel>], iteration_bounds = array<i64: 2>, scalar_prefetch = 0 : i64, scratch_operands = 0 : i64, tpu.core_type = #tpu.core_type<tc>, window_params = [{transform_indices = @transform_0, window_bounds = array<i64: 256, 72>}, {pipeline_mode = #tpu.pipeline_mode<synchronous>, transform_indices = @transform_1, window_bounds = array<i64: 72, 128>}, {pipeline_mode = #tpu.pipeline_mode<synchronous>, transform_indices = @transform_2, window_bounds = array<i64: 1, 128>}, {transform_indices = @transform_3, window_bounds = array<i64: 256, 128>}, {transform_indices = @transform_4, window_bounds = array<i64: 256, 128>}]} {
    %c0 = arith.constant 0 : index
    %c0_0 = arith.constant 0 : index
    %0 = vector.load %arg1[%c0, %c0_0] : memref<256x72xbf16, #tpu.memory_space<vmem>>, vector<256x72xbf16>
    %c0_1 = arith.constant 0 : index
    %c0_2 = arith.constant 0 : index
    %1 = vector.load %arg2[%c0_1, %c0_2] : memref<72x128xbf16, #tpu.memory_space<vmem>>, vector<72x128xbf16>
    %cst = arith.constant dense<0.000000e+00> : vector<256x128xf32>
    %2 = tpu.matmul %0, %1, %cst {dimension_numbers = #tpu.dot_dimension_numbers<[1], [0], [0], [1], [0, 0, 1, 1], [], []>} : vector<256x72xbf16>, vector<72x128xbf16>, vector<256x128xf32> -> vector<256x128xf32>
    %c0_3 = arith.constant 0 : index
    %c0_4 = arith.constant 0 : index
    %3 = vector.load %arg3[%c0_3, %c0_4] : memref<1x128xf32, #tpu.memory_space<vmem>>, vector<1x128xf32>
    %4 = vector.broadcast %3 : vector<1x128xf32> to vector<256x128xf32>
    %5 = arith.addf %2, %4 : vector<256x128xf32>
    %c0_5 = arith.constant 0 : index
    %c0_6 = arith.constant 0 : index
    %6 = vector.load %arg4[%c0_5, %c0_6] : memref<256x128xf32, #tpu.memory_space<vmem>>, vector<256x128xf32>
    %7 = arith.addf %5, %6 : vector<256x128xf32>
    %cst_7 = arith.constant 0.000000e+00 : f32
    %8 = vector.broadcast %cst_7 : f32 to vector<256x128xf32>
    %9 = arith.maximumf %7, %8 : vector<256x128xf32>
    %c0_8 = arith.constant 0 : index
    %c0_9 = arith.constant 0 : index
    %10 = vector.load %arg5[%c0_8, %c0_9] : memref<256x128xf32, #tpu.memory_space<vmem>>, vector<256x128xf32>
    tpu.vector_store %arg5[%c0_8, %c0_9], %9 {strides = array<i32>} : memref<256x128xf32, #tpu.memory_space<vmem>>, vector<256x128xf32>,
    return
  }
  func.func @transform_0(%arg0: i32) -> (i32, i32) {
    %c0_i32 = arith.constant 0 : i32
    %c0_i32_0 = arith.constant 0 : i32
    return %arg0, %c0_i32 : i32, i32
  }
  func.func @transform_1(%arg0: i32) -> (i32, i32) {
    %c0_i32 = arith.constant 0 : i32
    %c0_i32_0 = arith.constant 0 : i32
    %c0_i32_1 = arith.constant 0 : i32
    return %c0_i32, %c0_i32_0 : i32, i32
  }
  func.func @transform_2(%arg0: i32) -> (i32, i32) {
    %c0_i32 = arith.constant 0 : i32
    %c0_i32_0 = arith.constant 0 : i32
    %c0_i32_1 = arith.constant 0 : i32
    return %c0_i32, %c0_i32_0 : i32, i32
  }
  func.func @transform_3(%arg0: i32) -> (i32, i32) {
    %c0_i32 = arith.constant 0 : i32
    %c0_i32_0 = arith.constant 0 : i32
    return %arg0, %c0_i32 : i32, i32
  }
  func.func @transform_4(%arg0: i32) -> (i32, i32) {
    %c0_i32 = arith.constant 0 : i32
    %c0_i32_0 = arith.constant 0 : i32
    return %arg0, %c0_i32 : i32, i32
  }
}

module attributes {stable_mosaic.version = 11 : i64} {
  func.func @_conv_bn_act_kernel(%arg0: i32, %arg1: memref<128x72xbf16, #tpu.memory_space<vmem>>, %arg2: memref<72x128xbf16, #tpu.memory_space<vmem>>, %arg3: memref<1x128xf32, #tpu.memory_space<vmem>>, %arg4: memref<128x128xf32, #tpu.memory_space<vmem>>) attributes {dimension_semantics = [#tpu.dimension_semantics<parallel>], iteration_bounds = array<i64: 1>, scalar_prefetch = 0 : i64, scratch_operands = 0 : i64, tpu.core_type = #tpu.core_type<tc>, window_params = [{transform_indices = @transform_0, window_bounds = array<i64: 128, 72>}, {pipeline_mode = #tpu.pipeline_mode<synchronous>, transform_indices = @transform_1, window_bounds = array<i64: 72, 128>}, {pipeline_mode = #tpu.pipeline_mode<synchronous>, transform_indices = @transform_2, window_bounds = array<i64: 1, 128>}, {transform_indices = @transform_3, window_bounds = array<i64: 128, 128>}]} {
    %c0 = arith.constant 0 : index
    %c0_0 = arith.constant 0 : index
    %0 = vector.load %arg1[%c0, %c0_0] : memref<128x72xbf16, #tpu.memory_space<vmem>>, vector<128x72xbf16>
    %c0_1 = arith.constant 0 : index
    %c0_2 = arith.constant 0 : index
    %1 = vector.load %arg2[%c0_1, %c0_2] : memref<72x128xbf16, #tpu.memory_space<vmem>>, vector<72x128xbf16>
    %cst = arith.constant dense<0.000000e+00> : vector<128x128xf32>
    %2 = tpu.matmul %0, %1, %cst {dimension_numbers = #tpu.dot_dimension_numbers<[1], [0], [0], [1], [0, 0, 1, 1], [], []>} : vector<128x72xbf16>, vector<72x128xbf16>, vector<128x128xf32> -> vector<128x128xf32>
    %c0_3 = arith.constant 0 : index
    %c0_4 = arith.constant 0 : index
    %3 = vector.load %arg3[%c0_3, %c0_4] : memref<1x128xf32, #tpu.memory_space<vmem>>, vector<1x128xf32>
    %4 = vector.broadcast %3 : vector<1x128xf32> to vector<128x128xf32>
    %5 = arith.addf %2, %4 : vector<128x128xf32>
    %cst_5 = arith.constant 0.000000e+00 : f32
    %6 = vector.broadcast %cst_5 : f32 to vector<128x128xf32>
    %7 = arith.maximumf %5, %6 : vector<128x128xf32>
    %c0_6 = arith.constant 0 : index
    %c0_7 = arith.constant 0 : index
    %8 = vector.load %arg4[%c0_6, %c0_7] : memref<128x128xf32, #tpu.memory_space<vmem>>, vector<128x128xf32>
    tpu.vector_store %arg4[%c0_6, %c0_7], %7 {strides = array<i32>} : memref<128x128xf32, #tpu.memory_space<vmem>>, vector<128x128xf32>,
    return
  }
  func.func @transform_0(%arg0: i32) -> (i32, i32) {
    %c0_i32 = arith.constant 0 : i32
    %c0_i32_0 = arith.constant 0 : i32
    return %arg0, %c0_i32 : i32, i32
  }
  func.func @transform_1(%arg0: i32) -> (i32, i32) {
    %c0_i32 = arith.constant 0 : i32
    %c0_i32_0 = arith.constant 0 : i32
    %c0_i32_1 = arith.constant 0 : i32
    return %c0_i32, %c0_i32_0 : i32, i32
  }
  func.func @transform_2(%arg0: i32) -> (i32, i32) {
    %c0_i32 = arith.constant 0 : i32
    %c0_i32_0 = arith.constant 0 : i32
    %c0_i32_1 = arith.constant 0 : i32
    return %c0_i32, %c0_i32_0 : i32, i32
  }
  func.func @transform_3(%arg0: i32) -> (i32, i32) {
    %c0_i32 = arith.constant 0 : i32
    %c0_i32_0 = arith.constant 0 : i32
    return %arg0, %c0_i32 : i32, i32
  }
}

module attributes {stable_mosaic.version = 11 : i64} {
  func.func @_conv_bn_act_kernel(%arg0: i32, %arg1: memref<128x8xbf16, #tpu.memory_space<vmem>>, %arg2: memref<8x128xbf16, #tpu.memory_space<vmem>>, %arg3: memref<1x128xf32, #tpu.memory_space<vmem>>, %arg4: memref<128x128xf32, #tpu.memory_space<vmem>>) attributes {dimension_semantics = [#tpu.dimension_semantics<parallel>], iteration_bounds = array<i64: 1>, scalar_prefetch = 0 : i64, scratch_operands = 0 : i64, tpu.core_type = #tpu.core_type<tc>, window_params = [{transform_indices = @transform_0, window_bounds = array<i64: 128, 8>}, {pipeline_mode = #tpu.pipeline_mode<synchronous>, transform_indices = @transform_1, window_bounds = array<i64: 8, 128>}, {pipeline_mode = #tpu.pipeline_mode<synchronous>, transform_indices = @transform_2, window_bounds = array<i64: 1, 128>}, {transform_indices = @transform_3, window_bounds = array<i64: 128, 128>}]} {
    %c0 = arith.constant 0 : index
    %c0_0 = arith.constant 0 : index
    %0 = vector.load %arg1[%c0, %c0_0] : memref<128x8xbf16, #tpu.memory_space<vmem>>, vector<128x8xbf16>
    %c0_1 = arith.constant 0 : index
    %c0_2 = arith.constant 0 : index
    %1 = vector.load %arg2[%c0_1, %c0_2] : memref<8x128xbf16, #tpu.memory_space<vmem>>, vector<8x128xbf16>
    %cst = arith.constant dense<0.000000e+00> : vector<128x128xf32>
    %2 = tpu.matmul %0, %1, %cst {dimension_numbers = #tpu.dot_dimension_numbers<[1], [0], [0], [1], [0, 0, 1, 1], [], []>} : vector<128x8xbf16>, vector<8x128xbf16>, vector<128x128xf32> -> vector<128x128xf32>
    %c0_3 = arith.constant 0 : index
    %c0_4 = arith.constant 0 : index
    %3 = vector.load %arg3[%c0_3, %c0_4] : memref<1x128xf32, #tpu.memory_space<vmem>>, vector<1x128xf32>
    %4 = vector.broadcast %3 : vector<1x128xf32> to vector<128x128xf32>
    %5 = arith.addf %2, %4 : vector<128x128xf32>
    %c0_5 = arith.constant 0 : index
    %c0_6 = arith.constant 0 : index
    %6 = vector.load %arg4[%c0_5, %c0_6] : memref<128x128xf32, #tpu.memory_space<vmem>>, vector<128x128xf32>
    tpu.vector_store %arg4[%c0_5, %c0_6], %5 {strides = array<i32>} : memref<128x128xf32, #tpu.memory_space<vmem>>, vector<128x128xf32>,
    return
  }
  func.func @transform_0(%arg0: i32) -> (i32, i32) {
    %c0_i32 = arith.constant 0 : i32
    %c0_i32_0 = arith.constant 0 : i32
    return %arg0, %c0_i32 : i32, i32
  }
  func.func @transform_1(%arg0: i32) -> (i32, i32) {
    %c0_i32 = arith.constant 0 : i32
    %c0_i32_0 = arith.constant 0 : i32
    %c0_i32_1 = arith.constant 0 : i32
    return %c0_i32, %c0_i32_0 : i32, i32
  }
  func.func @transform_2(%arg0: i32) -> (i32, i32) {
    %c0_i32 = arith.constant 0 : i32
    %c0_i32_0 = arith.constant 0 : i32
    %c0_i32_1 = arith.constant 0 : i32
    return %c0_i32, %c0_i32_0 : i32, i32
  }
  func.func @transform_3(%arg0: i32) -> (i32, i32) {
    %c0_i32 = arith.constant 0 : i32
    %c0_i32_0 = arith.constant 0 : i32
    return %arg0, %c0_i32 : i32, i32
  }
}

module attributes {stable_mosaic.version = 11 : i64} {
  func.func @_conv_bn_act_kernel(%arg0: i32, %arg1: memref<128x144xbf16, #tpu.memory_space<vmem>>, %arg2: memref<144x128xbf16, #tpu.memory_space<vmem>>, %arg3: memref<1x128xf32, #tpu.memory_space<vmem>>, %arg4: memref<128x128xf32, #tpu.memory_space<vmem>>, %arg5: memref<128x128xf32, #tpu.memory_space<vmem>>) attributes {dimension_semantics = [#tpu.dimension_semantics<parallel>], iteration_bounds = array<i64: 1>, scalar_prefetch = 0 : i64, scratch_operands = 0 : i64, tpu.core_type = #tpu.core_type<tc>, window_params = [{transform_indices = @transform_0, window_bounds = array<i64: 128, 144>}, {pipeline_mode = #tpu.pipeline_mode<synchronous>, transform_indices = @transform_1, window_bounds = array<i64: 144, 128>}, {pipeline_mode = #tpu.pipeline_mode<synchronous>, transform_indices = @transform_2, window_bounds = array<i64: 1, 128>}, {transform_indices = @transform_3, window_bounds = array<i64: 128, 128>}, {transform_indices = @transform_4, window_bounds = array<i64: 128, 128>}]} {
    %c0 = arith.constant 0 : index
    %c0_0 = arith.constant 0 : index
    %0 = vector.load %arg1[%c0, %c0_0] : memref<128x144xbf16, #tpu.memory_space<vmem>>, vector<128x144xbf16>
    %c0_1 = arith.constant 0 : index
    %c0_2 = arith.constant 0 : index
    %1 = vector.load %arg2[%c0_1, %c0_2] : memref<144x128xbf16, #tpu.memory_space<vmem>>, vector<144x128xbf16>
    %cst = arith.constant dense<0.000000e+00> : vector<128x128xf32>
    %2 = tpu.matmul %0, %1, %cst {dimension_numbers = #tpu.dot_dimension_numbers<[1], [0], [0], [1], [0, 0, 1, 1], [], []>} : vector<128x144xbf16>, vector<144x128xbf16>, vector<128x128xf32> -> vector<128x128xf32>
    %c0_3 = arith.constant 0 : index
    %c0_4 = arith.constant 0 : index
    %3 = vector.load %arg3[%c0_3, %c0_4] : memref<1x128xf32, #tpu.memory_space<vmem>>, vector<1x128xf32>
    %4 = vector.broadcast %3 : vector<1x128xf32> to vector<128x128xf32>
    %5 = arith.addf %2, %4 : vector<128x128xf32>
    %c0_5 = arith.constant 0 : index
    %c0_6 = arith.constant 0 : index
    %6 = vector.load %arg4[%c0_5, %c0_6] : memref<128x128xf32, #tpu.memory_space<vmem>>, vector<128x128xf32>
    %7 = arith.addf %5, %6 : vector<128x128xf32>
    %cst_7 = arith.constant 0.000000e+00 : f32
    %8 = vector.broadcast %cst_7 : f32 to vector<128x128xf32>
    %9 = arith.maximumf %7, %8 : vector<128x128xf32>
    %c0_8 = arith.constant 0 : index
    %c0_9 = arith.constant 0 : index
    %10 = vector.load %arg5[%c0_8, %c0_9] : memref<128x128xf32, #tpu.memory_space<vmem>>, vector<128x128xf32>
    tpu.vector_store %arg5[%c0_8, %c0_9], %9 {strides = array<i32>} : memref<128x128xf32, #tpu.memory_space<vmem>>, vector<128x128xf32>,
    return
  }
  func.func @transform_0(%arg0: i32) -> (i32, i32) {
    %c0_i32 = arith.constant 0 : i32
    %c0_i32_0 = arith.constant 0 : i32
    return %arg0, %c0_i32 : i32, i32
  }
  func.func @transform_1(%arg0: i32) -> (i32, i32) {
    %c0_i32 = arith.constant 0 : i32
    %c0_i32_0 = arith.constant 0 : i32
    %c0_i32_1 = arith.constant 0 : i32
    return %c0_i32, %c0_i32_0 : i32, i32
  }
  func.func @transform_2(%arg0: i32) -> (i32, i32) {
    %c0_i32 = arith.constant 0 : i32
    %c0_i32_0 = arith.constant 0 : i32
    %c0_i32_1 = arith.constant 0 : i32
    return %c0_i32, %c0_i32_0 : i32, i32
  }
  func.func @transform_3(%arg0: i32) -> (i32, i32) {
    %c0_i32 = arith.constant 0 : i32
    %c0_i32_0 = arith.constant 0 : i32
    return %arg0, %c0_i32 : i32, i32
  }
  func.func @transform_4(%arg0: i32) -> (i32, i32) {
    %c0_i32 = arith.constant 0 : i32
    %c0_i32_0 = arith.constant 0 : i32
    return %arg0, %c0_i32 : i32, i32
  }
}

module attributes {stable_mosaic.version = 11 : i64} {
  func.func @_conv_bn_act_kernel(%arg0: i32, %arg1: memref<32x144xbf16, #tpu.memory_space<vmem>>, %arg2: memref<144x128xbf16, #tpu.memory_space<vmem>>, %arg3: memref<1x128xf32, #tpu.memory_space<vmem>>, %arg4: memref<32x128xf32, #tpu.memory_space<vmem>>) attributes {dimension_semantics = [#tpu.dimension_semantics<parallel>], iteration_bounds = array<i64: 1>, scalar_prefetch = 0 : i64, scratch_operands = 0 : i64, tpu.core_type = #tpu.core_type<tc>, window_params = [{transform_indices = @transform_0, window_bounds = array<i64: 32, 144>}, {pipeline_mode = #tpu.pipeline_mode<synchronous>, transform_indices = @transform_1, window_bounds = array<i64: 144, 128>}, {pipeline_mode = #tpu.pipeline_mode<synchronous>, transform_indices = @transform_2, window_bounds = array<i64: 1, 128>}, {transform_indices = @transform_3, window_bounds = array<i64: 32, 128>}]} {
    %c0 = arith.constant 0 : index
    %c0_0 = arith.constant 0 : index
    %0 = vector.load %arg1[%c0, %c0_0] : memref<32x144xbf16, #tpu.memory_space<vmem>>, vector<32x144xbf16>
    %c0_1 = arith.constant 0 : index
    %c0_2 = arith.constant 0 : index
    %1 = vector.load %arg2[%c0_1, %c0_2] : memref<144x128xbf16, #tpu.memory_space<vmem>>, vector<144x128xbf16>
    %cst = arith.constant dense<0.000000e+00> : vector<32x128xf32>
    %2 = tpu.matmul %0, %1, %cst {dimension_numbers = #tpu.dot_dimension_numbers<[1], [0], [0], [1], [0, 0, 1, 1], [], []>} : vector<32x144xbf16>, vector<144x128xbf16>, vector<32x128xf32> -> vector<32x128xf32>
    %c0_3 = arith.constant 0 : index
    %c0_4 = arith.constant 0 : index
    %3 = vector.load %arg3[%c0_3, %c0_4] : memref<1x128xf32, #tpu.memory_space<vmem>>, vector<1x128xf32>
    %4 = vector.broadcast %3 : vector<1x128xf32> to vector<32x128xf32>
    %5 = arith.addf %2, %4 : vector<32x128xf32>
    %cst_5 = arith.constant 0.000000e+00 : f32
    %6 = vector.broadcast %cst_5 : f32 to vector<32x128xf32>
    %7 = arith.maximumf %5, %6 : vector<32x128xf32>
    %c0_6 = arith.constant 0 : index
    %c0_7 = arith.constant 0 : index
    %8 = vector.load %arg4[%c0_6, %c0_7] : memref<32x128xf32, #tpu.memory_space<vmem>>, vector<32x128xf32>
    tpu.vector_store %arg4[%c0_6, %c0_7], %7 {strides = array<i32>} : memref<32x128xf32, #tpu.memory_space<vmem>>, vector<32x128xf32>,
    return
  }
  func.func @transform_0(%arg0: i32) -> (i32, i32) {
    %c0_i32 = arith.constant 0 : i32
    %c0_i32_0 = arith.constant 0 : i32
    return %arg0, %c0_i32 : i32, i32
  }
  func.func @transform_1(%arg0: i32) -> (i32, i32) {
    %c0_i32 = arith.constant 0 : i32
    %c0_i32_0 = arith.constant 0 : i32
    %c0_i32_1 = arith.constant 0 : i32
    return %c0_i32, %c0_i32_0 : i32, i32
  }
  func.func @transform_2(%arg0: i32) -> (i32, i32) {
    %c0_i32 = arith.constant 0 : i32
    %c0_i32_0 = arith.constant 0 : i32
    %c0_i32_1 = arith.constant 0 : i32
    return %c0_i32, %c0_i32_0 : i32, i32
  }
  func.func @transform_3(%arg0: i32) -> (i32, i32) {
    %c0_i32 = arith.constant 0 : i32
    %c0_i32_0 = arith.constant 0 : i32
    return %arg0, %c0_i32 : i32, i32
  }
}

module attributes {stable_mosaic.version = 11 : i64} {
  func.func @_conv_bn_act_kernel(%arg0: i32, %arg1: memref<32x16xbf16, #tpu.memory_space<vmem>>, %arg2: memref<16x128xbf16, #tpu.memory_space<vmem>>, %arg3: memref<1x128xf32, #tpu.memory_space<vmem>>, %arg4: memref<32x128xf32, #tpu.memory_space<vmem>>) attributes {dimension_semantics = [#tpu.dimension_semantics<parallel>], iteration_bounds = array<i64: 1>, scalar_prefetch = 0 : i64, scratch_operands = 0 : i64, tpu.core_type = #tpu.core_type<tc>, window_params = [{transform_indices = @transform_0, window_bounds = array<i64: 32, 16>}, {pipeline_mode = #tpu.pipeline_mode<synchronous>, transform_indices = @transform_1, window_bounds = array<i64: 16, 128>}, {pipeline_mode = #tpu.pipeline_mode<synchronous>, transform_indices = @transform_2, window_bounds = array<i64: 1, 128>}, {transform_indices = @transform_3, window_bounds = array<i64: 32, 128>}]} {
    %c0 = arith.constant 0 : index
    %c0_0 = arith.constant 0 : index
    %0 = vector.load %arg1[%c0, %c0_0] : memref<32x16xbf16, #tpu.memory_space<vmem>>, vector<32x16xbf16>
    %c0_1 = arith.constant 0 : index
    %c0_2 = arith.constant 0 : index
    %1 = vector.load %arg2[%c0_1, %c0_2] : memref<16x128xbf16, #tpu.memory_space<vmem>>, vector<16x128xbf16>
    %cst = arith.constant dense<0.000000e+00> : vector<32x128xf32>
    %2 = tpu.matmul %0, %1, %cst {dimension_numbers = #tpu.dot_dimension_numbers<[1], [0], [0], [1], [0, 0, 1, 1], [], []>} : vector<32x16xbf16>, vector<16x128xbf16>, vector<32x128xf32> -> vector<32x128xf32>
    %c0_3 = arith.constant 0 : index
    %c0_4 = arith.constant 0 : index
    %3 = vector.load %arg3[%c0_3, %c0_4] : memref<1x128xf32, #tpu.memory_space<vmem>>, vector<1x128xf32>
    %4 = vector.broadcast %3 : vector<1x128xf32> to vector<32x128xf32>
    %5 = arith.addf %2, %4 : vector<32x128xf32>
    %c0_5 = arith.constant 0 : index
    %c0_6 = arith.constant 0 : index
    %6 = vector.load %arg4[%c0_5, %c0_6] : memref<32x128xf32, #tpu.memory_space<vmem>>, vector<32x128xf32>
    tpu.vector_store %arg4[%c0_5, %c0_6], %5 {strides = array<i32>} : memref<32x128xf32, #tpu.memory_space<vmem>>, vector<32x128xf32>,
    return
  }
  func.func @transform_0(%arg0: i32) -> (i32, i32) {
    %c0_i32 = arith.constant 0 : i32
    %c0_i32_0 = arith.constant 0 : i32
    return %arg0, %c0_i32 : i32, i32
  }
  func.func @transform_1(%arg0: i32) -> (i32, i32) {
    %c0_i32 = arith.constant 0 : i32
    %c0_i32_0 = arith.constant 0 : i32
    %c0_i32_1 = arith.constant 0 : i32
    return %c0_i32, %c0_i32_0 : i32, i32
  }
  func.func @transform_2(%arg0: i32) -> (i32, i32) {
    %c0_i32 = arith.constant 0 : i32
    %c0_i32_0 = arith.constant 0 : i32
    %c0_i32_1 = arith.constant 0 : i32
    return %c0_i32, %c0_i32_0 : i32, i32
  }
  func.func @transform_3(%arg0: i32) -> (i32, i32) {
    %c0_i32 = arith.constant 0 : i32
    %c0_i32_0 = arith.constant 0 : i32
    return %arg0, %c0_i32 : i32, i32
  }
}

module attributes {stable_mosaic.version = 11 : i64} {
  func.func @_conv_bn_act_kernel(%arg0: i32, %arg1: memref<32x288xbf16, #tpu.memory_space<vmem>>, %arg2: memref<288x128xbf16, #tpu.memory_space<vmem>>, %arg3: memref<1x128xf32, #tpu.memory_space<vmem>>, %arg4: memref<32x128xf32, #tpu.memory_space<vmem>>, %arg5: memref<32x128xf32, #tpu.memory_space<vmem>>) attributes {dimension_semantics = [#tpu.dimension_semantics<parallel>], iteration_bounds = array<i64: 1>, scalar_prefetch = 0 : i64, scratch_operands = 0 : i64, tpu.core_type = #tpu.core_type<tc>, window_params = [{transform_indices = @transform_0, window_bounds = array<i64: 32, 288>}, {pipeline_mode = #tpu.pipeline_mode<synchronous>, transform_indices = @transform_1, window_bounds = array<i64: 288, 128>}, {pipeline_mode = #tpu.pipeline_mode<synchronous>, transform_indices = @transform_2, window_bounds = array<i64: 1, 128>}, {transform_indices = @transform_3, window_bounds = array<i64: 32, 128>}, {transform_indices = @transform_4, window_bounds = array<i64: 32, 128>}]} {
    %c0 = arith.constant 0 : index
    %c0_0 = arith.constant 0 : index
    %0 = vector.load %arg1[%c0, %c0_0] : memref<32x288xbf16, #tpu.memory_space<vmem>>, vector<32x288xbf16>
    %c0_1 = arith.constant 0 : index
    %c0_2 = arith.constant 0 : index
    %1 = vector.load %arg2[%c0_1, %c0_2] : memref<288x128xbf16, #tpu.memory_space<vmem>>, vector<288x128xbf16>
    %cst = arith.constant dense<0.000000e+00> : vector<32x128xf32>
    %2 = tpu.matmul %0, %1, %cst {dimension_numbers = #tpu.dot_dimension_numbers<[1], [0], [0], [1], [0, 0, 1, 1], [], []>} : vector<32x288xbf16>, vector<288x128xbf16>, vector<32x128xf32> -> vector<32x128xf32>
    %c0_3 = arith.constant 0 : index
    %c0_4 = arith.constant 0 : index
    %3 = vector.load %arg3[%c0_3, %c0_4] : memref<1x128xf32, #tpu.memory_space<vmem>>, vector<1x128xf32>
    %4 = vector.broadcast %3 : vector<1x128xf32> to vector<32x128xf32>
    %5 = arith.addf %2, %4 : vector<32x128xf32>
    %c0_5 = arith.constant 0 : index
    %c0_6 = arith.constant 0 : index
    %6 = vector.load %arg4[%c0_5, %c0_6] : memref<32x128xf32, #tpu.memory_space<vmem>>, vector<32x128xf32>
    %7 = arith.addf %5, %6 : vector<32x128xf32>
    %cst_7 = arith.constant 0.000000e+00 : f32
    %8 = vector.broadcast %cst_7 : f32 to vector<32x128xf32>
    %9 = arith.maximumf %7, %8 : vector<32x128xf32>
    %c0_8 = arith.constant 0 : index
    %c0_9 = arith.constant 0 : index
    %10 = vector.load %arg5[%c0_8, %c0_9] : memref<32x128xf32, #tpu.memory_space<vmem>>, vector<32x128xf32>
    tpu.vector_store %arg5[%c0_8, %c0_9], %9 {strides = array<i32>} : memref<32x128xf32, #tpu.memory_space<vmem>>, vector<32x128xf32>,
    return
  }
  func.func @transform_0(%arg0: i32) -> (i32, i32) {
    %c0_i32 = arith.constant 0 : i32
    %c0_i32_0 = arith.constant 0 : i32
    return %arg0, %c0_i32 : i32, i32
  }
  func.func @transform_1(%arg0: i32) -> (i32, i32) {
    %c0_i32 = arith.constant 0 : i32
    %c0_i32_0 = arith.constant 0 : i32
    %c0_i32_1 = arith.constant 0 : i32
    return %c0_i32, %c0_i32_0 : i32, i32
  }
  func.func @transform_2(%arg0: i32) -> (i32, i32) {
    %c0_i32 = arith.constant 0 : i32
    %c0_i32_0 = arith.constant 0 : i32
    %c0_i32_1 = arith.constant 0 : i32
    return %c0_i32, %c0_i32_0 : i32, i32
  }
  func.func @transform_3(%arg0: i32) -> (i32, i32) {
    %c0_i32 = arith.constant 0 : i32
    %c0_i32_0 = arith.constant 0 : i32
    return %arg0, %c0_i32 : i32, i32
  }
  func.func @transform_4(%arg0: i32) -> (i32, i32) {
    %c0_i32 = arith.constant 0 : i32
    %c0_i32_0 = arith.constant 0 : i32
    return %arg0, %c0_i32 : i32, i32
  }
}

module attributes {stable_mosaic.version = 11 : i64} {
  func.func @_conv_bn_act_kernel(%arg0: i32, %arg1: memref<8x288xbf16, #tpu.memory_space<vmem>>, %arg2: memref<288x128xbf16, #tpu.memory_space<vmem>>, %arg3: memref<1x128xf32, #tpu.memory_space<vmem>>, %arg4: memref<8x128xf32, #tpu.memory_space<vmem>>) attributes {dimension_semantics = [#tpu.dimension_semantics<parallel>], iteration_bounds = array<i64: 1>, scalar_prefetch = 0 : i64, scratch_operands = 0 : i64, tpu.core_type = #tpu.core_type<tc>, window_params = [{transform_indices = @transform_0, window_bounds = array<i64: 8, 288>}, {pipeline_mode = #tpu.pipeline_mode<synchronous>, transform_indices = @transform_1, window_bounds = array<i64: 288, 128>}, {pipeline_mode = #tpu.pipeline_mode<synchronous>, transform_indices = @transform_2, window_bounds = array<i64: 1, 128>}, {transform_indices = @transform_3, window_bounds = array<i64: 8, 128>}]} {
    %c0 = arith.constant 0 : index
    %c0_0 = arith.constant 0 : index
    %0 = vector.load %arg1[%c0, %c0_0] : memref<8x288xbf16, #tpu.memory_space<vmem>>, vector<8x288xbf16>
    %c0_1 = arith.constant 0 : index
    %c0_2 = arith.constant 0 : index
    %1 = vector.load %arg2[%c0_1, %c0_2] : memref<288x128xbf16, #tpu.memory_space<vmem>>, vector<288x128xbf16>
    %cst = arith.constant dense<0.000000e+00> : vector<8x128xf32>
    %2 = tpu.matmul %0, %1, %cst {dimension_numbers = #tpu.dot_dimension_numbers<[1], [0], [0], [1], [0, 0, 1, 1], [], []>} : vector<8x288xbf16>, vector<288x128xbf16>, vector<8x128xf32> -> vector<8x128xf32>
    %c0_3 = arith.constant 0 : index
    %c0_4 = arith.constant 0 : index
    %3 = vector.load %arg3[%c0_3, %c0_4] : memref<1x128xf32, #tpu.memory_space<vmem>>, vector<1x128xf32>
    %4 = vector.broadcast %3 : vector<1x128xf32> to vector<8x128xf32>
    %5 = arith.addf %2, %4 : vector<8x128xf32>
    %cst_5 = arith.constant 0.000000e+00 : f32
    %6 = vector.broadcast %cst_5 : f32 to vector<8x128xf32>
    %7 = arith.maximumf %5, %6 : vector<8x128xf32>
    %c0_6 = arith.constant 0 : index
    %c0_7 = arith.constant 0 : index
    %8 = vector.load %arg4[%c0_6, %c0_7] : memref<8x128xf32, #tpu.memory_space<vmem>>, vector<8x128xf32>
    tpu.vector_store %arg4[%c0_6, %c0_7], %7 {strides = array<i32>} : memref<8x128xf32, #tpu.memory_space<vmem>>, vector<8x128xf32>,
    return
  }
  func.func @transform_0(%arg0: i32) -> (i32, i32) {
    %c0_i32 = arith.constant 0 : i32
    %c0_i32_0 = arith.constant 0 : i32
    return %arg0, %c0_i32 : i32, i32
  }
  func.func @transform_1(%arg0: i32) -> (i32, i32) {
    %c0_i32 = arith.constant 0 : i32
    %c0_i32_0 = arith.constant 0 : i32
    %c0_i32_1 = arith.constant 0 : i32
    return %c0_i32, %c0_i32_0 : i32, i32
  }
  func.func @transform_2(%arg0: i32) -> (i32, i32) {
    %c0_i32 = arith.constant 0 : i32
    %c0_i32_0 = arith.constant 0 : i32
    %c0_i32_1 = arith.constant 0 : i32
    return %c0_i32, %c0_i32_0 : i32, i32
  }
  func.func @transform_3(%arg0: i32) -> (i32, i32) {
    %c0_i32 = arith.constant 0 : i32
    %c0_i32_0 = arith.constant 0 : i32
    return %arg0, %c0_i32 : i32, i32
  }
}

module attributes {stable_mosaic.version = 11 : i64} {
  func.func @_conv_bn_act_kernel(%arg0: i32, %arg1: memref<8x32xbf16, #tpu.memory_space<vmem>>, %arg2: memref<32x128xbf16, #tpu.memory_space<vmem>>, %arg3: memref<1x128xf32, #tpu.memory_space<vmem>>, %arg4: memref<8x128xf32, #tpu.memory_space<vmem>>) attributes {dimension_semantics = [#tpu.dimension_semantics<parallel>], iteration_bounds = array<i64: 1>, scalar_prefetch = 0 : i64, scratch_operands = 0 : i64, tpu.core_type = #tpu.core_type<tc>, window_params = [{transform_indices = @transform_0, window_bounds = array<i64: 8, 32>}, {pipeline_mode = #tpu.pipeline_mode<synchronous>, transform_indices = @transform_1, window_bounds = array<i64: 32, 128>}, {pipeline_mode = #tpu.pipeline_mode<synchronous>, transform_indices = @transform_2, window_bounds = array<i64: 1, 128>}, {transform_indices = @transform_3, window_bounds = array<i64: 8, 128>}]} {
    %c0 = arith.constant 0 : index
    %c0_0 = arith.constant 0 : index
    %0 = vector.load %arg1[%c0, %c0_0] : memref<8x32xbf16, #tpu.memory_space<vmem>>, vector<8x32xbf16>
    %c0_1 = arith.constant 0 : index
    %c0_2 = arith.constant 0 : index
    %1 = vector.load %arg2[%c0_1, %c0_2] : memref<32x128xbf16, #tpu.memory_space<vmem>>, vector<32x128xbf16>
    %cst = arith.constant dense<0.000000e+00> : vector<8x128xf32>
    %2 = tpu.matmul %0, %1, %cst {dimension_numbers = #tpu.dot_dimension_numbers<[1], [0], [0], [1], [0, 0, 1, 1], [], []>} : vector<8x32xbf16>, vector<32x128xbf16>, vector<8x128xf32> -> vector<8x128xf32>
    %c0_3 = arith.constant 0 : index
    %c0_4 = arith.constant 0 : index
    %3 = vector.load %arg3[%c0_3, %c0_4] : memref<1x128xf32, #tpu.memory_space<vmem>>, vector<1x128xf32>
    %4 = vector.broadcast %3 : vector<1x128xf32> to vector<8x128xf32>
    %5 = arith.addf %2, %4 : vector<8x128xf32>
    %c0_5 = arith.constant 0 : index
    %c0_6 = arith.constant 0 : index
    %6 = vector.load %arg4[%c0_5, %c0_6] : memref<8x128xf32, #tpu.memory_space<vmem>>, vector<8x128xf32>
    tpu.vector_store %arg4[%c0_5, %c0_6], %5 {strides = array<i32>} : memref<8x128xf32, #tpu.memory_space<vmem>>, vector<8x128xf32>,
    return
  }
  func.func @transform_0(%arg0: i32) -> (i32, i32) {
    %c0_i32 = arith.constant 0 : i32
    %c0_i32_0 = arith.constant 0 : i32
    return %arg0, %c0_i32 : i32, i32
  }
  func.func @transform_1(%arg0: i32) -> (i32, i32) {
    %c0_i32 = arith.constant 0 : i32
    %c0_i32_0 = arith.constant 0 : i32
    %c0_i32_1 = arith.constant 0 : i32
    return %c0_i32, %c0_i32_0 : i32, i32
  }
  func.func @transform_2(%arg0: i32) -> (i32, i32) {
    %c0_i32 = arith.constant 0 : i32
    %c0_i32_0 = arith.constant 0 : i32
    %c0_i32_1 = arith.constant 0 : i32
    return %c0_i32, %c0_i32_0 : i32, i32
  }
  func.func @transform_3(%arg0: i32) -> (i32, i32) {
    %c0_i32 = arith.constant 0 : i32
    %c0_i32_0 = arith.constant 0 : i32
    return %arg0, %c0_i32 : i32, i32
  }
}

module attributes {stable_mosaic.version = 11 : i64} {
  func.func @_final_conv_pool_fc_kernel(%arg0: memref<8x576xbf16, #tpu.memory_space<vmem>>, %arg1: memref<576x128xbf16, #tpu.memory_space<vmem>>, %arg2: memref<1x128xf32, #tpu.memory_space<vmem>>, %arg3: memref<8x128xf32, #tpu.memory_space<vmem>>, %arg4: memref<2x8xf32, #tpu.memory_space<vmem>>, %arg5: memref<128x128xf32, #tpu.memory_space<vmem>>, %arg6: memref<1x128xf32, #tpu.memory_space<vmem>>, %arg7: memref<2x128xf32, #tpu.memory_space<vmem>>) attributes {dimension_semantics = [], scalar_prefetch = 0 : i64, scratch_operands = 0 : i64, tpu.core_type = #tpu.core_type<tc>} {
    %c0 = arith.constant 0 : index
    %c0_0 = arith.constant 0 : index
    %0 = vector.load %arg0[%c0, %c0_0] : memref<8x576xbf16, #tpu.memory_space<vmem>>, vector<8x576xbf16>
    %c0_1 = arith.constant 0 : index
    %c0_2 = arith.constant 0 : index
    %1 = vector.load %arg1[%c0_1, %c0_2] : memref<576x128xbf16, #tpu.memory_space<vmem>>, vector<576x128xbf16>
    %cst = arith.constant dense<0.000000e+00> : vector<8x128xf32>
    %2 = tpu.matmul %0, %1, %cst {dimension_numbers = #tpu.dot_dimension_numbers<[1], [0], [0], [1], [0, 0, 1, 1], [], []>} : vector<8x576xbf16>, vector<576x128xbf16>, vector<8x128xf32> -> vector<8x128xf32>
    %c0_3 = arith.constant 0 : index
    %c0_4 = arith.constant 0 : index
    %3 = vector.load %arg2[%c0_3, %c0_4] : memref<1x128xf32, #tpu.memory_space<vmem>>, vector<1x128xf32>
    %4 = vector.broadcast %3 : vector<1x128xf32> to vector<8x128xf32>
    %5 = arith.addf %2, %4 : vector<8x128xf32>
    %c0_5 = arith.constant 0 : index
    %c0_6 = arith.constant 0 : index
    %6 = vector.load %arg3[%c0_5, %c0_6] : memref<8x128xf32, #tpu.memory_space<vmem>>, vector<8x128xf32>
    %7 = arith.addf %5, %6 : vector<8x128xf32>
    %cst_7 = arith.constant 0.000000e+00 : f32
    %8 = vector.broadcast %cst_7 : f32 to vector<8x128xf32>
    %9 = arith.maximumf %7, %8 : vector<8x128xf32>
    %c0_8 = arith.constant 0 : index
    %c0_9 = arith.constant 0 : index
    %10 = vector.load %arg4[%c0_8, %c0_9] : memref<2x8xf32, #tpu.memory_space<vmem>>, vector<2x8xf32>
    %cst_10 = arith.constant dense<0.000000e+00> : vector<2x128xf32>
    %11 = tpu.matmul %10, %9, %cst_10 {dimension_numbers = #tpu.dot_dimension_numbers<[1], [0], [0], [1], [0, 0, 1, 1], [], []>} : vector<2x8xf32>, vector<8x128xf32>, vector<2x128xf32> -> vector<2x128xf32>
    %c0_11 = arith.constant 0 : index
    %c0_12 = arith.constant 0 : index
    %12 = vector.load %arg5[%c0_11, %c0_12] : memref<128x128xf32, #tpu.memory_space<vmem>>, vector<128x128xf32>
    %cst_13 = arith.constant dense<0.000000e+00> : vector<2x128xf32>
    %13 = tpu.matmul %11, %12, %cst_13 {dimension_numbers = #tpu.dot_dimension_numbers<[1], [0], [0], [1], [0, 0, 1, 1], [], []>} : vector<2x128xf32>, vector<128x128xf32>, vector<2x128xf32> -> vector<2x128xf32>
    %c0_14 = arith.constant 0 : index
    %c0_15 = arith.constant 0 : index
    %14 = vector.load %arg6[%c0_14, %c0_15] : memref<1x128xf32, #tpu.memory_space<vmem>>, vector<1x128xf32>
    %15 = vector.broadcast %14 : vector<1x128xf32> to vector<2x128xf32>
    %16 = arith.addf %13, %15 : vector<2x128xf32>
    %c0_16 = arith.constant 0 : index
    %c0_17 = arith.constant 0 : index
    %17 = vector.load %arg7[%c0_16, %c0_17] : memref<2x128xf32, #tpu.memory_space<vmem>>, vector<2x128xf32>
    tpu.vector_store %arg7[%c0_16, %c0_17], %16 {strides = array<i32>} : memref<2x128xf32, #tpu.memory_space<vmem>>, vector<2x128xf32>,
    return
  }
}

</mosaic_0001>

<llo_original>
// kernel: resnet_forward.12
$region0: #{resnet_forward.12}
  #allocation0 [shape = 'u32[]', space=smem, size = 0x4, offset = 0x4, fixed_abs, tag = 'smem constant byte address 0x4 - core index']
  #allocation1 [shape = 'u32[144,128]{1,0:T(1,128)}', space=vmem, size = 0x12000, scoped, tag = 'internal scratch']
  %s0 = inlined_call_operand.vmem [shape: bf16[512,27], index: 0, kind: input, shape index: {}]
  %s1 = inlined_call_operand.vmem [shape: bf16[27,128], index: 1, kind: input, shape index: {}]
  %s2 = inlined_call_operand.vmem [shape: f32[1,128], index: 2, kind: input, shape index: {}]
  %s3 = inlined_call_operand.vmem [shape: f32[512,128], index: 3, kind: output, shape index: {}]
  %s4 = sld [smem:[#allocation0]]
  $region45: #{resnet_forward.12} parent=0
    _
  %s6 = ssub.s32 1, %s4
  %s7 = scalar_select 0, %s6, %s4
  loop: start=0, step=1, limit=4
  $region2: #{resnet_forward.12} parent=0 // loop_pre_header
    _
  $region3: #{resnet_forward.12} parent=0 // loop_header
    %s9 = sphi 0, %s13
    %p10 = scmp.ge.s32.totalorder %s9, 4
    %s19 = sphi 0, %s21
    %s22 = sphi 0, %s19
    %s23 = sphi 0, %s22
    %s39 = sphi 0, %s23
    %s43 = sphi 0, %s43
    %s45 = sphi 0, %s43
    %s46 = sphi 0, %s45
    %s60 = sphi 0, %s46
    %s64 = sphi 0, %s64
    %s66 = sphi 0, %s64
    %s67 = sphi 0, %s66
    %s81 = sphi 0, %s67
    %s87 = sphi 0, %s89
    %s90 = sphi 0, %s87
    %s91 = sphi 0, %s90
    %s107 = sphi 0, %s91
  $region4: #{resnet_forward.12} parent=0 // loop_header_branch
    %12 = sbr.rel (%p10) target = $region8
  $region5: #{resnet_forward.12} parent=0 // loop_body
    %s14 = ssub.s32 %s9, 1
    %s15 = ssub.s32 %s9, 2
    %s16 = sadd.s32 %s9, 1
    %s17 = ssub.s32 %s9, %s16
    %p18 = scmp.eq.s32.totalorder %s17, 0
    %s20 = sadd.s32 %s19, 1
    %s21 = scalar_select %p18, %s19, %s20
    %p24 = pneg %p18
    %p25 = scmp.eq.s32.totalorder %s9, 1
    %p26 = por %p24, %p25
    %p27 = scmp.ne.s32.totalorder %s19, %s22
    %p28 = scmp.eq.s32.totalorder %s9, 0
    %p29 = por %p27, %p28
    %p30 = scmp.ne.s32.totalorder %s19, %s22
    %p31 = scmp.eq.s32.totalorder %s14, 1
    %p32 = por %p30, %p31
    %p33 = scmp.ne.s32.totalorder %s22, %s23
    %p34 = scmp.eq.s32.totalorder %s14, 0
    %p35 = por %p33, %p34
    %p36 = scmp.ne.s32.totalorder %s22, %s23
    %p37 = scmp.eq.s32.totalorder %s15, 1
    %p38 = por %p36, %p37
    %p40 = scmp.ne.s32.totalorder %s23, %s39
    %p41 = scmp.eq.s32.totalorder %s15, 0
    %p42 = por %p40, %p41
    %s44 = sadd.s32 %s43, 1
    %p47 = scmp.eq.s32.totalorder %s9, 1
    %p48 = scmp.ne.s32.totalorder %s43, %s45
    %p49 = scmp.eq.s32.totalorder %s9, 0
    %p50 = por %p48, %p49
    %p51 = scmp.ne.s32.totalorder %s43, %s45
    %p52 = scmp.eq.s32.totalorder %s14, 1
    %p53 = por %p51, %p52
    %p54 = scmp.ne.s32.totalorder %s45, %s46
    %p55 = scmp.eq.s32.totalorder %s14, 0
    %p56 = por %p54, %p55
    %p57 = scmp.ne.s32.totalorder %s45, %s46
    %p58 = scmp.eq.s32.totalorder %s15, 1
    %p59 = por %p57, %p58
    %p61 = scmp.ne.s32.totalorder %s46, %s60
    %p62 = scmp.eq.s32.totalorder %s15, 0
    %p63 = por %p61, %p62
    %s65 = sadd.s32 %s64, 1
    %p68 = scmp.eq.s32.totalorder %s9, 1
    %p69 = scmp.ne.s32.totalorder %s64, %s66
    %p70 = scmp.eq.s32.totalorder %s9, 0
    %p71 = por %p69, %p70
    %p72 = scmp.ne.s32.totalorder %s64, %s66
    %p73 = scmp.eq.s32.totalorder %s14, 1
    %p74 = por %p72, %p73
    %p75 = scmp.ne.s32.totalorder %s66, %s67
    %p76 = scmp.eq.s32.totalorder %s14, 0
    %p77 = por %p75, %p76
    %p78 = scmp.ne.s32.totalorder %s66, %s67
    %p79 = scmp.eq.s32.totalorder %s15, 1
    %p80 = por %p78, %p79
    %p82 = scmp.ne.s32.totalorder %s67, %s81
    %p83 = scmp.eq.s32.totalorder %s15, 0
    %p84 = por %p82, %p83
    %s85 = ssub.s32 %s9, %s16
    %p86 = scmp.eq.s32.totalorder %s85, 0
    %s88 = sadd.s32 %s87, 1
    %s89 = scalar_select %p86, %s87, %s88
    %p92 = pneg %p86
    %p93 = scmp.eq.s32.totalorder %s9, 1
    %p94 = por %p92, %p93
    %p95 = scmp.ne.s32.totalorder %s87, %s90
    %p96 = scmp.eq.s32.totalorder %s9, 0
    %p97 = por %p95, %p96
    %p98 = scmp.ne.s32.totalorder %s87, %s90
    %p99 = scmp.eq.s32.totalorder %s14, 1
    %p100 = por %p98, %p99
    %p101 = scmp.ne.s32.totalorder %s90, %s91
    %p102 = scmp.eq.s32.totalorder %s14, 0
    %p103 = por %p101, %p102
    %p104 = scmp.ne.s32.totalorder %s90, %s91
    %p105 = scmp.eq.s32.totalorder %s15, 1
    %p106 = por %p104, %p105
    %p108 = scmp.ne.s32.totalorder %s91, %s107
    %p109 = scmp.eq.s32.totalorder %s15, 0
    %p110 = por %p108, %p109
    %p111 = scmp.le.s32.totalorder 1, %s9
    %p112 = scmp.lt.s32.totalorder %s9, 3
    %p113 = pnand %p111, %p112
    %p114 = pneg %p113
    // Predicated region
    $region9: #{resnet_forward.12} parent=5 // pred_check
      _
    $region10: #{resnet_forward.12} parent=5 // pred_check_branch
      %116 = sbr.rel (%p113) target = $region12
    $region11: #{resnet_forward.12} parent=5 // pred_region
      %s117 = ssub.s32 %s9, 1
      // Predicated region
      $region13: #{resnet_forward.12} parent=11 // pred_check
        %p118 = pneg %p56
      $region14: #{resnet_forward.12} parent=11 // pred_check_branch
        %120 = sbr.rel (%p118) target = $region16
      $region15: #{resnet_forward.12} parent=11 // pred_region
        _
      $region16: #{resnet_forward.12} parent=11 // pred_fallthru
        _
      // Predicated region
      $region17: #{resnet_forward.12} parent=11 // pred_check
        %p121 = pneg %p77
      $region18: #{resnet_forward.12} parent=11 // pred_check_branch
        %123 = sbr.rel (%p121) target = $region20
      $region19: #{resnet_forward.12} parent=11 // pred_region
        _
      $region20: #{resnet_forward.12} parent=11 // pred_fallthru
        _
    $region12: #{resnet_forward.12} parent=5 // pred_fallthru
      _
    %p124 = scmp.lt.s32.totalorder %s9, 2
    // Predicated region
    $region21: #{resnet_forward.12} parent=5 // pred_check
      %p125 = pneg %p124
    $region22: #{resnet_forward.12} parent=5 // pred_check_branch
      %127 = sbr.rel (%p125) target = $region24
    $region23: #{resnet_forward.12} parent=5 // pred_region
      // Predicated region
      $region25: #{resnet_forward.12} parent=23 // pred_check
        %p128 = pneg %p29
      $region26: #{resnet_forward.12} parent=23 // pred_check_branch
        %130 = sbr.rel (%p128) target = $region28
      $region27: #{resnet_forward.12} parent=23 // pred_region
        %s131 = smul.u32 32, %s9
        %p132 = scmp.lt.s32.totalorder %s131, 63
        %s133 = scalar_select %p132, %s131, 63
        %s134 = smul.addr %s133, 4
        %s135 = scalar_lea.vmem %s0, %s134
        %s136 = smul.u32 32, %s9
      $region28: #{resnet_forward.12} parent=23 // pred_fallthru
        _
    $region24: #{resnet_forward.12} parent=5 // pred_fallthru
      _
    %p137 = scmp.le.s32.totalorder 1, %s9
    %p138 = scmp.lt.s32.totalorder %s9, 3
    %p139 = pnand %p137, %p138
    %p140 = pneg %p139
    // Predicated region
    $region29: #{resnet_forward.12} parent=5 // pred_check
      _
    $region30: #{resnet_forward.12} parent=5 // pred_check_branch
      %142 = sbr.rel (%p139) target = $region32
    $region31: #{resnet_forward.12} parent=5 // pred_region
      %s143 = ssub.s32 %s9, 1
      %s144 = smul.u32 32, %s14
      %p145 = scmp.lt.s32.totalorder %s144, 63
      %s146 = scalar_select %p145, %s144, 63
      %s147 = smul.addr %s146, 4
      %s148 = scalar_lea.vmem %s0, %s147
      %p149 = pneg %p35
      %p150 = pneg %p32
      %p151 = pneg %p56
      %p152 = pneg %p53
      %p153 = pneg %p77
      %p154 = pneg %p74
      %p155 = pneg %p103
      %p156 = pneg %p100
      %s157 = smul.u32 32, %s14
      %p158 = scmp.lt.s32.totalorder %s157, 63
      %s159 = scalar_select %p158, %s157, 63
      %s160 = smul.addr %s159, 8
      %s161 = scalar_lea.vmem %s3, %s160
      %s162 = smul.u32 32, %s14
      %p163 = scmp.lt.s32.totalorder %s162, 63
      %s164 = scalar_select %p163, %s162, 63
      %s165 = smul.addr %s164, 4
      %s166 = scalar_lea.vmem %s0, %s165
      %s167 = smul.u32 32, %s14
      %s168 = smul.u32 32, %s14
      %p169 = scmp.lt.s32.totalorder %s168, 63
      %s170 = scalar_select %p169, %s168, 63
      %s171 = smul.addr %s170, 8
      %s172 = scalar_lea.vmem %s3, %s171
      %s173 = smul.u32 32, %s14
      %v175 = vld [vmem:[%s166] sm:$0xf]
      %v176 = vld [vmem:[%s166 + $0x4] sm:$0xf]
      %v177 = vld [vmem:[%s166 + $0x8] sm:$0xf]
      %v178 = vld [vmem:[%s166 + $0xc] sm:$0xf]
      %v179 = vld [vmem:[%s166 + $0x10] sm:$0xf]
      %v180 = vld [vmem:[%s166 + $0x14] sm:$0xf]
      %v181 = vld [vmem:[%s166 + $0x18] sm:$0xf]
      %v182 = vld [vmem:[%s166 + $0x1c] sm:$0xf]
      %v183 = vld [vmem:[%s166 + $0x20] sm:$0xf]
      %v184 = vld [vmem:[%s166 + $0x24] sm:$0xf]
      %v185 = vld [vmem:[%s166 + $0x28] sm:$0xf]
      %v186 = vld [vmem:[%s166 + $0x2c] sm:$0xf]
      %v187 = vld [vmem:[%s166 + $0x30] sm:$0xf]
      %v188 = vld [vmem:[%s166 + $0x34] sm:$0xf]
      %v189 = vld [vmem:[%s166 + $0x38] sm:$0xf]
      %v190 = vld [vmem:[%s166 + $0x3c] sm:$0xf]
      %v191 = vld [vmem:[%s166 + $0x40] sm:$0xf]
      %v192 = vld [vmem:[%s166 + $0x44] sm:$0xf]
      %v193 = vld [vmem:[%s166 + $0x48] sm:$0xf]
      %v194 = vld [vmem:[%s166 + $0x4c] sm:$0xf]
      %v195 = vld [vmem:[%s166 + $0x50] sm:$0xf]
      %v196 = vld [vmem:[%s166 + $0x54] sm:$0xf]
      %v197 = vld [vmem:[%s166 + $0x58] sm:$0xf]
      %v198 = vld [vmem:[%s166 + $0x5c] sm:$0xf]
      %v199 = vld [vmem:[%s166 + $0x60] sm:$0xf]
      %v200 = vld [vmem:[%s166 + $0x64] sm:$0xf]
      %v201 = vld [vmem:[%s166 + $0x68] sm:$0xf]
      %v202 = vld [vmem:[%s166 + $0x6c] sm:$0xf]
      %v203 = vld [vmem:[%s166 + $0x70] sm:$0xf]
      %v204 = vld [vmem:[%s166 + $0x74] sm:$0xf]
      %v205 = vld [vmem:[%s166 + $0x78] sm:$0xf]
      %v206 = vld [vmem:[%s166 + $0x7c] sm:$0xf]
      %v207 = vld [vmem:[%s1] sm:$0xf]
      %v208 = vld [vmem:[%s1 + $0x4] sm:$0xf]
      %v209 = vld [vmem:[%s1 + $0x8] sm:$0xf]
      %v210 = vld [vmem:[%s1 + $0xc] sm:$0x3]
      %v211 = vld [vmem:[%s2] sm:$0x1]
      %v213 = vlaneseq
      %v214 = vshrl.u32 %v213, 7
      %v215 = vsub.s32 0, %v214
      %v216 = vrot.slane %v211, %v215
      %v250 = vunpack.c.l.b16 %v175
      %v251 = vunpack.c.l.b16 %v176
      %v252 = vunpack.c.l.b16 %v177
      %v253 = vunpack.c.l.b16 %v178
      %v254 = vunpack.c.l.b16 %v179
      %v255 = vunpack.c.l.b16 %v180
      %v256 = vunpack.c.l.b16 %v181
      %v257 = vunpack.c.l.b16 %v182
      %v258 = vunpack.c.l.b16 %v183
      %v259 = vunpack.c.l.b16 %v184
      %v260 = vunpack.c.l.b16 %v185
      %v261 = vunpack.c.l.b16 %v186
      %v262 = vunpack.c.l.b16 %v187
      %v263 = vunpack.c.l.b16 %v188
      %v264 = vunpack.c.l.b16 %v189
      %v265 = vunpack.c.l.b16 %v190
      %v266 = vunpack.c.l.b16 %v191
      %v267 = vunpack.c.l.b16 %v192
      %v268 = vunpack.c.l.b16 %v193
      %v269 = vunpack.c.l.b16 %v194
      %v270 = vunpack.c.l.b16 %v195
      %v271 = vunpack.c.l.b16 %v196
      %v272 = vunpack.c.l.b16 %v197
      %v273 = vunpack.c.l.b16 %v198
      %v274 = vunpack.c.l.b16 %v199
      %v275 = vunpack.c.l.b16 %v200
      %v276 = vunpack.c.l.b16 %v201
      %v277 = vunpack.c.l.b16 %v202
      %v278 = vunpack.c.l.b16 %v203
      %v279 = vunpack.c.l.b16 %v204
      %v280 = vunpack.c.l.b16 %v205
      %v281 = vunpack.c.l.b16 %v206
      %v282 = vpack.c.b16 %v251, %v250
      %v283 = vpack.c.b16 %v253, %v252
      %v284 = vpack.c.b16 %v255, %v254
      %v285 = vpack.c.b16 %v257, %v256
      %v286 = vpack.c.b16 %v259, %v258
      %v287 = vpack.c.b16 %v261, %v260
      %v288 = vpack.c.b16 %v263, %v262
      %v289 = vpack.c.b16 %v265, %v264
      %v290 = vpack.c.b16 %v267, %v266
      %v291 = vpack.c.b16 %v269, %v268
      %v292 = vpack.c.b16 %v271, %v270
      %v293 = vpack.c.b16 %v273, %v272
      %v294 = vpack.c.b16 %v275, %v274
      %v295 = vpack.c.b16 %v277, %v276
      %v296 = vpack.c.b16 %v279, %v278
      %v297 = vpack.c.b16 %v281, %v280
      %v302 = vunpack.c.l.b16 %v207
      %v303 = vunpack.c.l.b16 %v208
      %v304 = vunpack.c.l.b16 %v209
      %v305 = vunpack.c.l.b16 %v210
      %v306 = vpack.c.b16 %v303, %v302
      %v307 = vpack.c.b16 %v305, %v304
      %vm309 = vcmask 220160
      %v311 = vsel %vm309, %v282, 0
      %v314 = vsel %vm309, %v283, 0
      %v317 = vsel %vm309, %v284, 0
      %v320 = vsel %vm309, %v285, 0
      %v323 = vsel %vm309, %v286, 0
      %v326 = vsel %vm309, %v287, 0
      %v329 = vsel %vm309, %v288, 0
      %v332 = vsel %vm309, %v289, 0
      %v335 = vsel %vm309, %v290, 0
      %v338 = vsel %vm309, %v291, 0
      %v341 = vsel %vm309, %v292, 0
      %v344 = vsel %vm309, %v293, 0
      %v347 = vsel %vm309, %v294, 0
      %v350 = vsel %vm309, %v295, 0
      %v353 = vsel %vm309, %v296, 0
      %v356 = vsel %vm309, %v297, 0
      %vm358 = vcmask 1044480
      %vm359 = vcmask 1045504
      %v360 = vsel %vm358, 4294967295, 65535
      %v361 = vsel %vm359, %v360, 0
      %v363 = vand.u32 %v307, %v361
      %365 = vmatprep.subr.bf16.mxu0 0
      %366 = vmatpush1.bf16.msra.mxu0 0
      %367 = vmatprep.subr.bf16.mxu0 0
      %368 = vmatpush1.bf16.msra.mxu0 0
      %369 = vmatprep.subr.bf16.mxu0 0
      %370 = vmatpush1.bf16.msra.mxu0 0
      %371 = vmatprep.subr.bf16.mxu0 0
      %372 = vmatpush1.bf16.msra.mxu0 0
      %373 = vmatprep.subr.bf16.mxu0 0
      %374 = vmatpush1.bf16.msra.mxu0 0
      %375 = vmatprep.subr.bf16.mxu0 0
      %376 = vmatpush1.bf16.msra.mxu0 0
      %377 = vmatprep.subr.bf16.mxu0 0
      %378 = vmatpush1.bf16.msra.mxu0 %v363
      %379 = vmatprep.subr.bf16.mxu0 0
      %380 = vmatpush1.bf16.msra.mxu0 %v306
      %381 = vmatprep.subr.bf16.mxu0 0
      %382 = vmatpush2.bf16.msra.mxu0 0
      %383 = vmatprep.subr.bf16.mxu0 0
      %384 = vmatpush2.bf16.msra.mxu0 0
      %385 = vmatprep.subr.bf16.mxu0 0
      %386 = vmatpush2.bf16.msra.mxu0 0
      %387 = vmatprep.subr.bf16.mxu0 0
      %388 = vmatpush2.bf16.msra.mxu0 0
      %389 = vmatprep.subr.bf16.mxu0 0
      %390 = vmatpush2.bf16.msra.mxu0 0
      %391 = vmatprep.subr.bf16.mxu0 0
      %392 = vmatpush2.bf16.msra.mxu0 0
      %393 = vmatprep.subr.bf16.mxu0 0
      %394 = vmatpush2.bf16.msra.mxu0 0
      %395 = vmatprep.subr.bf16.mxu0 0
      %396 = vmatpush2.bf16.msra.mxu0 0
      %397 = vmatprep.mubr.bf16.mxu0 0
      %398 = vmatmul.mubr.bf16.gmra.mxu0 %v311
      %v399 = vpop.f32.mrf.mxu0
      %v400 = vadd.f32 %v216, %v399
      %v401 = vpop.f32.mrf.mxu0
      %v402 = vpop.f32.mrf.mxu0
      %v403 = vadd.f32 %v216, %v402
      %v404 = vpop.f32.mrf.mxu0
      %405 = vmatprep.mubr.bf16.mxu0 0
      %406 = vmatmul.mubr.bf16.gmra.mxu0 %v314
      %v407 = vpop.f32.mrf.mxu0
      %v408 = vadd.f32 %v216, %v407
      %v409 = vpop.f32.mrf.mxu0
      %v410 = vpop.f32.mrf.mxu0
      %v411 = vadd.f32 %v216, %v410
      %v412 = vpop.f32.mrf.mxu0
      %413 = vmatprep.mubr.bf16.mxu0 0
      %414 = vmatmul.mubr.bf16.gmra.mxu0 %v317
      %v415 = vpop.f32.mrf.mxu0
      %v416 = vadd.f32 %v216, %v415
      %v417 = vpop.f32.mrf.mxu0
      %v418 = vpop.f32.mrf.mxu0
      %v419 = vadd.f32 %v216, %v418
      %v420 = vpop.f32.mrf.mxu0
      %421 = vmatprep.mubr.bf16.mxu0 0
      %422 = vmatmul.mubr.bf16.gmra.mxu0 %v320
      %v423 = vpop.f32.mrf.mxu0
      %v424 = vadd.f32 %v216, %v423
      %v425 = vpop.f32.mrf.mxu0
      %v426 = vpop.f32.mrf.mxu0
      %v427 = vadd.f32 %v216, %v426
      %v428 = vpop.f32.mrf.mxu0
      %429 = vmatprep.mubr.bf16.mxu0 0
      %430 = vmatmul.mubr.bf16.gmra.mxu0 %v323
      %v431 = vpop.f32.mrf.mxu0
      %v432 = vadd.f32 %v216, %v431
      %v433 = vpop.f32.mrf.mxu0
      %v434 = vpop.f32.mrf.mxu0
      %v435 = vadd.f32 %v216, %v434
      %v436 = vpop.f32.mrf.mxu0
      %437 = vmatprep.mubr.bf16.mxu0 0
      %438 = vmatmul.mubr.bf16.gmra.mxu0 %v326
      %v439 = vpop.f32.mrf.mxu0
      %v440 = vadd.f32 %v216, %v439
      %v441 = vpop.f32.mrf.mxu0
      %v442 = vpop.f32.mrf.mxu0
      %v443 = vadd.f32 %v216, %v442
      %v444 = vpop.f32.mrf.mxu0
      %445 = vmatprep.mubr.bf16.mxu0 0
      %446 = vmatmul.mubr.bf16.gmra.mxu0 %v329
      %v447 = vpop.f32.mrf.mxu0
      %v448 = vadd.f32 %v216, %v447
      %v449 = vpop.f32.mrf.mxu0
      %v450 = vpop.f32.mrf.mxu0
      %v451 = vadd.f32 %v216, %v450
      %v452 = vpop.f32.mrf.mxu0
      %453 = vmatprep.mubr.bf16.mxu0 0
      %454 = vmatmul.mubr.bf16.gmra.mxu0 %v332
      %v455 = vpop.f32.mrf.mxu0
      %v456 = vadd.f32 %v216, %v455
      %v457 = vpop.f32.mrf.mxu0
      %v458 = vpop.f32.mrf.mxu0
      %v459 = vadd.f32 %v216, %v458
      %v460 = vpop.f32.mrf.mxu0
      %461 = vmatprep.mubr.bf16.mxu0 0
      %462 = vmatmul.mubr.bf16.gmra.mxu0 %v335
      %v463 = vpop.f32.mrf.mxu0
      %v464 = vadd.f32 %v216, %v463
      %v465 = vpop.f32.mrf.mxu0
      %v466 = vpop.f32.mrf.mxu0
      %v467 = vadd.f32 %v216, %v466
      %v468 = vpop.f32.mrf.mxu0
      %469 = vmatprep.mubr.bf16.mxu0 0
      %470 = vmatmul.mubr.bf16.gmra.mxu0 %v338
      %v471 = vpop.f32.mrf.mxu0
      %v472 = vadd.f32 %v216, %v471
      %v473 = vpop.f32.mrf.mxu0
      %v474 = vpop.f32.mrf.mxu0
      %v475 = vadd.f32 %v216, %v474
      %v476 = vpop.f32.mrf.mxu0
      %477 = vmatprep.mubr.bf16.mxu0 0
      %478 = vmatmul.mubr.bf16.gmra.mxu0 %v341
      %v479 = vpop.f32.mrf.mxu0
      %v480 = vadd.f32 %v216, %v479
      %v481 = vpop.f32.mrf.mxu0
      %v482 = vpop.f32.mrf.mxu0
      %v483 = vadd.f32 %v216, %v482
      %v484 = vpop.f32.mrf.mxu0
      %485 = vmatprep.mubr.bf16.mxu0 0
      %486 = vmatmul.mubr.bf16.gmra.mxu0 %v344
      %v487 = vpop.f32.mrf.mxu0
      %v488 = vadd.f32 %v216, %v487
      %v489 = vpop.f32.mrf.mxu0
      %v490 = vpop.f32.mrf.mxu0
      %v491 = vadd.f32 %v216, %v490
      %v492 = vpop.f32.mrf.mxu0
      %493 = vmatprep.mubr.bf16.mxu0 0
      %494 = vmatmul.mubr.bf16.gmra.mxu0 %v347
      %v495 = vpop.f32.mrf.mxu0
      %v496 = vadd.f32 %v216, %v495
      %v497 = vpop.f32.mrf.mxu0
      %v498 = vpop.f32.mrf.mxu0
      %v499 = vadd.f32 %v216, %v498
      %v500 = vpop.f32.mrf.mxu0
      %501 = vmatprep.mubr.bf16.mxu0 0
      %502 = vmatmul.mubr.bf16.gmra.mxu0 %v350
      %v503 = vpop.f32.mrf.mxu0
      %v504 = vadd.f32 %v216, %v503
      %v505 = vpop.f32.mrf.mxu0
      %v506 = vpop.f32.mrf.mxu0
      %v507 = vadd.f32 %v216, %v506
      %v508 = vpop.f32.mrf.mxu0
      %509 = vmatprep.mubr.bf16.mxu0 0
      %510 = vmatmul.mubr.bf16.gmra.mxu0 %v353
      %v511 = vpop.f32.mrf.mxu0
      %v512 = vadd.f32 %v216, %v511
      %v513 = vpop.f32.mrf.mxu0
      %v514 = vpop.f32.mrf.mxu0
      %v515 = vadd.f32 %v216, %v514
      %v516 = vpop.f32.mrf.mxu0
      %517 = vmatprep.mubr.bf16.mxu0 0
      %518 = vmatmul.mubr.bf16.gmra.mxu0 %v356
      %v519 = vpop.f32.mrf.mxu0
      %v520 = vadd.f32 %v216, %v519
      %v521 = vpop.f32.mrf.mxu0
      %v522 = vpop.f32.mrf.mxu0
      %v523 = vadd.f32 %v216, %v522
      %v524 = vpop.f32.mrf.mxu0
      %525 = vdwg.mxu0
      %v526 = vmax.f32 %v400, 0.0
      %v527 = vmax.f32 %v403, 0.0
      %v528 = vmax.f32 %v408, 0.0
      %v529 = vmax.f32 %v411, 0.0
      %v530 = vmax.f32 %v416, 0.0
      %v531 = vmax.f32 %v419, 0.0
      %v532 = vmax.f32 %v424, 0.0
      %v533 = vmax.f32 %v427, 0.0
      %v534 = vmax.f32 %v432, 0.0
      %v535 = vmax.f32 %v435, 0.0
      %v536 = vmax.f32 %v440, 0.0
      %v537 = vmax.f32 %v443, 0.0
      %v538 = vmax.f32 %v448, 0.0
      %v539 = vmax.f32 %v451, 0.0
      %v540 = vmax.f32 %v456, 0.0
      %v541 = vmax.f32 %v459, 0.0
      %v542 = vmax.f32 %v464, 0.0
      %v543 = vmax.f32 %v467, 0.0
      %v544 = vmax.f32 %v472, 0.0
      %v545 = vmax.f32 %v475, 0.0
      %v546 = vmax.f32 %v480, 0.0
      %v547 = vmax.f32 %v483, 0.0
      %v548 = vmax.f32 %v488, 0.0
      %v549 = vmax.f32 %v491, 0.0
      %v550 = vmax.f32 %v496, 0.0
      %v551 = vmax.f32 %v499, 0.0
      %v552 = vmax.f32 %v504, 0.0
      %v553 = vmax.f32 %v507, 0.0
      %v554 = vmax.f32 %v512, 0.0
      %v555 = vmax.f32 %v515, 0.0
      %v556 = vmax.f32 %v520, 0.0
      %v557 = vmax.f32 %v523, 0.0
      %558 = vst [vmem:[%s172] sm:$0xff] %v526
      %559 = vst [vmem:[%s172 + $0x8] sm:$0xff] %v527
      %560 = vst [vmem:[%s172 + $0x10] sm:$0xff] %v528
      %561 = vst [vmem:[%s172 + $0x18] sm:$0xff] %v529
      %562 = vst [vmem:[%s172 + $0x20] sm:$0xff] %v530
      %563 = vst [vmem:[%s172 + $0x28] sm:$0xff] %v531
      %564 = vst [vmem:[%s172 + $0x30] sm:$0xff] %v532
      %565 = vst [vmem:[%s172 + $0x38] sm:$0xff] %v533
      %566 = vst [vmem:[%s172 + $0x40] sm:$0xff] %v534
      %567 = vst [vmem:[%s172 + $0x48] sm:$0xff] %v535
      %568 = vst [vmem:[%s172 + $0x50] sm:$0xff] %v536
      %569 = vst [vmem:[%s172 + $0x58] sm:$0xff] %v537
      %570 = vst [vmem:[%s172 + $0x60] sm:$0xff] %v538
      %571 = vst [vmem:[%s172 + $0x68] sm:$0xff] %v539
      %572 = vst [vmem:[%s172 + $0x70] sm:$0xff] %v540
      %573 = vst [vmem:[%s172 + $0x78] sm:$0xff] %v541
      %574 = vst [vmem:[%s172 + $0x80] sm:$0xff] %v542
      %575 = vst [vmem:[%s172 + $0x88] sm:$0xff] %v543
      %576 = vst [vmem:[%s172 + $0x90] sm:$0xff] %v544
      %577 = vst [vmem:[%s172 + $0x98] sm:$0xff] %v545
      %578 = vst [vmem:[%s172 + $0xa0] sm:$0xff] %v546
      %579 = vst [vmem:[%s172 + $0xa8] sm:$0xff] %v547
      %580 = vst [vmem:[%s172 + $0xb0] sm:$0xff] %v548
      %581 = vst [vmem:[%s172 + $0xb8] sm:$0xff] %v549
      %582 = vst [vmem:[%s172 + $0xc0] sm:$0xff] %v550
      %583 = vst [vmem:[%s172 + $0xc8] sm:$0xff] %v551
      %584 = vst [vmem:[%s172 + $0xd0] sm:$0xff] %v552
      %585 = vst [vmem:[%s172 + $0xd8] sm:$0xff] %v553
      %586 = vst [vmem:[%s172 + $0xe0] sm:$0xff] %v554
      %587 = vst [vmem:[%s172 + $0xe8] sm:$0xff] %v555
      %588 = vst [vmem:[%s172 + $0xf0] sm:$0xff] %v556
      %589 = vst [vmem:[%s172 + $0xf8] sm:$0xff] %v557
      %s590 = smul.u32 32, %s14
      %p591 = scmp.lt.s32.totalorder %s590, 63
      %s592 = scalar_select %p591, %s590, 63
      %s593 = smul.addr %s592, 8
      %s594 = scalar_lea.vmem %s3, %s593
      // Predicated region
      $region33: #{resnet_forward.12} parent=31 // pred_check
        %p595 = pneg %p100
      $region34: #{resnet_forward.12} parent=31 // pred_check_branch
        %597 = sbr.rel (%p595) target = $region36
      $region35: #{resnet_forward.12} parent=31 // pred_region
        %s598 = smul.u32 32, %s14
      $region36: #{resnet_forward.12} parent=31 // pred_fallthru
        _
    $region32: #{resnet_forward.12} parent=5 // pred_fallthru
      _
    %p599 = scmp.le.s32.totalorder 2, %s9
    // Predicated region
    $region37: #{resnet_forward.12} parent=5 // pred_check
      %p600 = pneg %p599
    $region38: #{resnet_forward.12} parent=5 // pred_check_branch
      %602 = sbr.rel (%p600) target = $region40
    $region39: #{resnet_forward.12} parent=5 // pred_region
      %s603 = ssub.s32 %s9, 2
      // Predicated region
      $region41: #{resnet_forward.12} parent=39 // pred_check
        %p604 = pneg %p106
      $region42: #{resnet_forward.12} parent=39 // pred_check_branch
        %606 = sbr.rel (%p604) target = $region44
      $region43: #{resnet_forward.12} parent=39 // pred_region
        %s607 = smul.u32 32, %s15
        %p608 = scmp.lt.s32.totalorder %s607, 63
        %s609 = scalar_select %p608, %s607, 63
        %s610 = smul.addr %s609, 8
        %s611 = scalar_lea.vmem %s3, %s610
      $region44: #{resnet_forward.12} parent=39 // pred_fallthru
        _
    $region40: #{resnet_forward.12} parent=5 // pred_fallthru
      _
  $region6: #{resnet_forward.12} parent=0 // loop_footer
    %s13 = sadd.s32 1, %s9
  $region7: #{resnet_forward.12} parent=0 // loop_footer_branch
    %8 = sbr.rel target = $region3
  $region8: #{resnet_forward.12} parent=0 // loop_exit
    _

// kernel: resnet_forward.13
$region0: #{resnet_forward.13}
  #allocation0 [shape = 'u32[]', space=smem, size = 0x4, offset = 0x4, fixed_abs, tag = 'smem constant byte address 0x4 - core index']
  #allocation1 [shape = 'u32[144,128]{1,0:T(1,128)}', space=vmem, size = 0x12000, scoped, tag = 'internal scratch']
  %s0 = inlined_call_operand.vmem [shape: bf16[512,72], index: 0, kind: input, shape index: {}]
  %s1 = inlined_call_operand.vmem [shape: bf16[72,128], index: 1, kind: input, shape index: {}]
  %s2 = inlined_call_operand.vmem [shape: f32[1,128], index: 2, kind: input, shape index: {}]
  %s3 = inlined_call_operand.vmem [shape: f32[512,128], index: 3, kind: output, shape index: {}]
  %s4 = sld [smem:[#allocation0]]
  $region45: #{resnet_forward.13} parent=0
    _
  %s6 = ssub.s32 1, %s4
  %s7 = scalar_select 0, %s6, %s4
  loop: start=0, step=1, limit=4
  $region2: #{resnet_forward.13} parent=0 // loop_pre_header
    _
  $region3: #{resnet_forward.13} parent=0 // loop_header
    %s9 = sphi 0, %s13
    %p10 = scmp.ge.s32.totalorder %s9, 4
    %s19 = sphi 0, %s21
    %s22 = sphi 0, %s19
    %s23 = sphi 0, %s22
    %s39 = sphi 0, %s23
    %s43 = sphi 0, %s43
    %s45 = sphi 0, %s43
    %s46 = sphi 0, %s45
    %s60 = sphi 0, %s46
    %s64 = sphi 0, %s64
    %s66 = sphi 0, %s64
    %s67 = sphi 0, %s66
    %s81 = sphi 0, %s67
    %s87 = sphi 0, %s89
    %s90 = sphi 0, %s87
    %s91 = sphi 0, %s90
    %s107 = sphi 0, %s91
  $region4: #{resnet_forward.13} parent=0 // loop_header_branch
    %12 = sbr.rel (%p10) target = $region8
  $region5: #{resnet_forward.13} parent=0 // loop_body
    %s14 = ssub.s32 %s9, 1
    %s15 = ssub.s32 %s9, 2
    %s16 = sadd.s32 %s9, 1
    %s17 = ssub.s32 %s9, %s16
    %p18 = scmp.eq.s32.totalorder %s17, 0
    %s20 = sadd.s32 %s19, 1
    %s21 = scalar_select %p18, %s19, %s20
    %p24 = pneg %p18
    %p25 = scmp.eq.s32.totalorder %s9, 1
    %p26 = por %p24, %p25
    %p27 = scmp.ne.s32.totalorder %s19, %s22
    %p28 = scmp.eq.s32.totalorder %s9, 0
    %p29 = por %p27, %p28
    %p30 = scmp.ne.s32.totalorder %s19, %s22
    %p31 = scmp.eq.s32.totalorder %s14, 1
    %p32 = por %p30, %p31
    %p33 = scmp.ne.s32.totalorder %s22, %s23
    %p34 = scmp.eq.s32.totalorder %s14, 0
    %p35 = por %p33, %p34
    %p36 = scmp.ne.s32.totalorder %s22, %s23
    %p37 = scmp.eq.s32.totalorder %s15, 1
    %p38 = por %p36, %p37
    %p40 = scmp.ne.s32.totalorder %s23, %s39
    %p41 = scmp.eq.s32.totalorder %s15, 0
    %p42 = por %p40, %p41
    %s44 = sadd.s32 %s43, 1
    %p47 = scmp.eq.s32.totalorder %s9, 1
    %p48 = scmp.ne.s32.totalorder %s43, %s45
    %p49 = scmp.eq.s32.totalorder %s9, 0
    %p50 = por %p48, %p49
    %p51 = scmp.ne.s32.totalorder %s43, %s45
    %p52 = scmp.eq.s32.totalorder %s14, 1
    %p53 = por %p51, %p52
    %p54 = scmp.ne.s32.totalorder %s45, %s46
    %p55 = scmp.eq.s32.totalorder %s14, 0
    %p56 = por %p54, %p55
    %p57 = scmp.ne.s32.totalorder %s45, %s46
    %p58 = scmp.eq.s32.totalorder %s15, 1
    %p59 = por %p57, %p58
    %p61 = scmp.ne.s32.totalorder %s46, %s60
    %p62 = scmp.eq.s32.totalorder %s15, 0
    %p63 = por %p61, %p62
    %s65 = sadd.s32 %s64, 1
    %p68 = scmp.eq.s32.totalorder %s9, 1
    %p69 = scmp.ne.s32.totalorder %s64, %s66
    %p70 = scmp.eq.s32.totalorder %s9, 0
    %p71 = por %p69, %p70
    %p72 = scmp.ne.s32.totalorder %s64, %s66
    %p73 = scmp.eq.s32.totalorder %s14, 1
    %p74 = por %p72, %p73
    %p75 = scmp.ne.s32.totalorder %s66, %s67
    %p76 = scmp.eq.s32.totalorder %s14, 0
    %p77 = por %p75, %p76
    %p78 = scmp.ne.s32.totalorder %s66, %s67
    %p79 = scmp.eq.s32.totalorder %s15, 1
    %p80 = por %p78, %p79
    %p82 = scmp.ne.s32.totalorder %s67, %s81
    %p83 = scmp.eq.s32.totalorder %s15, 0
    %p84 = por %p82, %p83
    %s85 = ssub.s32 %s9, %s16
    %p86 = scmp.eq.s32.totalorder %s85, 0
    %s88 = sadd.s32 %s87, 1
    %s89 = scalar_select %p86, %s87, %s88
    %p92 = pneg %p86
    %p93 = scmp.eq.s32.totalorder %s9, 1
    %p94 = por %p92, %p93
    %p95 = scmp.ne.s32.totalorder %s87, %s90
    %p96 = scmp.eq.s32.totalorder %s9, 0
    %p97 = por %p95, %p96
    %p98 = scmp.ne.s32.totalorder %s87, %s90
    %p99 = scmp.eq.s32.totalorder %s14, 1
    %p100 = por %p98, %p99
    %p101 = scmp.ne.s32.totalorder %s90, %s91
    %p102 = scmp.eq.s32.totalorder %s14, 0
    %p103 = por %p101, %p102
    %p104 = scmp.ne.s32.totalorder %s90, %s91
    %p105 = scmp.eq.s32.totalorder %s15, 1
    %p106 = por %p104, %p105
    %p108 = scmp.ne.s32.totalorder %s91, %s107
    %p109 = scmp.eq.s32.totalorder %s15, 0
    %p110 = por %p108, %p109
    %p111 = scmp.le.s32.totalorder 1, %s9
    %p112 = scmp.lt.s32.totalorder %s9, 3
    %p113 = pnand %p111, %p112
    %p114 = pneg %p113
    // Predicated region
    $region9: #{resnet_forward.13} parent=5 // pred_check
      _
    $region10: #{resnet_forward.13} parent=5 // pred_check_branch
      %116 = sbr.rel (%p113) target = $region12
    $region11: #{resnet_forward.13} parent=5 // pred_region
      %s117 = ssub.s32 %s9, 1
      // Predicated region
      $region13: #{resnet_forward.13} parent=11 // pred_check
        %p118 = pneg %p56
      $region14: #{resnet_forward.13} parent=11 // pred_check_branch
        %120 = sbr.rel (%p118) target = $region16
      $region15: #{resnet_forward.13} parent=11 // pred_region
        _
      $region16: #{resnet_forward.13} parent=11 // pred_fallthru
        _
      // Predicated region
      $region17: #{resnet_forward.13} parent=11 // pred_check
        %p121 = pneg %p77
      $region18: #{resnet_forward.13} parent=11 // pred_check_branch
        %123 = sbr.rel (%p121) target = $region20
      $region19: #{resnet_forward.13} parent=11 // pred_region
        _
      $region20: #{resnet_forward.13} parent=11 // pred_fallthru
        _
    $region12: #{resnet_forward.13} parent=5 // pred_fallthru
      _
    %p124 = scmp.lt.s32.totalorder %s9, 2
    // Predicated region
    $region21: #{resnet_forward.13} parent=5 // pred_check
      %p125 = pneg %p124
    $region22: #{resnet_forward.13} parent=5 // pred_check_branch
      %127 = sbr.rel (%p125) target = $region24
    $region23: #{resnet_forward.13} parent=5 // pred_region
      // Predicated region
      $region25: #{resnet_forward.13} parent=23 // pred_check
        %p128 = pneg %p29
      $region26: #{resnet_forward.13} parent=23 // pred_check_branch
        %130 = sbr.rel (%p128) target = $region28
      $region27: #{resnet_forward.13} parent=23 // pred_region
        %s131 = smul.u32 32, %s9
        %p132 = scmp.lt.s32.totalorder %s131, 63
        %s133 = scalar_select %p132, %s131, 63
        %s134 = smul.addr %s133, 4
        %s135 = scalar_lea.vmem %s0, %s134
        %s136 = smul.u32 32, %s9
      $region28: #{resnet_forward.13} parent=23 // pred_fallthru
        _
    $region24: #{resnet_forward.13} parent=5 // pred_fallthru
      _
    %p137 = scmp.le.s32.totalorder 1, %s9
    %p138 = scmp.lt.s32.totalorder %s9, 3
    %p139 = pnand %p137, %p138
    %p140 = pneg %p139
    // Predicated region
    $region29: #{resnet_forward.13} parent=5 // pred_check
      _
    $region30: #{resnet_forward.13} parent=5 // pred_check_branch
      %142 = sbr.rel (%p139) target = $region32
    $region31: #{resnet_forward.13} parent=5 // pred_region
      %s143 = ssub.s32 %s9, 1
      %s144 = smul.u32 32, %s14
      %p145 = scmp.lt.s32.totalorder %s144, 63
      %s146 = scalar_select %p145, %s144, 63
      %s147 = smul.addr %s146, 4
      %s148 = scalar_lea.vmem %s0, %s147
      %p149 = pneg %p35
      %p150 = pneg %p32
      %p151 = pneg %p56
      %p152 = pneg %p53
      %p153 = pneg %p77
      %p154 = pneg %p74
      %p155 = pneg %p103
      %p156 = pneg %p100
      %s157 = smul.u32 32, %s14
      %p158 = scmp.lt.s32.totalorder %s157, 63
      %s159 = scalar_select %p158, %s157, 63
      %s160 = smul.addr %s159, 8
      %s161 = scalar_lea.vmem %s3, %s160
      %s162 = smul.u32 32, %s14
      %p163 = scmp.lt.s32.totalorder %s162, 63
      %s164 = scalar_select %p163, %s162, 63
      %s165 = smul.addr %s164, 4
      %s166 = scalar_lea.vmem %s0, %s165
      %s167 = smul.u32 32, %s14
      %s168 = smul.u32 32, %s14
      %p169 = scmp.lt.s32.totalorder %s168, 63
      %s170 = scalar_select %p169, %s168, 63
      %s171 = smul.addr %s170, 8
      %s172 = scalar_lea.vmem %s3, %s171
      %s173 = smul.u32 32, %s14
      %v175 = vld [vmem:[%s166] sm:$0xf]
      %v176 = vld [vmem:[%s166 + $0x4] sm:$0xf]
      %v177 = vld [vmem:[%s166 + $0x8] sm:$0xf]
      %v178 = vld [vmem:[%s166 + $0xc] sm:$0xf]
      %v179 = vld [vmem:[%s166 + $0x10] sm:$0xf]
      %v180 = vld [vmem:[%s166 + $0x14] sm:$0xf]
      %v181 = vld [vmem:[%s166 + $0x18] sm:$0xf]
      %v182 = vld [vmem:[%s166 + $0x1c] sm:$0xf]
      %v183 = vld [vmem:[%s166 + $0x20] sm:$0xf]
      %v184 = vld [vmem:[%s166 + $0x24] sm:$0xf]
      %v185 = vld [vmem:[%s166 + $0x28] sm:$0xf]
      %v186 = vld [vmem:[%s166 + $0x2c] sm:$0xf]
      %v187 = vld [vmem:[%s166 + $0x30] sm:$0xf]
      %v188 = vld [vmem:[%s166 + $0x34] sm:$0xf]
      %v189 = vld [vmem:[%s166 + $0x38] sm:$0xf]
      %v190 = vld [vmem:[%s166 + $0x3c] sm:$0xf]
      %v191 = vld [vmem:[%s166 + $0x40] sm:$0xf]
      %v192 = vld [vmem:[%s166 + $0x44] sm:$0xf]
      %v193 = vld [vmem:[%s166 + $0x48] sm:$0xf]
      %v194 = vld [vmem:[%s166 + $0x4c] sm:$0xf]
      %v195 = vld [vmem:[%s166 + $0x50] sm:$0xf]
      %v196 = vld [vmem:[%s166 + $0x54] sm:$0xf]
      %v197 = vld [vmem:[%s166 + $0x58] sm:$0xf]
      %v198 = vld [vmem:[%s166 + $0x5c] sm:$0xf]
      %v199 = vld [vmem:[%s166 + $0x60] sm:$0xf]
      %v200 = vld [vmem:[%s166 + $0x64] sm:$0xf]
      %v201 = vld [vmem:[%s166 + $0x68] sm:$0xf]
      %v202 = vld [vmem:[%s166 + $0x6c] sm:$0xf]
      %v203 = vld [vmem:[%s166 + $0x70] sm:$0xf]
      %v204 = vld [vmem:[%s166 + $0x74] sm:$0xf]
      %v205 = vld [vmem:[%s166 + $0x78] sm:$0xf]
      %v206 = vld [vmem:[%s166 + $0x7c] sm:$0xf]
      %v207 = vld [vmem:[%s1] sm:$0xf]
      %v208 = vld [vmem:[%s1 + $0x4] sm:$0xf]
      %v209 = vld [vmem:[%s1 + $0x8] sm:$0xf]
      %v210 = vld [vmem:[%s1 + $0xc] sm:$0xf]
      %v211 = vld [vmem:[%s1 + $0x10] sm:$0xf]
      %v212 = vld [vmem:[%s1 + $0x14] sm:$0xf]
      %v213 = vld [vmem:[%s1 + $0x18] sm:$0xf]
      %v214 = vld [vmem:[%s1 + $0x1c] sm:$0xf]
      %v215 = vld [vmem:[%s1 + $0x20] sm:$0xf]
      %v216 = vld [vmem:[%s2] sm:$0x1]
      %v218 = vlaneseq
      %v219 = vshrl.u32 %v218, 7
      %v220 = vsub.s32 0, %v219
      %v221 = vrot.slane %v216, %v220
      %v255 = vunpack.c.l.b16 %v175
      %v256 = vunpack.c.l.b16 %v176
      %v257 = vunpack.c.l.b16 %v177
      %v258 = vunpack.c.l.b16 %v178
      %v259 = vunpack.c.l.b16 %v179
      %v260 = vunpack.c.l.b16 %v180
      %v261 = vunpack.c.l.b16 %v181
      %v262 = vunpack.c.l.b16 %v182
      %v263 = vunpack.c.l.b16 %v183
      %v264 = vunpack.c.l.b16 %v184
      %v265 = vunpack.c.l.b16 %v185
      %v266 = vunpack.c.l.b16 %v186
      %v267 = vunpack.c.l.b16 %v187
      %v268 = vunpack.c.l.b16 %v188
      %v269 = vunpack.c.l.b16 %v189
      %v270 = vunpack.c.l.b16 %v190
      %v271 = vunpack.c.l.b16 %v191
      %v272 = vunpack.c.l.b16 %v192
      %v273 = vunpack.c.l.b16 %v193
      %v274 = vunpack.c.l.b16 %v194
      %v275 = vunpack.c.l.b16 %v195
      %v276 = vunpack.c.l.b16 %v196
      %v277 = vunpack.c.l.b16 %v197
      %v278 = vunpack.c.l.b16 %v198
      %v279 = vunpack.c.l.b16 %v199
      %v280 = vunpack.c.l.b16 %v200
      %v281 = vunpack.c.l.b16 %v201
      %v282 = vunpack.c.l.b16 %v202
      %v283 = vunpack.c.l.b16 %v203
      %v284 = vunpack.c.l.b16 %v204
      %v285 = vunpack.c.l.b16 %v205
      %v286 = vunpack.c.l.b16 %v206
      %v287 = vpack.c.b16 %v256, %v255
      %v288 = vpack.c.b16 %v258, %v257
      %v289 = vpack.c.b16 %v260, %v259
      %v290 = vpack.c.b16 %v262, %v261
      %v291 = vpack.c.b16 %v264, %v263
      %v292 = vpack.c.b16 %v266, %v265
      %v293 = vpack.c.b16 %v268, %v267
      %v294 = vpack.c.b16 %v270, %v269
      %v295 = vpack.c.b16 %v272, %v271
      %v296 = vpack.c.b16 %v274, %v273
      %v297 = vpack.c.b16 %v276, %v275
      %v298 = vpack.c.b16 %v278, %v277
      %v299 = vpack.c.b16 %v280, %v279
      %v300 = vpack.c.b16 %v282, %v281
      %v301 = vpack.c.b16 %v284, %v283
      %v302 = vpack.c.b16 %v286, %v285
      %v312 = vunpack.c.l.b16 %v207
      %v313 = vunpack.c.l.b16 %v208
      %v314 = vunpack.c.l.b16 %v209
      %v315 = vunpack.c.l.b16 %v210
      %v316 = vunpack.c.l.b16 %v211
      %v317 = vunpack.c.l.b16 %v212
      %v318 = vunpack.c.l.b16 %v213
      %v319 = vunpack.c.l.b16 %v214
      %v320 = vunpack.c.l.b16 %v215
      %v321 = vpack.c.b16 %v313, %v312
      %v322 = vpack.c.b16 %v315, %v314
      %v323 = vpack.c.b16 %v317, %v316
      %v324 = vpack.c.b16 %v319, %v318
      %v325 = vpack.c.b16 %v320, %v320
      %vm330 = vcmask 588800
      %v332 = vsel %vm330, %v287, 0
      %v335 = vsel %vm330, %v288, 0
      %v338 = vsel %vm330, %v289, 0
      %v341 = vsel %vm330, %v290, 0
      %v344 = vsel %vm330, %v291, 0
      %v347 = vsel %vm330, %v292, 0
      %v350 = vsel %vm330, %v293, 0
      %v353 = vsel %vm330, %v294, 0
      %v356 = vsel %vm330, %v295, 0
      %v359 = vsel %vm330, %v296, 0
      %v362 = vsel %vm330, %v297, 0
      %v365 = vsel %vm330, %v298, 0
      %v368 = vsel %vm330, %v299, 0
      %v371 = vsel %vm330, %v300, 0
      %v374 = vsel %vm330, %v301, 0
      %v377 = vsel %vm330, %v302, 0
      %vm379 = vcmask 1043456
      %v381 = vsel %vm379, %v325, 0
      %383 = vmatprep.subr.bf16.mxu0 0
      %384 = vmatpush1.bf16.msra.mxu0 0
      %385 = vmatprep.subr.bf16.mxu0 0
      %386 = vmatpush1.bf16.msra.mxu0 0
      %387 = vmatprep.subr.bf16.mxu0 0
      %388 = vmatpush1.bf16.msra.mxu0 0
      %389 = vmatprep.subr.bf16.mxu0 0
      %390 = vmatpush1.bf16.msra.mxu0 %v381
      %391 = vmatprep.subr.bf16.mxu0 0
      %392 = vmatpush1.bf16.msra.mxu0 %v324
      %393 = vmatprep.subr.bf16.mxu0 0
      %394 = vmatpush1.bf16.msra.mxu0 %v323
      %395 = vmatprep.subr.bf16.mxu0 0
      %396 = vmatpush1.bf16.msra.mxu0 %v322
      %397 = vmatprep.subr.bf16.mxu0 0
      %398 = vmatpush1.bf16.msra.mxu0 %v321
      %399 = vmatprep.subr.bf16.mxu0 0
      %400 = vmatpush2.bf16.msra.mxu0 0
      %401 = vmatprep.subr.bf16.mxu0 0
      %402 = vmatpush2.bf16.msra.mxu0 0
      %403 = vmatprep.subr.bf16.mxu0 0
      %404 = vmatpush2.bf16.msra.mxu0 0
      %405 = vmatprep.subr.bf16.mxu0 0
      %406 = vmatpush2.bf16.msra.mxu0 0
      %407 = vmatprep.subr.bf16.mxu0 0
      %408 = vmatpush2.bf16.msra.mxu0 0
      %409 = vmatprep.subr.bf16.mxu0 0
      %410 = vmatpush2.bf16.msra.mxu0 0
      %411 = vmatprep.subr.bf16.mxu0 0
      %412 = vmatpush2.bf16.msra.mxu0 0
      %413 = vmatprep.subr.bf16.mxu0 0
      %414 = vmatpush2.bf16.msra.mxu0 0
      %415 = vmatprep.mubr.bf16.mxu0 0
      %416 = vmatmul.mubr.bf16.gmra.mxu0 %v332
      %v417 = vpop.f32.mrf.mxu0
      %v418 = vadd.f32 %v221, %v417
      %v419 = vpop.f32.mrf.mxu0
      %v420 = vpop.f32.mrf.mxu0
      %v421 = vadd.f32 %v221, %v420
      %v422 = vpop.f32.mrf.mxu0
      %423 = vmatprep.mubr.bf16.mxu0 0
      %424 = vmatmul.mubr.bf16.gmra.mxu0 %v335
      %v425 = vpop.f32.mrf.mxu0
      %v426 = vadd.f32 %v221, %v425
      %v427 = vpop.f32.mrf.mxu0
      %v428 = vpop.f32.mrf.mxu0
      %v429 = vadd.f32 %v221, %v428
      %v430 = vpop.f32.mrf.mxu0
      %431 = vmatprep.mubr.bf16.mxu0 0
      %432 = vmatmul.mubr.bf16.gmra.mxu0 %v338
      %v433 = vpop.f32.mrf.mxu0
      %v434 = vadd.f32 %v221, %v433
      %v435 = vpop.f32.mrf.mxu0
      %v436 = vpop.f32.mrf.mxu0
      %v437 = vadd.f32 %v221, %v436
      %v438 = vpop.f32.mrf.mxu0
      %439 = vmatprep.mubr.bf16.mxu0 0
      %440 = vmatmul.mubr.bf16.gmra.mxu0 %v341
      %v441 = vpop.f32.mrf.mxu0
      %v442 = vadd.f32 %v221, %v441
      %v443 = vpop.f32.mrf.mxu0
      %v444 = vpop.f32.mrf.mxu0
      %v445 = vadd.f32 %v221, %v444
      %v446 = vpop.f32.mrf.mxu0
      %447 = vmatprep.mubr.bf16.mxu0 0
      %448 = vmatmul.mubr.bf16.gmra.mxu0 %v344
      %v449 = vpop.f32.mrf.mxu0
      %v450 = vadd.f32 %v221, %v449
      %v451 = vpop.f32.mrf.mxu0
      %v452 = vpop.f32.mrf.mxu0
      %v453 = vadd.f32 %v221, %v452
      %v454 = vpop.f32.mrf.mxu0
      %455 = vmatprep.mubr.bf16.mxu0 0
      %456 = vmatmul.mubr.bf16.gmra.mxu0 %v347
      %v457 = vpop.f32.mrf.mxu0
      %v458 = vadd.f32 %v221, %v457
      %v459 = vpop.f32.mrf.mxu0
      %v460 = vpop.f32.mrf.mxu0
      %v461 = vadd.f32 %v221, %v460
      %v462 = vpop.f32.mrf.mxu0
      %463 = vmatprep.mubr.bf16.mxu0 0
      %464 = vmatmul.mubr.bf16.gmra.mxu0 %v350
      %v465 = vpop.f32.mrf.mxu0
      %v466 = vadd.f32 %v221, %v465
      %v467 = vpop.f32.mrf.mxu0
      %v468 = vpop.f32.mrf.mxu0
      %v469 = vadd.f32 %v221, %v468
      %v470 = vpop.f32.mrf.mxu0
      %471 = vmatprep.mubr.bf16.mxu0 0
      %472 = vmatmul.mubr.bf16.gmra.mxu0 %v353
      %v473 = vpop.f32.mrf.mxu0
      %v474 = vadd.f32 %v221, %v473
      %v475 = vpop.f32.mrf.mxu0
      %v476 = vpop.f32.mrf.mxu0
      %v477 = vadd.f32 %v221, %v476
      %v478 = vpop.f32.mrf.mxu0
      %479 = vmatprep.mubr.bf16.mxu0 0
      %480 = vmatmul.mubr.bf16.gmra.mxu0 %v356
      %v481 = vpop.f32.mrf.mxu0
      %v482 = vadd.f32 %v221, %v481
      %v483 = vpop.f32.mrf.mxu0
      %v484 = vpop.f32.mrf.mxu0
      %v485 = vadd.f32 %v221, %v484
      %v486 = vpop.f32.mrf.mxu0
      %487 = vmatprep.mubr.bf16.mxu0 0
      %488 = vmatmul.mubr.bf16.gmra.mxu0 %v359
      %v489 = vpop.f32.mrf.mxu0
      %v490 = vadd.f32 %v221, %v489
      %v491 = vpop.f32.mrf.mxu0
      %v492 = vpop.f32.mrf.mxu0
      %v493 = vadd.f32 %v221, %v492
      %v494 = vpop.f32.mrf.mxu0
      %495 = vmatprep.mubr.bf16.mxu0 0
      %496 = vmatmul.mubr.bf16.gmra.mxu0 %v362
      %v497 = vpop.f32.mrf.mxu0
      %v498 = vadd.f32 %v221, %v497
      %v499 = vpop.f32.mrf.mxu0
      %v500 = vpop.f32.mrf.mxu0
      %v501 = vadd.f32 %v221, %v500
      %v502 = vpop.f32.mrf.mxu0
      %503 = vmatprep.mubr.bf16.mxu0 0
      %504 = vmatmul.mubr.bf16.gmra.mxu0 %v365
      %v505 = vpop.f32.mrf.mxu0
      %v506 = vadd.f32 %v221, %v505
      %v507 = vpop.f32.mrf.mxu0
      %v508 = vpop.f32.mrf.mxu0
      %v509 = vadd.f32 %v221, %v508
      %v510 = vpop.f32.mrf.mxu0
      %511 = vmatprep.mubr.bf16.mxu0 0
      %512 = vmatmul.mubr.bf16.gmra.mxu0 %v368
      %v513 = vpop.f32.mrf.mxu0
      %v514 = vadd.f32 %v221, %v513
      %v515 = vpop.f32.mrf.mxu0
      %v516 = vpop.f32.mrf.mxu0
      %v517 = vadd.f32 %v221, %v516
      %v518 = vpop.f32.mrf.mxu0
      %519 = vmatprep.mubr.bf16.mxu0 0
      %520 = vmatmul.mubr.bf16.gmra.mxu0 %v371
      %v521 = vpop.f32.mrf.mxu0
      %v522 = vadd.f32 %v221, %v521
      %v523 = vpop.f32.mrf.mxu0
      %v524 = vpop.f32.mrf.mxu0
      %v525 = vadd.f32 %v221, %v524
      %v526 = vpop.f32.mrf.mxu0
      %527 = vmatprep.mubr.bf16.mxu0 0
      %528 = vmatmul.mubr.bf16.gmra.mxu0 %v374
      %v529 = vpop.f32.mrf.mxu0
      %v530 = vadd.f32 %v221, %v529
      %v531 = vpop.f32.mrf.mxu0
      %v532 = vpop.f32.mrf.mxu0
      %v533 = vadd.f32 %v221, %v532
      %v534 = vpop.f32.mrf.mxu0
      %535 = vmatprep.mubr.bf16.mxu0 0
      %536 = vmatmul.mubr.bf16.gmra.mxu0 %v377
      %v537 = vpop.f32.mrf.mxu0
      %v538 = vadd.f32 %v221, %v537
      %v539 = vpop.f32.mrf.mxu0
      %v540 = vpop.f32.mrf.mxu0
      %v541 = vadd.f32 %v221, %v540
      %v542 = vpop.f32.mrf.mxu0
      %543 = vdwg.mxu0
      %v544 = vmax.f32 %v418, 0.0
      %v545 = vmax.f32 %v421, 0.0
      %v546 = vmax.f32 %v426, 0.0
      %v547 = vmax.f32 %v429, 0.0
      %v548 = vmax.f32 %v434, 0.0
      %v549 = vmax.f32 %v437, 0.0
      %v550 = vmax.f32 %v442, 0.0
      %v551 = vmax.f32 %v445, 0.0
      %v552 = vmax.f32 %v450, 0.0
      %v553 = vmax.f32 %v453, 0.0
      %v554 = vmax.f32 %v458, 0.0
      %v555 = vmax.f32 %v461, 0.0
      %v556 = vmax.f32 %v466, 0.0
      %v557 = vmax.f32 %v469, 0.0
      %v558 = vmax.f32 %v474, 0.0
      %v559 = vmax.f32 %v477, 0.0
      %v560 = vmax.f32 %v482, 0.0
      %v561 = vmax.f32 %v485, 0.0
      %v562 = vmax.f32 %v490, 0.0
      %v563 = vmax.f32 %v493, 0.0
      %v564 = vmax.f32 %v498, 0.0
      %v565 = vmax.f32 %v501, 0.0
      %v566 = vmax.f32 %v506, 0.0
      %v567 = vmax.f32 %v509, 0.0
      %v568 = vmax.f32 %v514, 0.0
      %v569 = vmax.f32 %v517, 0.0
      %v570 = vmax.f32 %v522, 0.0
      %v571 = vmax.f32 %v525, 0.0
      %v572 = vmax.f32 %v530, 0.0
      %v573 = vmax.f32 %v533, 0.0
      %v574 = vmax.f32 %v538, 0.0
      %v575 = vmax.f32 %v541, 0.0
      %576 = vst [vmem:[%s172] sm:$0xff] %v544
      %577 = vst [vmem:[%s172 + $0x8] sm:$0xff] %v545
      %578 = vst [vmem:[%s172 + $0x10] sm:$0xff] %v546
      %579 = vst [vmem:[%s172 + $0x18] sm:$0xff] %v547
      %580 = vst [vmem:[%s172 + $0x20] sm:$0xff] %v548
      %581 = vst [vmem:[%s172 + $0x28] sm:$0xff] %v549
      %582 = vst [vmem:[%s172 + $0x30] sm:$0xff] %v550
      %583 = vst [vmem:[%s172 + $0x38] sm:$0xff] %v551
      %584 = vst [vmem:[%s172 + $0x40] sm:$0xff] %v552
      %585 = vst [vmem:[%s172 + $0x48] sm:$0xff] %v553
      %586 = vst [vmem:[%s172 + $0x50] sm:$0xff] %v554
      %587 = vst [vmem:[%s172 + $0x58] sm:$0xff] %v555
      %588 = vst [vmem:[%s172 + $0x60] sm:$0xff] %v556
      %589 = vst [vmem:[%s172 + $0x68] sm:$0xff] %v557
      %590 = vst [vmem:[%s172 + $0x70] sm:$0xff] %v558
      %591 = vst [vmem:[%s172 + $0x78] sm:$0xff] %v559
      %592 = vst [vmem:[%s172 + $0x80] sm:$0xff] %v560
      %593 = vst [vmem:[%s172 + $0x88] sm:$0xff] %v561
      %594 = vst [vmem:[%s172 + $0x90] sm:$0xff] %v562
      %595 = vst [vmem:[%s172 + $0x98] sm:$0xff] %v563
      %596 = vst [vmem:[%s172 + $0xa0] sm:$0xff] %v564
      %597 = vst [vmem:[%s172 + $0xa8] sm:$0xff] %v565
      %598 = vst [vmem:[%s172 + $0xb0] sm:$0xff] %v566
      %599 = vst [vmem:[%s172 + $0xb8] sm:$0xff] %v567
      %600 = vst [vmem:[%s172 + $0xc0] sm:$0xff] %v568
      %601 = vst [vmem:[%s172 + $0xc8] sm:$0xff] %v569
      %602 = vst [vmem:[%s172 + $0xd0] sm:$0xff] %v570
      %603 = vst [vmem:[%s172 + $0xd8] sm:$0xff] %v571
      %604 = vst [vmem:[%s172 + $0xe0] sm:$0xff] %v572
      %605 = vst [vmem:[%s172 + $0xe8] sm:$0xff] %v573
      %606 = vst [vmem:[%s172 + $0xf0] sm:$0xff] %v574
      %607 = vst [vmem:[%s172 + $0xf8] sm:$0xff] %v575
      %s608 = smul.u32 32, %s14
      %p609 = scmp.lt.s32.totalorder %s608, 63
      %s610 = scalar_select %p609, %s608, 63
      %s611 = smul.addr %s610, 8
      %s612 = scalar_lea.vmem %s3, %s611
      // Predicated region
      $region33: #{resnet_forward.13} parent=31 // pred_check
        %p613 = pneg %p100
      $region34: #{resnet_forward.13} parent=31 // pred_check_branch
        %615 = sbr.rel (%p613) target = $region36
      $region35: #{resnet_forward.13} parent=31 // pred_region
        %s616 = smul.u32 32, %s14
      $region36: #{resnet_forward.13} parent=31 // pred_fallthru
        _
    $region32: #{resnet_forward.13} parent=5 // pred_fallthru
      _
    %p617 = scmp.le.s32.totalorder 2, %s9
    // Predicated region
    $region37: #{resnet_forward.13} parent=5 // pred_check
      %p618 = pneg %p617
    $region38: #{resnet_forward.13} parent=5 // pred_check_branch
      %620 = sbr.rel (%p618) target = $region40
    $region39: #{resnet_forward.13} parent=5 // pred_region
      %s621 = ssub.s32 %s9, 2
      // Predicated region
      $region41: #{resnet_forward.13} parent=39 // pred_check
        %p622 = pneg %p106
      $region42: #{resnet_forward.13} parent=39 // pred_check_branch
        %624 = sbr.rel (%p622) target = $region44
      $region43: #{resnet_forward.13} parent=39 // pred_region
        %s625 = smul.u32 32, %s15
        %p626 = scmp.lt.s32.totalorder %s625, 63
        %s627 = scalar_select %p626, %s625, 63
        %s628 = smul.addr %s627, 8
        %s629 = scalar_lea.vmem %s3, %s628
      $region44: #{resnet_forward.13} parent=39 // pred_fallthru
        _
    $region40: #{resnet_forward.13} parent=5 // pred_fallthru
      _
  $region6: #{resnet_forward.13} parent=0 // loop_footer
    %s13 = sadd.s32 1, %s9
  $region7: #{resnet_forward.13} parent=0 // loop_footer_branch
    %8 = sbr.rel target = $region3
  $region8: #{resnet_forward.13} parent=0 // loop_exit
    _

// kernel: resnet_forward.14
$region0: #{resnet_forward.14}
  #allocation0 [shape = 'u32[]', space=smem, size = 0x4, offset = 0x4, fixed_abs, tag = 'smem constant byte address 0x4 - core index']
  #allocation1 [shape = 'u32[144,128]{1,0:T(1,128)}', space=vmem, size = 0x12000, scoped, tag = 'internal scratch']
  %s0 = inlined_call_operand.vmem [shape: bf16[512,72], index: 0, kind: input, shape index: {}]
  %s1 = inlined_call_operand.vmem [shape: bf16[72,128], index: 1, kind: input, shape index: {}]
  %s2 = inlined_call_operand.vmem [shape: f32[1,128], index: 2, kind: input, shape index: {}]
  %s3 = inlined_call_operand.vmem [shape: f32[512,128], index: 3, kind: input, shape index: {}]
  %s4 = inlined_call_operand.vmem [shape: f32[512,128], index: 4, kind: output, shape index: {}]
  %s5 = sld [smem:[#allocation0]]
  $region49: #{resnet_forward.14} parent=0
    _
  %s7 = ssub.s32 1, %s5
  %s8 = scalar_select 0, %s7, %s5
  loop: start=0, step=1, limit=4
  $region2: #{resnet_forward.14} parent=0 // loop_pre_header
    _
  $region3: #{resnet_forward.14} parent=0 // loop_header
    %s10 = sphi 0, %s14
    %p11 = scmp.ge.s32.totalorder %s10, 4
    %s20 = sphi 0, %s22
    %s23 = sphi 0, %s20
    %s24 = sphi 0, %s23
    %s40 = sphi 0, %s24
    %s44 = sphi 0, %s44
    %s46 = sphi 0, %s44
    %s47 = sphi 0, %s46
    %s61 = sphi 0, %s47
    %s65 = sphi 0, %s65
    %s67 = sphi 0, %s65
    %s68 = sphi 0, %s67
    %s82 = sphi 0, %s68
    %s88 = sphi 0, %s90
    %s91 = sphi 0, %s88
    %s92 = sphi 0, %s91
    %s108 = sphi 0, %s92
    %s114 = sphi 0, %s116
    %s117 = sphi 0, %s114
    %s118 = sphi 0, %s117
    %s134 = sphi 0, %s118
  $region4: #{resnet_forward.14} parent=0 // loop_header_branch
    %13 = sbr.rel (%p11) target = $region8
  $region5: #{resnet_forward.14} parent=0 // loop_body
    %s15 = ssub.s32 %s10, 1
    %s16 = ssub.s32 %s10, 2
    %s17 = sadd.s32 %s10, 1
    %s18 = ssub.s32 %s10, %s17
    %p19 = scmp.eq.s32.totalorder %s18, 0
    %s21 = sadd.s32 %s20, 1
    %s22 = scalar_select %p19, %s20, %s21
    %p25 = pneg %p19
    %p26 = scmp.eq.s32.totalorder %s10, 1
    %p27 = por %p25, %p26
    %p28 = scmp.ne.s32.totalorder %s20, %s23
    %p29 = scmp.eq.s32.totalorder %s10, 0
    %p30 = por %p28, %p29
    %p31 = scmp.ne.s32.totalorder %s20, %s23
    %p32 = scmp.eq.s32.totalorder %s15, 1
    %p33 = por %p31, %p32
    %p34 = scmp.ne.s32.totalorder %s23, %s24
    %p35 = scmp.eq.s32.totalorder %s15, 0
    %p36 = por %p34, %p35
    %p37 = scmp.ne.s32.totalorder %s23, %s24
    %p38 = scmp.eq.s32.totalorder %s16, 1
    %p39 = por %p37, %p38
    %p41 = scmp.ne.s32.totalorder %s24, %s40
    %p42 = scmp.eq.s32.totalorder %s16, 0
    %p43 = por %p41, %p42
    %s45 = sadd.s32 %s44, 1
    %p48 = scmp.eq.s32.totalorder %s10, 1
    %p49 = scmp.ne.s32.totalorder %s44, %s46
    %p50 = scmp.eq.s32.totalorder %s10, 0
    %p51 = por %p49, %p50
    %p52 = scmp.ne.s32.totalorder %s44, %s46
    %p53 = scmp.eq.s32.totalorder %s15, 1
    %p54 = por %p52, %p53
    %p55 = scmp.ne.s32.totalorder %s46, %s47
    %p56 = scmp.eq.s32.totalorder %s15, 0
    %p57 = por %p55, %p56
    %p58 = scmp.ne.s32.totalorder %s46, %s47
    %p59 = scmp.eq.s32.totalorder %s16, 1
    %p60 = por %p58, %p59
    %p62 = scmp.ne.s32.totalorder %s47, %s61
    %p63 = scmp.eq.s32.totalorder %s16, 0
    %p64 = por %p62, %p63
    %s66 = sadd.s32 %s65, 1
    %p69 = scmp.eq.s32.totalorder %s10, 1
    %p70 = scmp.ne.s32.totalorder %s65, %s67
    %p71 = scmp.eq.s32.totalorder %s10, 0
    %p72 = por %p70, %p71
    %p73 = scmp.ne.s32.totalorder %s65, %s67
    %p74 = scmp.eq.s32.totalorder %s15, 1
    %p75 = por %p73, %p74
    %p76 = scmp.ne.s32.totalorder %s67, %s68
    %p77 = scmp.eq.s32.totalorder %s15, 0
    %p78 = por %p76, %p77
    %p79 = scmp.ne.s32.totalorder %s67, %s68
    %p80 = scmp.eq.s32.totalorder %s16, 1
    %p81 = por %p79, %p80
    %p83 = scmp.ne.s32.totalorder %s68, %s82
    %p84 = scmp.eq.s32.totalorder %s16, 0
    %p85 = por %p83, %p84
    %s86 = ssub.s32 %s10, %s17
    %p87 = scmp.eq.s32.totalorder %s86, 0
    %s89 = sadd.s32 %s88, 1
    %s90 = scalar_select %p87, %s88, %s89
    %p93 = pneg %p87
    %p94 = scmp.eq.s32.totalorder %s10, 1
    %p95 = por %p93, %p94
    %p96 = scmp.ne.s32.totalorder %s88, %s91
    %p97 = scmp.eq.s32.totalorder %s10, 0
    %p98 = por %p96, %p97
    %p99 = scmp.ne.s32.totalorder %s88, %s91
    %p100 = scmp.eq.s32.totalorder %s15, 1
    %p101 = por %p99, %p100
    %p102 = scmp.ne.s32.totalorder %s91, %s92
    %p103 = scmp.eq.s32.totalorder %s15, 0
    %p104 = por %p102, %p103
    %p105 = scmp.ne.s32.totalorder %s91, %s92
    %p106 = scmp.eq.s32.totalorder %s16, 1
    %p107 = por %p105, %p106
    %p109 = scmp.ne.s32.totalorder %s92, %s108
    %p110 = scmp.eq.s32.totalorder %s16, 0
    %p111 = por %p109, %p110
    %s112 = ssub.s32 %s10, %s17
    %p113 = scmp.eq.s32.totalorder %s112, 0
    %s115 = sadd.s32 %s114, 1
    %s116 = scalar_select %p113, %s114, %s115
    %p119 = pneg %p113
    %p120 = scmp.eq.s32.totalorder %s10, 1
    %p121 = por %p119, %p120
    %p122 = scmp.ne.s32.totalorder %s114, %s117
    %p123 = scmp.eq.s32.totalorder %s10, 0
    %p124 = por %p122, %p123
    %p125 = scmp.ne.s32.totalorder %s114, %s117
    %p126 = scmp.eq.s32.totalorder %s15, 1
    %p127 = por %p125, %p126
    %p128 = scmp.ne.s32.totalorder %s117, %s118
    %p129 = scmp.eq.s32.totalorder %s15, 0
    %p130 = por %p128, %p129
    %p131 = scmp.ne.s32.totalorder %s117, %s118
    %p132 = scmp.eq.s32.totalorder %s16, 1
    %p133 = por %p131, %p132
    %p135 = scmp.ne.s32.totalorder %s118, %s134
    %p136 = scmp.eq.s32.totalorder %s16, 0
    %p137 = por %p135, %p136
    %p138 = scmp.le.s32.totalorder 1, %s10
    %p139 = scmp.lt.s32.totalorder %s10, 3
    %p140 = pnand %p138, %p139
    %p141 = pneg %p140
    // Predicated region
    $region9: #{resnet_forward.14} parent=5 // pred_check
      _
    $region10: #{resnet_forward.14} parent=5 // pred_check_branch
      %143 = sbr.rel (%p140) target = $region12
    $region11: #{resnet_forward.14} parent=5 // pred_region
      %s144 = ssub.s32 %s10, 1
      // Predicated region
      $region13: #{resnet_forward.14} parent=11 // pred_check
        %p145 = pneg %p57
      $region14: #{resnet_forward.14} parent=11 // pred_check_branch
        %147 = sbr.rel (%p145) target = $region16
      $region15: #{resnet_forward.14} parent=11 // pred_region
        _
      $region16: #{resnet_forward.14} parent=11 // pred_fallthru
        _
      // Predicated region
      $region17: #{resnet_forward.14} parent=11 // pred_check
        %p148 = pneg %p78
      $region18: #{resnet_forward.14} parent=11 // pred_check_branch
        %150 = sbr.rel (%p148) target = $region20
      $region19: #{resnet_forward.14} parent=11 // pred_region
        _
      $region20: #{resnet_forward.14} parent=11 // pred_fallthru
        _
    $region12: #{resnet_forward.14} parent=5 // pred_fallthru
      _
    %p151 = scmp.lt.s32.totalorder %s10, 2
    // Predicated region
    $region21: #{resnet_forward.14} parent=5 // pred_check
      %p152 = pneg %p151
    $region22: #{resnet_forward.14} parent=5 // pred_check_branch
      %154 = sbr.rel (%p152) target = $region24
    $region23: #{resnet_forward.14} parent=5 // pred_region
      // Predicated region
      $region25: #{resnet_forward.14} parent=23 // pred_check
        %p155 = pneg %p30
      $region26: #{resnet_forward.14} parent=23 // pred_check_branch
        %157 = sbr.rel (%p155) target = $region28
      $region27: #{resnet_forward.14} parent=23 // pred_region
        %s158 = smul.u32 32, %s10
        %p159 = scmp.lt.s32.totalorder %s158, 63
        %s160 = scalar_select %p159, %s158, 63
        %s161 = smul.addr %s160, 4
        %s162 = scalar_lea.vmem %s0, %s161
        %s163 = smul.u32 32, %s10
      $region28: #{resnet_forward.14} parent=23 // pred_fallthru
        _
      // Predicated region
      $region29: #{resnet_forward.14} parent=23 // pred_check
        %p164 = pneg %p98
      $region30: #{resnet_forward.14} parent=23 // pred_check_branch
        %166 = sbr.rel (%p164) target = $region32
      $region31: #{resnet_forward.14} parent=23 // pred_region
        %s167 = smul.u32 32, %s10
        %p168 = scmp.lt.s32.totalorder %s167, 63
        %s169 = scalar_select %p168, %s167, 63
        %s170 = smul.addr %s169, 8
        %s171 = scalar_lea.vmem %s3, %s170
        %s172 = smul.u32 32, %s10
      $region32: #{resnet_forward.14} parent=23 // pred_fallthru
        _
    $region24: #{resnet_forward.14} parent=5 // pred_fallthru
      _
    %p173 = scmp.le.s32.totalorder 1, %s10
    %p174 = scmp.lt.s32.totalorder %s10, 3
    %p175 = pnand %p173, %p174
    %p176 = pneg %p175
    // Predicated region
    $region33: #{resnet_forward.14} parent=5 // pred_check
      _
    $region34: #{resnet_forward.14} parent=5 // pred_check_branch
      %178 = sbr.rel (%p175) target = $region36
    $region35: #{resnet_forward.14} parent=5 // pred_region
      %s179 = ssub.s32 %s10, 1
      %s180 = smul.u32 32, %s15
      %p181 = scmp.lt.s32.totalorder %s180, 63
      %s182 = scalar_select %p181, %s180, 63
      %s183 = smul.addr %s182, 4
      %s184 = scalar_lea.vmem %s0, %s183
      %p185 = pneg %p36
      %p186 = pneg %p33
      %p187 = pneg %p57
      %p188 = pneg %p54
      %p189 = pneg %p78
      %p190 = pneg %p75
      %s191 = smul.u32 32, %s15
      %p192 = scmp.lt.s32.totalorder %s191, 63
      %s193 = scalar_select %p192, %s191, 63
      %s194 = smul.addr %s193, 8
      %s195 = scalar_lea.vmem %s3, %s194
      %p196 = pneg %p104
      %p197 = pneg %p101
      %p198 = pneg %p130
      %p199 = pneg %p127
      %s200 = smul.u32 32, %s15
      %p201 = scmp.lt.s32.totalorder %s200, 63
      %s202 = scalar_select %p201, %s200, 63
      %s203 = smul.addr %s202, 8
      %s204 = scalar_lea.vmem %s4, %s203
      %s205 = smul.u32 32, %s15
      %p206 = scmp.lt.s32.totalorder %s205, 63
      %s207 = scalar_select %p206, %s205, 63
      %s208 = smul.addr %s207, 4
      %s209 = scalar_lea.vmem %s0, %s208
      %s210 = smul.u32 32, %s15
      %s211 = smul.u32 32, %s15
      %p212 = scmp.lt.s32.totalorder %s211, 63
      %s213 = scalar_select %p212, %s211, 63
      %s214 = smul.addr %s213, 8
      %s215 = scalar_lea.vmem %s3, %s214
      %s216 = smul.u32 32, %s15
      %s217 = smul.u32 32, %s15
      %p218 = scmp.lt.s32.totalorder %s217, 63
      %s219 = scalar_select %p218, %s217, 63
      %s220 = smul.addr %s219, 8
      %s221 = scalar_lea.vmem %s4, %s220
      %s222 = smul.u32 32, %s15
      %v224 = vld [vmem:[%s209] sm:$0xf]
      %v225 = vld [vmem:[%s209 + $0x4] sm:$0xf]
      %v226 = vld [vmem:[%s209 + $0x8] sm:$0xf]
      %v227 = vld [vmem:[%s209 + $0xc] sm:$0xf]
      %v228 = vld [vmem:[%s209 + $0x10] sm:$0xf]
      %v229 = vld [vmem:[%s209 + $0x14] sm:$0xf]
      %v230 = vld [vmem:[%s209 + $0x18] sm:$0xf]
      %v231 = vld [vmem:[%s209 + $0x1c] sm:$0xf]
      %v232 = vld [vmem:[%s209 + $0x20] sm:$0xf]
      %v233 = vld [vmem:[%s209 + $0x24] sm:$0xf]
      %v234 = vld [vmem:[%s209 + $0x28] sm:$0xf]
      %v235 = vld [vmem:[%s209 + $0x2c] sm:$0xf]
      %v236 = vld [vmem:[%s209 + $0x30] sm:$0xf]
      %v237 = vld [vmem:[%s209 + $0x34] sm:$0xf]
      %v238 = vld [vmem:[%s209 + $0x38] sm:$0xf]
      %v239 = vld [vmem:[%s209 + $0x3c] sm:$0xf]
      %v240 = vld [vmem:[%s209 + $0x40] sm:$0xf]
      %v241 = vld [vmem:[%s209 + $0x44] sm:$0xf]
      %v242 = vld [vmem:[%s209 + $0x48] sm:$0xf]
      %v243 = vld [vmem:[%s209 + $0x4c] sm:$0xf]
      %v244 = vld [vmem:[%s209 + $0x50] sm:$0xf]
      %v245 = vld [vmem:[%s209 + $0x54] sm:$0xf]
      %v246 = vld [vmem:[%s209 + $0x58] sm:$0xf]
      %v247 = vld [vmem:[%s209 + $0x5c] sm:$0xf]
      %v248 = vld [vmem:[%s209 + $0x60] sm:$0xf]
      %v249 = vld [vmem:[%s209 + $0x64] sm:$0xf]
      %v250 = vld [vmem:[%s209 + $0x68] sm:$0xf]
      %v251 = vld [vmem:[%s209 + $0x6c] sm:$0xf]
      %v252 = vld [vmem:[%s209 + $0x70] sm:$0xf]
      %v253 = vld [vmem:[%s209 + $0x74] sm:$0xf]
      %v254 = vld [vmem:[%s209 + $0x78] sm:$0xf]
      %v255 = vld [vmem:[%s209 + $0x7c] sm:$0xf]
      %v256 = vld [vmem:[%s1] sm:$0xf]
      %v257 = vld [vmem:[%s1 + $0x4] sm:$0xf]
      %v258 = vld [vmem:[%s1 + $0x8] sm:$0xf]
      %v259 = vld [vmem:[%s1 + $0xc] sm:$0xf]
      %v260 = vld [vmem:[%s1 + $0x10] sm:$0xf]
      %v261 = vld [vmem:[%s1 + $0x14] sm:$0xf]
      %v262 = vld [vmem:[%s1 + $0x18] sm:$0xf]
      %v263 = vld [vmem:[%s1 + $0x1c] sm:$0xf]
      %v264 = vld [vmem:[%s1 + $0x20] sm:$0xf]
      %v265 = vld [vmem:[%s2] sm:$0x1]
      %v267 = vlaneseq
      %v268 = vshrl.u32 %v267, 7
      %v269 = vsub.s32 0, %v268
      %v270 = vrot.slane %v265, %v269
      %v304 = vunpack.c.l.b16 %v224
      %v305 = vunpack.c.l.b16 %v225
      %v306 = vunpack.c.l.b16 %v226
      %v307 = vunpack.c.l.b16 %v227
      %v308 = vunpack.c.l.b16 %v228
      %v309 = vunpack.c.l.b16 %v229
      %v310 = vunpack.c.l.b16 %v230
      %v311 = vunpack.c.l.b16 %v231
      %v312 = vunpack.c.l.b16 %v232
      %v313 = vunpack.c.l.b16 %v233
      %v314 = vunpack.c.l.b16 %v234
      %v315 = vunpack.c.l.b16 %v235
      %v316 = vunpack.c.l.b16 %v236
      %v317 = vunpack.c.l.b16 %v237
      %v318 = vunpack.c.l.b16 %v238
      %v319 = vunpack.c.l.b16 %v239
      %v320 = vunpack.c.l.b16 %v240
      %v321 = vunpack.c.l.b16 %v241
      %v322 = vunpack.c.l.b16 %v242
      %v323 = vunpack.c.l.b16 %v243
      %v324 = vunpack.c.l.b16 %v244
      %v325 = vunpack.c.l.b16 %v245
      %v326 = vunpack.c.l.b16 %v246
      %v327 = vunpack.c.l.b16 %v247
      %v328 = vunpack.c.l.b16 %v248
      %v329 = vunpack.c.l.b16 %v249
      %v330 = vunpack.c.l.b16 %v250
      %v331 = vunpack.c.l.b16 %v251
      %v332 = vunpack.c.l.b16 %v252
      %v333 = vunpack.c.l.b16 %v253
      %v334 = vunpack.c.l.b16 %v254
      %v335 = vunpack.c.l.b16 %v255
      %v336 = vpack.c.b16 %v305, %v304
      %v337 = vpack.c.b16 %v307, %v306
      %v338 = vpack.c.b16 %v309, %v308
      %v339 = vpack.c.b16 %v311, %v310
      %v340 = vpack.c.b16 %v313, %v312
      %v341 = vpack.c.b16 %v315, %v314
      %v342 = vpack.c.b16 %v317, %v316
      %v343 = vpack.c.b16 %v319, %v318
      %v344 = vpack.c.b16 %v321, %v320
      %v345 = vpack.c.b16 %v323, %v322
      %v346 = vpack.c.b16 %v325, %v324
      %v347 = vpack.c.b16 %v327, %v326
      %v348 = vpack.c.b16 %v329, %v328
      %v349 = vpack.c.b16 %v331, %v330
      %v350 = vpack.c.b16 %v333, %v332
      %v351 = vpack.c.b16 %v335, %v334
      %v361 = vunpack.c.l.b16 %v256
      %v362 = vunpack.c.l.b16 %v257
      %v363 = vunpack.c.l.b16 %v258
      %v364 = vunpack.c.l.b16 %v259
      %v365 = vunpack.c.l.b16 %v260
      %v366 = vunpack.c.l.b16 %v261
      %v367 = vunpack.c.l.b16 %v262
      %v368 = vunpack.c.l.b16 %v263
      %v369 = vunpack.c.l.b16 %v264
      %v370 = vpack.c.b16 %v362, %v361
      %v371 = vpack.c.b16 %v364, %v363
      %v372 = vpack.c.b16 %v366, %v365
      %v373 = vpack.c.b16 %v368, %v367
      %v374 = vpack.c.b16 %v369, %v369
      %vm379 = vcmask 588800
      %v381 = vsel %vm379, %v336, 0
      %v384 = vsel %vm379, %v337, 0
      %v387 = vsel %vm379, %v338, 0
      %v390 = vsel %vm379, %v339, 0
      %v393 = vsel %vm379, %v340, 0
      %v396 = vsel %vm379, %v341, 0
      %v399 = vsel %vm379, %v342, 0
      %v402 = vsel %vm379, %v343, 0
      %v405 = vsel %vm379, %v344, 0
      %v408 = vsel %vm379, %v345, 0
      %v411 = vsel %vm379, %v346, 0
      %v414 = vsel %vm379, %v347, 0
      %v417 = vsel %vm379, %v348, 0
      %v420 = vsel %vm379, %v349, 0
      %v423 = vsel %vm379, %v350, 0
      %v426 = vsel %vm379, %v351, 0
      %vm428 = vcmask 1043456
      %v430 = vsel %vm428, %v374, 0
      %432 = vmatprep.subr.bf16.mxu0 0
      %433 = vmatpush1.bf16.msra.mxu0 0
      %434 = vmatprep.subr.bf16.mxu0 0
      %435 = vmatpush1.bf16.msra.mxu0 0
      %436 = vmatprep.subr.bf16.mxu0 0
      %437 = vmatpush1.bf16.msra.mxu0 0
      %438 = vmatprep.subr.bf16.mxu0 0
      %439 = vmatpush1.bf16.msra.mxu0 %v430
      %440 = vmatprep.subr.bf16.mxu0 0
      %441 = vmatpush1.bf16.msra.mxu0 %v373
      %442 = vmatprep.subr.bf16.mxu0 0
      %443 = vmatpush1.bf16.msra.mxu0 %v372
      %444 = vmatprep.subr.bf16.mxu0 0
      %445 = vmatpush1.bf16.msra.mxu0 %v371
      %446 = vmatprep.subr.bf16.mxu0 0
      %447 = vmatpush1.bf16.msra.mxu0 %v370
      %448 = vmatprep.subr.bf16.mxu0 0
      %449 = vmatpush2.bf16.msra.mxu0 0
      %450 = vmatprep.subr.bf16.mxu0 0
      %451 = vmatpush2.bf16.msra.mxu0 0
      %452 = vmatprep.subr.bf16.mxu0 0
      %453 = vmatpush2.bf16.msra.mxu0 0
      %454 = vmatprep.subr.bf16.mxu0 0
      %455 = vmatpush2.bf16.msra.mxu0 0
      %456 = vmatprep.subr.bf16.mxu0 0
      %457 = vmatpush2.bf16.msra.mxu0 0
      %458 = vmatprep.subr.bf16.mxu0 0
      %459 = vmatpush2.bf16.msra.mxu0 0
      %460 = vmatprep.subr.bf16.mxu0 0
      %461 = vmatpush2.bf16.msra.mxu0 0
      %462 = vmatprep.subr.bf16.mxu0 0
      %463 = vmatpush2.bf16.msra.mxu0 0
      %464 = vmatprep.mubr.bf16.mxu0 0
      %465 = vmatmul.mubr.bf16.gmra.mxu0 %v381
      %v466 = vpop.f32.mrf.mxu0
      %v467 = vadd.f32 %v270, %v466
      %v468 = vpop.f32.mrf.mxu0
      %v469 = vpop.f32.mrf.mxu0
      %v470 = vadd.f32 %v270, %v469
      %v471 = vpop.f32.mrf.mxu0
      %472 = vmatprep.mubr.bf16.mxu0 0
      %473 = vmatmul.mubr.bf16.gmra.mxu0 %v384
      %v474 = vpop.f32.mrf.mxu0
      %v475 = vadd.f32 %v270, %v474
      %v476 = vpop.f32.mrf.mxu0
      %v477 = vpop.f32.mrf.mxu0
      %v478 = vadd.f32 %v270, %v477
      %v479 = vpop.f32.mrf.mxu0
      %480 = vmatprep.mubr.bf16.mxu0 0
      %481 = vmatmul.mubr.bf16.gmra.mxu0 %v387
      %v482 = vpop.f32.mrf.mxu0
      %v483 = vadd.f32 %v270, %v482
      %v484 = vpop.f32.mrf.mxu0
      %v485 = vpop.f32.mrf.mxu0
      %v486 = vadd.f32 %v270, %v485
      %v487 = vpop.f32.mrf.mxu0
      %488 = vmatprep.mubr.bf16.mxu0 0
      %489 = vmatmul.mubr.bf16.gmra.mxu0 %v390
      %v490 = vpop.f32.mrf.mxu0
      %v491 = vadd.f32 %v270, %v490
      %v492 = vpop.f32.mrf.mxu0
      %v493 = vpop.f32.mrf.mxu0
      %v494 = vadd.f32 %v270, %v493
      %v495 = vpop.f32.mrf.mxu0
      %496 = vmatprep.mubr.bf16.mxu0 0
      %497 = vmatmul.mubr.bf16.gmra.mxu0 %v393
      %v498 = vpop.f32.mrf.mxu0
      %v499 = vadd.f32 %v270, %v498
      %v500 = vpop.f32.mrf.mxu0
      %v501 = vpop.f32.mrf.mxu0
      %v502 = vadd.f32 %v270, %v501
      %v503 = vpop.f32.mrf.mxu0
      %504 = vmatprep.mubr.bf16.mxu0 0
      %505 = vmatmul.mubr.bf16.gmra.mxu0 %v396
      %v506 = vpop.f32.mrf.mxu0
      %v507 = vadd.f32 %v270, %v506
      %v508 = vpop.f32.mrf.mxu0
      %v509 = vpop.f32.mrf.mxu0
      %v510 = vadd.f32 %v270, %v509
      %v511 = vpop.f32.mrf.mxu0
      %512 = vmatprep.mubr.bf16.mxu0 0
      %513 = vmatmul.mubr.bf16.gmra.mxu0 %v399
      %v514 = vpop.f32.mrf.mxu0
      %v515 = vadd.f32 %v270, %v514
      %v516 = vpop.f32.mrf.mxu0
      %v517 = vpop.f32.mrf.mxu0
      %v518 = vadd.f32 %v270, %v517
      %v519 = vpop.f32.mrf.mxu0
      %520 = vmatprep.mubr.bf16.mxu0 0
      %521 = vmatmul.mubr.bf16.gmra.mxu0 %v402
      %v522 = vpop.f32.mrf.mxu0
      %v523 = vadd.f32 %v270, %v522
      %v524 = vpop.f32.mrf.mxu0
      %v525 = vpop.f32.mrf.mxu0
      %v526 = vadd.f32 %v270, %v525
      %v527 = vpop.f32.mrf.mxu0
      %528 = vmatprep.mubr.bf16.mxu0 0
      %529 = vmatmul.mubr.bf16.gmra.mxu0 %v405
      %v530 = vpop.f32.mrf.mxu0
      %v531 = vadd.f32 %v270, %v530
      %v532 = vpop.f32.mrf.mxu0
      %v533 = vpop.f32.mrf.mxu0
      %v534 = vadd.f32 %v270, %v533
      %v535 = vpop.f32.mrf.mxu0
      %536 = vmatprep.mubr.bf16.mxu0 0
      %537 = vmatmul.mubr.bf16.gmra.mxu0 %v408
      %v538 = vpop.f32.mrf.mxu0
      %v539 = vadd.f32 %v270, %v538
      %v540 = vpop.f32.mrf.mxu0
      %v541 = vpop.f32.mrf.mxu0
      %v542 = vadd.f32 %v270, %v541
      %v543 = vpop.f32.mrf.mxu0
      %544 = vmatprep.mubr.bf16.mxu0 0
      %545 = vmatmul.mubr.bf16.gmra.mxu0 %v411
      %v546 = vpop.f32.mrf.mxu0
      %v547 = vadd.f32 %v270, %v546
      %v548 = vpop.f32.mrf.mxu0
      %v549 = vpop.f32.mrf.mxu0
      %v550 = vadd.f32 %v270, %v549
      %v551 = vpop.f32.mrf.mxu0
      %552 = vmatprep.mubr.bf16.mxu0 0
      %553 = vmatmul.mubr.bf16.gmra.mxu0 %v414
      %v554 = vpop.f32.mrf.mxu0
      %v555 = vadd.f32 %v270, %v554
      %v556 = vpop.f32.mrf.mxu0
      %v557 = vpop.f32.mrf.mxu0
      %v558 = vadd.f32 %v270, %v557
      %v559 = vpop.f32.mrf.mxu0
      %560 = vmatprep.mubr.bf16.mxu0 0
      %561 = vmatmul.mubr.bf16.gmra.mxu0 %v417
      %v562 = vpop.f32.mrf.mxu0
      %v563 = vadd.f32 %v270, %v562
      %v564 = vpop.f32.mrf.mxu0
      %v565 = vpop.f32.mrf.mxu0
      %v566 = vadd.f32 %v270, %v565
      %v567 = vpop.f32.mrf.mxu0
      %568 = vmatprep.mubr.bf16.mxu0 0
      %569 = vmatmul.mubr.bf16.gmra.mxu0 %v420
      %v570 = vpop.f32.mrf.mxu0
      %v571 = vadd.f32 %v270, %v570
      %v572 = vpop.f32.mrf.mxu0
      %v573 = vpop.f32.mrf.mxu0
      %v574 = vadd.f32 %v270, %v573
      %v575 = vpop.f32.mrf.mxu0
      %576 = vmatprep.mubr.bf16.mxu0 0
      %577 = vmatmul.mubr.bf16.gmra.mxu0 %v423
      %v578 = vpop.f32.mrf.mxu0
      %v579 = vadd.f32 %v270, %v578
      %v580 = vpop.f32.mrf.mxu0
      %v581 = vpop.f32.mrf.mxu0
      %v582 = vadd.f32 %v270, %v581
      %v583 = vpop.f32.mrf.mxu0
      %584 = vmatprep.mubr.bf16.mxu0 0
      %585 = vmatmul.mubr.bf16.gmra.mxu0 %v426
      %v586 = vpop.f32.mrf.mxu0
      %v587 = vadd.f32 %v270, %v586
      %v588 = vpop.f32.mrf.mxu0
      %v589 = vpop.f32.mrf.mxu0
      %v590 = vadd.f32 %v270, %v589
      %v591 = vpop.f32.mrf.mxu0
      %592 = vdwg.mxu0
      %v593 = vld [vmem:[%s215] sm:$0xff]
      %v594 = vld [vmem:[%s215 + $0x8] sm:$0xff]
      %v595 = vld [vmem:[%s215 + $0x10] sm:$0xff]
      %v596 = vld [vmem:[%s215 + $0x18] sm:$0xff]
      %v597 = vld [vmem:[%s215 + $0x20] sm:$0xff]
      %v598 = vld [vmem:[%s215 + $0x28] sm:$0xff]
      %v599 = vld [vmem:[%s215 + $0x30] sm:$0xff]
      %v600 = vld [vmem:[%s215 + $0x38] sm:$0xff]
      %v601 = vld [vmem:[%s215 + $0x40] sm:$0xff]
      %v602 = vld [vmem:[%s215 + $0x48] sm:$0xff]
      %v603 = vld [vmem:[%s215 + $0x50] sm:$0xff]
      %v604 = vld [vmem:[%s215 + $0x58] sm:$0xff]
      %v605 = vld [vmem:[%s215 + $0x60] sm:$0xff]
      %v606 = vld [vmem:[%s215 + $0x68] sm:$0xff]
      %v607 = vld [vmem:[%s215 + $0x70] sm:$0xff]
      %v608 = vld [vmem:[%s215 + $0x78] sm:$0xff]
      %v609 = vld [vmem:[%s215 + $0x80] sm:$0xff]
      %v610 = vld [vmem:[%s215 + $0x88] sm:$0xff]
      %v611 = vld [vmem:[%s215 + $0x90] sm:$0xff]
      %v612 = vld [vmem:[%s215 + $0x98] sm:$0xff]
      %v613 = vld [vmem:[%s215 + $0xa0] sm:$0xff]
      %v614 = vld [vmem:[%s215 + $0xa8] sm:$0xff]
      %v615 = vld [vmem:[%s215 + $0xb0] sm:$0xff]
      %v616 = vld [vmem:[%s215 + $0xb8] sm:$0xff]
      %v617 = vld [vmem:[%s215 + $0xc0] sm:$0xff]
      %v618 = vld [vmem:[%s215 + $0xc8] sm:$0xff]
      %v619 = vld [vmem:[%s215 + $0xd0] sm:$0xff]
      %v620 = vld [vmem:[%s215 + $0xd8] sm:$0xff]
      %v621 = vld [vmem:[%s215 + $0xe0] sm:$0xff]
      %v622 = vld [vmem:[%s215 + $0xe8] sm:$0xff]
      %v623 = vld [vmem:[%s215 + $0xf0] sm:$0xff]
      %v624 = vld [vmem:[%s215 + $0xf8] sm:$0xff]
      %v625 = vadd.f32 %v467, %v593
      %v626 = vadd.f32 %v470, %v594
      %v627 = vadd.f32 %v475, %v595
      %v628 = vadd.f32 %v478, %v596
      %v629 = vadd.f32 %v483, %v597
      %v630 = vadd.f32 %v486, %v598
      %v631 = vadd.f32 %v491, %v599
      %v632 = vadd.f32 %v494, %v600
      %v633 = vadd.f32 %v499, %v601
      %v634 = vadd.f32 %v502, %v602
      %v635 = vadd.f32 %v507, %v603
      %v636 = vadd.f32 %v510, %v604
      %v637 = vadd.f32 %v515, %v605
      %v638 = vadd.f32 %v518, %v606
      %v639 = vadd.f32 %v523, %v607
      %v640 = vadd.f32 %v526, %v608
      %v641 = vadd.f32 %v531, %v609
      %v642 = vadd.f32 %v534, %v610
      %v643 = vadd.f32 %v539, %v611
      %v644 = vadd.f32 %v542, %v612
      %v645 = vadd.f32 %v547, %v613
      %v646 = vadd.f32 %v550, %v614
      %v647 = vadd.f32 %v555, %v615
      %v648 = vadd.f32 %v558, %v616
      %v649 = vadd.f32 %v563, %v617
      %v650 = vadd.f32 %v566, %v618
      %v651 = vadd.f32 %v571, %v619
      %v652 = vadd.f32 %v574, %v620
      %v653 = vadd.f32 %v579, %v621
      %v654 = vadd.f32 %v582, %v622
      %v655 = vadd.f32 %v587, %v623
      %v656 = vadd.f32 %v590, %v624
      %v657 = vmax.f32 %v625, 0.0
      %v658 = vmax.f32 %v626, 0.0
      %v659 = vmax.f32 %v627, 0.0
      %v660 = vmax.f32 %v628, 0.0
      %v661 = vmax.f32 %v629, 0.0
      %v662 = vmax.f32 %v630, 0.0
      %v663 = vmax.f32 %v631, 0.0
      %v664 = vmax.f32 %v632, 0.0
      %v665 = vmax.f32 %v633, 0.0
      %v666 = vmax.f32 %v634, 0.0
      %v667 = vmax.f32 %v635, 0.0
      %v668 = vmax.f32 %v636, 0.0
      %v669 = vmax.f32 %v637, 0.0
      %v670 = vmax.f32 %v638, 0.0
      %v671 = vmax.f32 %v639, 0.0
      %v672 = vmax.f32 %v640, 0.0
      %v673 = vmax.f32 %v641, 0.0
      %v674 = vmax.f32 %v642, 0.0
      %v675 = vmax.f32 %v643, 0.0
      %v676 = vmax.f32 %v644, 0.0
      %v677 = vmax.f32 %v645, 0.0
      %v678 = vmax.f32 %v646, 0.0
      %v679 = vmax.f32 %v647, 0.0
      %v680 = vmax.f32 %v648, 0.0
      %v681 = vmax.f32 %v649, 0.0
      %v682 = vmax.f32 %v650, 0.0
      %v683 = vmax.f32 %v651, 0.0
      %v684 = vmax.f32 %v652, 0.0
      %v685 = vmax.f32 %v653, 0.0
      %v686 = vmax.f32 %v654, 0.0
      %v687 = vmax.f32 %v655, 0.0
      %v688 = vmax.f32 %v656, 0.0
      %689 = vst [vmem:[%s221] sm:$0xff] %v657
      %690 = vst [vmem:[%s221 + $0x8] sm:$0xff] %v658
      %691 = vst [vmem:[%s221 + $0x10] sm:$0xff] %v659
      %692 = vst [vmem:[%s221 + $0x18] sm:$0xff] %v660
      %693 = vst [vmem:[%s221 + $0x20] sm:$0xff] %v661
      %694 = vst [vmem:[%s221 + $0x28] sm:$0xff] %v662
      %695 = vst [vmem:[%s221 + $0x30] sm:$0xff] %v663
      %696 = vst [vmem:[%s221 + $0x38] sm:$0xff] %v664
      %697 = vst [vmem:[%s221 + $0x40] sm:$0xff] %v665
      %698 = vst [vmem:[%s221 + $0x48] sm:$0xff] %v666
      %699 = vst [vmem:[%s221 + $0x50] sm:$0xff] %v667
      %700 = vst [vmem:[%s221 + $0x58] sm:$0xff] %v668
      %701 = vst [vmem:[%s221 + $0x60] sm:$0xff] %v669
      %702 = vst [vmem:[%s221 + $0x68] sm:$0xff] %v670
      %703 = vst [vmem:[%s221 + $0x70] sm:$0xff] %v671
      %704 = vst [vmem:[%s221 + $0x78] sm:$0xff] %v672
      %705 = vst [vmem:[%s221 + $0x80] sm:$0xff] %v673
      %706 = vst [vmem:[%s221 + $0x88] sm:$0xff] %v674
      %707 = vst [vmem:[%s221 + $0x90] sm:$0xff] %v675
      %708 = vst [vmem:[%s221 + $0x98] sm:$0xff] %v676
      %709 = vst [vmem:[%s221 + $0xa0] sm:$0xff] %v677
      %710 = vst [vmem:[%s221 + $0xa8] sm:$0xff] %v678
      %711 = vst [vmem:[%s221 + $0xb0] sm:$0xff] %v679
      %712 = vst [vmem:[%s221 + $0xb8] sm:$0xff] %v680
      %713 = vst [vmem:[%s221 + $0xc0] sm:$0xff] %v681
      %714 = vst [vmem:[%s221 + $0xc8] sm:$0xff] %v682
      %715 = vst [vmem:[%s221 + $0xd0] sm:$0xff] %v683
      %716 = vst [vmem:[%s221 + $0xd8] sm:$0xff] %v684
      %717 = vst [vmem:[%s221 + $0xe0] sm:$0xff] %v685
      %718 = vst [vmem:[%s221 + $0xe8] sm:$0xff] %v686
      %719 = vst [vmem:[%s221 + $0xf0] sm:$0xff] %v687
      %720 = vst [vmem:[%s221 + $0xf8] sm:$0xff] %v688
      %s721 = smul.u32 32, %s15
      %p722 = scmp.lt.s32.totalorder %s721, 63
      %s723 = scalar_select %p722, %s721, 63
      %s724 = smul.addr %s723, 8
      %s725 = scalar_lea.vmem %s4, %s724
      // Predicated region
      $region37: #{resnet_forward.14} parent=35 // pred_check
        %p726 = pneg %p127
      $region38: #{resnet_forward.14} parent=35 // pred_check_branch
        %728 = sbr.rel (%p726) target = $region40
      $region39: #{resnet_forward.14} parent=35 // pred_region
        %s729 = smul.u32 32, %s15
      $region40: #{resnet_forward.14} parent=35 // pred_fallthru
        _
    $region36: #{resnet_forward.14} parent=5 // pred_fallthru
      _
    %p730 = scmp.le.s32.totalorder 2, %s10
    // Predicated region
    $region41: #{resnet_forward.14} parent=5 // pred_check
      %p731 = pneg %p730
    $region42: #{resnet_forward.14} parent=5 // pred_check_branch
      %733 = sbr.rel (%p731) target = $region44
    $region43: #{resnet_forward.14} parent=5 // pred_region
      %s734 = ssub.s32 %s10, 2
      // Predicated region
      $region45: #{resnet_forward.14} parent=43 // pred_check
        %p735 = pneg %p133
      $region46: #{resnet_forward.14} parent=43 // pred_check_branch
        %737 = sbr.rel (%p735) target = $region48
      $region47: #{resnet_forward.14} parent=43 // pred_region
        %s738 = smul.u32 32, %s16
        %p739 = scmp.lt.s32.totalorder %s738, 63
        %s740 = scalar_select %p739, %s738, 63
        %s741 = smul.addr %s740, 8
        %s742 = scalar_lea.vmem %s4, %s741
      $region48: #{resnet_forward.14} parent=43 // pred_fallthru
        _
    $region44: #{resnet_forward.14} parent=5 // pred_fallthru
      _
  $region6: #{resnet_forward.14} parent=0 // loop_footer
    %s14 = sadd.s32 1, %s10
  $region7: #{resnet_forward.14} parent=0 // loop_footer_branch
    %9 = sbr.rel target = $region3
  $region8: #{resnet_forward.14} parent=0 // loop_exit
    _

// kernel: resnet_forward.15
$region0: #{resnet_forward.15}
  #allocation0 [shape = 'u32[]', space=smem, size = 0x4, offset = 0x4, fixed_abs, tag = 'smem constant byte address 0x4 - core index']
  #allocation1 [shape = 'u32[144,128]{1,0:T(1,128)}', space=vmem, size = 0x12000, scoped, tag = 'internal scratch']
  %s0 = inlined_call_operand.vmem [shape: bf16[128,72], index: 0, kind: input, shape index: {}]
  %s1 = inlined_call_operand.vmem [shape: bf16[72,128], index: 1, kind: input, shape index: {}]
  %s2 = inlined_call_operand.vmem [shape: f32[1,128], index: 2, kind: input, shape index: {}]
  %s3 = inlined_call_operand.vmem [shape: f32[128,128], index: 3, kind: output, shape index: {}]
  %s4 = sld [smem:[#allocation0]]
  $region22: #{resnet_forward.15} parent=0
    _
  %s6 = ssub.s32 1, %s4
  %s7 = scalar_select 0, %s6, %s4
  // Predicated region
  $region2: #{resnet_forward.15} parent=0 // pred_check
    _
  $region3: #{resnet_forward.15} parent=0 // pred_check_branch
    %9 = sbr.rel (0) target = $region5
  $region4: #{resnet_forward.15} parent=0 // pred_region
    _
  $region5: #{resnet_forward.15} parent=0 // pred_fallthru
    _
  // Predicated region
  $region6: #{resnet_forward.15} parent=0 // pred_check
    _
  $region7: #{resnet_forward.15} parent=0 // pred_check_branch
    %11 = sbr.rel (0) target = $region9
  $region8: #{resnet_forward.15} parent=0 // pred_region
    _
  $region9: #{resnet_forward.15} parent=0 // pred_fallthru
    _
  // Predicated region
  $region10: #{resnet_forward.15} parent=0 // pred_check
    _
  $region11: #{resnet_forward.15} parent=0 // pred_check_branch
    %13 = sbr.rel (0) target = $region13
  $region12: #{resnet_forward.15} parent=0 // pred_region
    _
  $region13: #{resnet_forward.15} parent=0 // pred_fallthru
    _
  %v15 = vld [vmem:[%s0] sm:$0xf]
  %v16 = vld [vmem:[%s0 + $0x4] sm:$0xf]
  %v17 = vld [vmem:[%s0 + $0x8] sm:$0xf]
  %v18 = vld [vmem:[%s0 + $0xc] sm:$0xf]
  %v19 = vld [vmem:[%s0 + $0x10] sm:$0xf]
  %v20 = vld [vmem:[%s0 + $0x14] sm:$0xf]
  %v21 = vld [vmem:[%s0 + $0x18] sm:$0xf]
  %v22 = vld [vmem:[%s0 + $0x1c] sm:$0xf]
  %v23 = vld [vmem:[%s0 + $0x20] sm:$0xf]
  %v24 = vld [vmem:[%s0 + $0x24] sm:$0xf]
  %v25 = vld [vmem:[%s0 + $0x28] sm:$0xf]
  %v26 = vld [vmem:[%s0 + $0x2c] sm:$0xf]
  %v27 = vld [vmem:[%s0 + $0x30] sm:$0xf]
  %v28 = vld [vmem:[%s0 + $0x34] sm:$0xf]
  %v29 = vld [vmem:[%s0 + $0x38] sm:$0xf]
  %v30 = vld [vmem:[%s0 + $0x3c] sm:$0xf]
  %v31 = vld [vmem:[%s1] sm:$0xf]
  %v32 = vld [vmem:[%s1 + $0x4] sm:$0xf]
  %v33 = vld [vmem:[%s1 + $0x8] sm:$0xf]
  %v34 = vld [vmem:[%s1 + $0xc] sm:$0xf]
  %v35 = vld [vmem:[%s1 + $0x10] sm:$0xf]
  %v36 = vld [vmem:[%s1 + $0x14] sm:$0xf]
  %v37 = vld [vmem:[%s1 + $0x18] sm:$0xf]
  %v38 = vld [vmem:[%s1 + $0x1c] sm:$0xf]
  %v39 = vld [vmem:[%s1 + $0x20] sm:$0xf]
  %v40 = vld [vmem:[%s2] sm:$0x1]
  %v42 = vlaneseq
  %v43 = vshrl.u32 %v42, 7
  %v44 = vsub.s32 0, %v43
  %v45 = vrot.slane %v40, %v44
  %v63 = vunpack.c.l.b16 %v15
  %v64 = vunpack.c.l.b16 %v16
  %v65 = vunpack.c.l.b16 %v17
  %v66 = vunpack.c.l.b16 %v18
  %v67 = vunpack.c.l.b16 %v19
  %v68 = vunpack.c.l.b16 %v20
  %v69 = vunpack.c.l.b16 %v21
  %v70 = vunpack.c.l.b16 %v22
  %v71 = vunpack.c.l.b16 %v23
  %v72 = vunpack.c.l.b16 %v24
  %v73 = vunpack.c.l.b16 %v25
  %v74 = vunpack.c.l.b16 %v26
  %v75 = vunpack.c.l.b16 %v27
  %v76 = vunpack.c.l.b16 %v28
  %v77 = vunpack.c.l.b16 %v29
  %v78 = vunpack.c.l.b16 %v30
  %v79 = vpack.c.b16 %v64, %v63
  %v80 = vpack.c.b16 %v66, %v65
  %v81 = vpack.c.b16 %v68, %v67
  %v82 = vpack.c.b16 %v70, %v69
  %v83 = vpack.c.b16 %v72, %v71
  %v84 = vpack.c.b16 %v74, %v73
  %v85 = vpack.c.b16 %v76, %v75
  %v86 = vpack.c.b16 %v78, %v77
  %v96 = vunpack.c.l.b16 %v31
  %v97 = vunpack.c.l.b16 %v32
  %v98 = vunpack.c.l.b16 %v33
  %v99 = vunpack.c.l.b16 %v34
  %v100 = vunpack.c.l.b16 %v35
  %v101 = vunpack.c.l.b16 %v36
  %v102 = vunpack.c.l.b16 %v37
  %v103 = vunpack.c.l.b16 %v38
  %v104 = vunpack.c.l.b16 %v39
  %v105 = vpack.c.b16 %v97, %v96
  %v106 = vpack.c.b16 %v99, %v98
  %v107 = vpack.c.b16 %v101, %v100
  %v108 = vpack.c.b16 %v103, %v102
  %v109 = vpack.c.b16 %v104, %v104
  %vm114 = vcmask 588800
  %v116 = vsel %vm114, %v79, 0
  %v119 = vsel %vm114, %v80, 0
  %v122 = vsel %vm114, %v81, 0
  %v125 = vsel %vm114, %v82, 0
  %v128 = vsel %vm114, %v83, 0
  %v131 = vsel %vm114, %v84, 0
  %v134 = vsel %vm114, %v85, 0
  %v137 = vsel %vm114, %v86, 0
  %vm139 = vcmask 1043456
  %v141 = vsel %vm139, %v109, 0
  %143 = vmatprep.subr.bf16.mxu0 0
  %144 = vmatpush1.bf16.msra.mxu0 0
  %145 = vmatprep.subr.bf16.mxu0 0
  %146 = vmatpush1.bf16.msra.mxu0 0
  %147 = vmatprep.subr.bf16.mxu0 0
  %148 = vmatpush1.bf16.msra.mxu0 0
  %149 = vmatprep.subr.bf16.mxu0 0
  %150 = vmatpush1.bf16.msra.mxu0 %v141
  %151 = vmatprep.subr.bf16.mxu0 0
  %152 = vmatpush1.bf16.msra.mxu0 %v108
  %153 = vmatprep.subr.bf16.mxu0 0
  %154 = vmatpush1.bf16.msra.mxu0 %v107
  %155 = vmatprep.subr.bf16.mxu0 0
  %156 = vmatpush1.bf16.msra.mxu0 %v106
  %157 = vmatprep.subr.bf16.mxu0 0
  %158 = vmatpush1.bf16.msra.mxu0 %v105
  %159 = vmatprep.subr.bf16.mxu0 0
  %160 = vmatpush2.bf16.msra.mxu0 0
  %161 = vmatprep.subr.bf16.mxu0 0
  %162 = vmatpush2.bf16.msra.mxu0 0
  %163 = vmatprep.subr.bf16.mxu0 0
  %164 = vmatpush2.bf16.msra.mxu0 0
  %165 = vmatprep.subr.bf16.mxu0 0
  %166 = vmatpush2.bf16.msra.mxu0 0
  %167 = vmatprep.subr.bf16.mxu0 0
  %168 = vmatpush2.bf16.msra.mxu0 0
  %169 = vmatprep.subr.bf16.mxu0 0
  %170 = vmatpush2.bf16.msra.mxu0 0
  %171 = vmatprep.subr.bf16.mxu0 0
  %172 = vmatpush2.bf16.msra.mxu0 0
  %173 = vmatprep.subr.bf16.mxu0 0
  %174 = vmatpush2.bf16.msra.mxu0 0
  %175 = vmatprep.mubr.bf16.mxu0 0
  %176 = vmatmul.mubr.bf16.gmra.mxu0 %v116
  %v177 = vpop.f32.mrf.mxu0
  %v178 = vadd.f32 %v45, %v177
  %v179 = vpop.f32.mrf.mxu0
  %v180 = vpop.f32.mrf.mxu0
  %v181 = vadd.f32 %v45, %v180
  %v182 = vpop.f32.mrf.mxu0
  %183 = vmatprep.mubr.bf16.mxu0 0
  %184 = vmatmul.mubr.bf16.gmra.mxu0 %v119
  %v185 = vpop.f32.mrf.mxu0
  %v186 = vadd.f32 %v45, %v185
  %v187 = vpop.f32.mrf.mxu0
  %v188 = vpop.f32.mrf.mxu0
  %v189 = vadd.f32 %v45, %v188
  %v190 = vpop.f32.mrf.mxu0
  %191 = vmatprep.mubr.bf16.mxu0 0
  %192 = vmatmul.mubr.bf16.gmra.mxu0 %v122
  %v193 = vpop.f32.mrf.mxu0
  %v194 = vadd.f32 %v45, %v193
  %v195 = vpop.f32.mrf.mxu0
  %v196 = vpop.f32.mrf.mxu0
  %v197 = vadd.f32 %v45, %v196
  %v198 = vpop.f32.mrf.mxu0
  %199 = vmatprep.mubr.bf16.mxu0 0
  %200 = vmatmul.mubr.bf16.gmra.mxu0 %v125
  %v201 = vpop.f32.mrf.mxu0
  %v202 = vadd.f32 %v45, %v201
  %v203 = vpop.f32.mrf.mxu0
  %v204 = vpop.f32.mrf.mxu0
  %v205 = vadd.f32 %v45, %v204
  %v206 = vpop.f32.mrf.mxu0
  %207 = vmatprep.mubr.bf16.mxu0 0
  %208 = vmatmul.mubr.bf16.gmra.mxu0 %v128
  %v209 = vpop.f32.mrf.mxu0
  %v210 = vadd.f32 %v45, %v209
  %v211 = vpop.f32.mrf.mxu0
  %v212 = vpop.f32.mrf.mxu0
  %v213 = vadd.f32 %v45, %v212
  %v214 = vpop.f32.mrf.mxu0
  %215 = vmatprep.mubr.bf16.mxu0 0
  %216 = vmatmul.mubr.bf16.gmra.mxu0 %v131
  %v217 = vpop.f32.mrf.mxu0
  %v218 = vadd.f32 %v45, %v217
  %v219 = vpop.f32.mrf.mxu0
  %v220 = vpop.f32.mrf.mxu0
  %v221 = vadd.f32 %v45, %v220
  %v222 = vpop.f32.mrf.mxu0
  %223 = vmatprep.mubr.bf16.mxu0 0
  %224 = vmatmul.mubr.bf16.gmra.mxu0 %v134
  %v225 = vpop.f32.mrf.mxu0
  %v226 = vadd.f32 %v45, %v225
  %v227 = vpop.f32.mrf.mxu0
  %v228 = vpop.f32.mrf.mxu0
  %v229 = vadd.f32 %v45, %v228
  %v230 = vpop.f32.mrf.mxu0
  %231 = vmatprep.mubr.bf16.mxu0 0
  %232 = vmatmul.mubr.bf16.gmra.mxu0 %v137
  %v233 = vpop.f32.mrf.mxu0
  %v234 = vadd.f32 %v45, %v233
  %v235 = vpop.f32.mrf.mxu0
  %v236 = vpop.f32.mrf.mxu0
  %v237 = vadd.f32 %v45, %v236
  %v238 = vpop.f32.mrf.mxu0
  %239 = vdwg.mxu0
  %v240 = vmax.f32 %v178, 0.0
  %v241 = vmax.f32 %v181, 0.0
  %v242 = vmax.f32 %v186, 0.0
  %v243 = vmax.f32 %v189, 0.0
  %v244 = vmax.f32 %v194, 0.0
  %v245 = vmax.f32 %v197, 0.0
  %v246 = vmax.f32 %v202, 0.0
  %v247 = vmax.f32 %v205, 0.0
  %v248 = vmax.f32 %v210, 0.0
  %v249 = vmax.f32 %v213, 0.0
  %v250 = vmax.f32 %v218, 0.0
  %v251 = vmax.f32 %v221, 0.0
  %v252 = vmax.f32 %v226, 0.0
  %v253 = vmax.f32 %v229, 0.0
  %v254 = vmax.f32 %v234, 0.0
  %v255 = vmax.f32 %v237, 0.0
  %256 = vst [vmem:[%s3] sm:$0xff] %v240
  %257 = vst [vmem:[%s3 + $0x8] sm:$0xff] %v241
  %258 = vst [vmem:[%s3 + $0x10] sm:$0xff] %v242
  %259 = vst [vmem:[%s3 + $0x18] sm:$0xff] %v243
  %260 = vst [vmem:[%s3 + $0x20] sm:$0xff] %v244
  %261 = vst [vmem:[%s3 + $0x28] sm:$0xff] %v245
  %262 = vst [vmem:[%s3 + $0x30] sm:$0xff] %v246
  %263 = vst [vmem:[%s3 + $0x38] sm:$0xff] %v247
  %264 = vst [vmem:[%s3 + $0x40] sm:$0xff] %v248
  %265 = vst [vmem:[%s3 + $0x48] sm:$0xff] %v249
  %266 = vst [vmem:[%s3 + $0x50] sm:$0xff] %v250
  %267 = vst [vmem:[%s3 + $0x58] sm:$0xff] %v251
  %268 = vst [vmem:[%s3 + $0x60] sm:$0xff] %v252
  %269 = vst [vmem:[%s3 + $0x68] sm:$0xff] %v253
  %270 = vst [vmem:[%s3 + $0x70] sm:$0xff] %v254
  %271 = vst [vmem:[%s3 + $0x78] sm:$0xff] %v255
  // Predicated region
  $region14: #{resnet_forward.15} parent=0 // pred_check
    _
  $region15: #{resnet_forward.15} parent=0 // pred_check_branch
    %273 = sbr.rel (0) target = $region17
  $region16: #{resnet_forward.15} parent=0 // pred_region
    _
  $region17: #{resnet_forward.15} parent=0 // pred_fallthru
    _
  // Predicated region
  $region18: #{resnet_forward.15} parent=0 // pred_check
    _
  $region19: #{resnet_forward.15} parent=0 // pred_check_branch
    %275 = sbr.rel (0) target = $region21
  $region20: #{resnet_forward.15} parent=0 // pred_region
    _
  $region21: #{resnet_forward.15} parent=0 // pred_fallthru
    _

// kernel: resnet_forward.16
$region0: #{resnet_forward.16}
  #allocation0 [shape = 'u32[]', space=smem, size = 0x4, offset = 0x4, fixed_abs, tag = 'smem constant byte address 0x4 - core index']
  #allocation1 [shape = 'u32[144,128]{1,0:T(1,128)}', space=vmem, size = 0x12000, scoped, tag = 'internal scratch']
  %s0 = inlined_call_operand.vmem [shape: bf16[128,8], index: 0, kind: input, shape index: {}]
  %s1 = inlined_call_operand.vmem [shape: bf16[8,128], index: 1, kind: input, shape index: {}]
  %s2 = inlined_call_operand.vmem [shape: f32[1,128], index: 2, kind: input, shape index: {}]
  %s3 = inlined_call_operand.vmem [shape: f32[128,128], index: 3, kind: output, shape index: {}]
  %s4 = sld [smem:[#allocation0]]
  $region22: #{resnet_forward.16} parent=0
    _
  %s6 = ssub.s32 1, %s4
  %s7 = scalar_select 0, %s6, %s4
  // Predicated region
  $region2: #{resnet_forward.16} parent=0 // pred_check
    _
  $region3: #{resnet_forward.16} parent=0 // pred_check_branch
    %9 = sbr.rel (0) target = $region5
  $region4: #{resnet_forward.16} parent=0 // pred_region
    _
  $region5: #{resnet_forward.16} parent=0 // pred_fallthru
    _
  // Predicated region
  $region6: #{resnet_forward.16} parent=0 // pred_check
    _
  $region7: #{resnet_forward.16} parent=0 // pred_check_branch
    %11 = sbr.rel (0) target = $region9
  $region8: #{resnet_forward.16} parent=0 // pred_region
    _
  $region9: #{resnet_forward.16} parent=0 // pred_fallthru
    _
  // Predicated region
  $region10: #{resnet_forward.16} parent=0 // pred_check
    _
  $region11: #{resnet_forward.16} parent=0 // pred_check_branch
    %13 = sbr.rel (0) target = $region13
  $region12: #{resnet_forward.16} parent=0 // pred_region
    _
  $region13: #{resnet_forward.16} parent=0 // pred_fallthru
    _
  %v15 = vld [vmem:[%s0] sm:$0xf]
  %v16 = vld [vmem:[%s0 + $0x4] sm:$0xf]
  %v17 = vld [vmem:[%s0 + $0x8] sm:$0xf]
  %v18 = vld [vmem:[%s0 + $0xc] sm:$0xf]
  %v19 = vld [vmem:[%s0 + $0x10] sm:$0xf]
  %v20 = vld [vmem:[%s0 + $0x14] sm:$0xf]
  %v21 = vld [vmem:[%s0 + $0x18] sm:$0xf]
  %v22 = vld [vmem:[%s0 + $0x1c] sm:$0xf]
  %v23 = vld [vmem:[%s0 + $0x20] sm:$0xf]
  %v24 = vld [vmem:[%s0 + $0x24] sm:$0xf]
  %v25 = vld [vmem:[%s0 + $0x28] sm:$0xf]
  %v26 = vld [vmem:[%s0 + $0x2c] sm:$0xf]
  %v27 = vld [vmem:[%s0 + $0x30] sm:$0xf]
  %v28 = vld [vmem:[%s0 + $0x34] sm:$0xf]
  %v29 = vld [vmem:[%s0 + $0x38] sm:$0xf]
  %v30 = vld [vmem:[%s0 + $0x3c] sm:$0xf]
  %v31 = vld [vmem:[%s1] sm:$0xf]
  %v32 = vld [vmem:[%s2] sm:$0x1]
  %v34 = vlaneseq
  %v35 = vshrl.u32 %v34, 7
  %v36 = vsub.s32 0, %v35
  %v37 = vrot.slane %v32, %v36
  %v55 = vunpack.c.l.b16 %v15
  %v56 = vunpack.c.l.b16 %v16
  %v57 = vunpack.c.l.b16 %v17
  %v58 = vunpack.c.l.b16 %v18
  %v59 = vunpack.c.l.b16 %v19
  %v60 = vunpack.c.l.b16 %v20
  %v61 = vunpack.c.l.b16 %v21
  %v62 = vunpack.c.l.b16 %v22
  %v63 = vunpack.c.l.b16 %v23
  %v64 = vunpack.c.l.b16 %v24
  %v65 = vunpack.c.l.b16 %v25
  %v66 = vunpack.c.l.b16 %v26
  %v67 = vunpack.c.l.b16 %v27
  %v68 = vunpack.c.l.b16 %v28
  %v69 = vunpack.c.l.b16 %v29
  %v70 = vunpack.c.l.b16 %v30
  %v71 = vpack.c.b16 %v56, %v55
  %v72 = vpack.c.b16 %v58, %v57
  %v73 = vpack.c.b16 %v60, %v59
  %v74 = vpack.c.b16 %v62, %v61
  %v75 = vpack.c.b16 %v64, %v63
  %v76 = vpack.c.b16 %v66, %v65
  %v77 = vpack.c.b16 %v68, %v67
  %v78 = vpack.c.b16 %v70, %v69
  %vm79 = vcmask 64512
  %v81 = vsel %vm79, %v71, 0
  %v84 = vsel %vm79, %v72, 0
  %v87 = vsel %vm79, %v73, 0
  %v90 = vsel %vm79, %v74, 0
  %v93 = vsel %vm79, %v75, 0
  %v96 = vsel %vm79, %v76, 0
  %v99 = vsel %vm79, %v77, 0
  %v102 = vsel %vm79, %v78, 0
  %vm104 = vcmask 1043456
  %v106 = vsel %vm104, %v31, 0
  %108 = vmatprep.subr.bf16.mxu0 0
  %109 = vmatpush1.bf16.msra.mxu0 0
  %110 = vmatprep.subr.bf16.mxu0 0
  %111 = vmatpush1.bf16.msra.mxu0 0
  %112 = vmatprep.subr.bf16.mxu0 0
  %113 = vmatpush1.bf16.msra.mxu0 0
  %114 = vmatprep.subr.bf16.mxu0 0
  %115 = vmatpush1.bf16.msra.mxu0 0
  %116 = vmatprep.subr.bf16.mxu0 0
  %117 = vmatpush1.bf16.msra.mxu0 0
  %118 = vmatprep.subr.bf16.mxu0 0
  %119 = vmatpush1.bf16.msra.mxu0 0
  %120 = vmatprep.subr.bf16.mxu0 0
  %121 = vmatpush1.bf16.msra.mxu0 0
  %122 = vmatprep.subr.bf16.mxu0 0
  %123 = vmatpush1.bf16.msra.mxu0 %v106
  %124 = vmatprep.subr.bf16.mxu0 0
  %125 = vmatpush2.bf16.msra.mxu0 0
  %126 = vmatprep.subr.bf16.mxu0 0
  %127 = vmatpush2.bf16.msra.mxu0 0
  %128 = vmatprep.subr.bf16.mxu0 0
  %129 = vmatpush2.bf16.msra.mxu0 0
  %130 = vmatprep.subr.bf16.mxu0 0
  %131 = vmatpush2.bf16.msra.mxu0 0
  %132 = vmatprep.subr.bf16.mxu0 0
  %133 = vmatpush2.bf16.msra.mxu0 0
  %134 = vmatprep.subr.bf16.mxu0 0
  %135 = vmatpush2.bf16.msra.mxu0 0
  %136 = vmatprep.subr.bf16.mxu0 0
  %137 = vmatpush2.bf16.msra.mxu0 0
  %138 = vmatprep.subr.bf16.mxu0 0
  %139 = vmatpush2.bf16.msra.mxu0 0
  %140 = vmatprep.mubr.bf16.mxu0 0
  %141 = vmatmul.mubr.bf16.gmra.mxu0 %v81
  %v142 = vpop.f32.mrf.mxu0
  %v143 = vadd.f32 %v37, %v142
  %v144 = vpop.f32.mrf.mxu0
  %v145 = vpop.f32.mrf.mxu0
  %v146 = vadd.f32 %v37, %v145
  %v147 = vpop.f32.mrf.mxu0
  %148 = vmatprep.mubr.bf16.mxu0 0
  %149 = vmatmul.mubr.bf16.gmra.mxu0 %v84
  %v150 = vpop.f32.mrf.mxu0
  %v151 = vadd.f32 %v37, %v150
  %v152 = vpop.f32.mrf.mxu0
  %v153 = vpop.f32.mrf.mxu0
  %v154 = vadd.f32 %v37, %v153
  %v155 = vpop.f32.mrf.mxu0
  %156 = vmatprep.mubr.bf16.mxu0 0
  %157 = vmatmul.mubr.bf16.gmra.mxu0 %v87
  %v158 = vpop.f32.mrf.mxu0
  %v159 = vadd.f32 %v37, %v158
  %v160 = vpop.f32.mrf.mxu0
  %v161 = vpop.f32.mrf.mxu0
  %v162 = vadd.f32 %v37, %v161
  %v163 = vpop.f32.mrf.mxu0
  %164 = vmatprep.mubr.bf16.mxu0 0
  %165 = vmatmul.mubr.bf16.gmra.mxu0 %v90
  %v166 = vpop.f32.mrf.mxu0
  %v167 = vadd.f32 %v37, %v166
  %v168 = vpop.f32.mrf.mxu0
  %v169 = vpop.f32.mrf.mxu0
  %v170 = vadd.f32 %v37, %v169
  %v171 = vpop.f32.mrf.mxu0
  %172 = vmatprep.mubr.bf16.mxu0 0
  %173 = vmatmul.mubr.bf16.gmra.mxu0 %v93
  %v174 = vpop.f32.mrf.mxu0
  %v175 = vadd.f32 %v37, %v174
  %v176 = vpop.f32.mrf.mxu0
  %v177 = vpop.f32.mrf.mxu0
  %v178 = vadd.f32 %v37, %v177
  %v179 = vpop.f32.mrf.mxu0
  %180 = vmatprep.mubr.bf16.mxu0 0
  %181 = vmatmul.mubr.bf16.gmra.mxu0 %v96
  %v182 = vpop.f32.mrf.mxu0
  %v183 = vadd.f32 %v37, %v182
  %v184 = vpop.f32.mrf.mxu0
  %v185 = vpop.f32.mrf.mxu0
  %v186 = vadd.f32 %v37, %v185
  %v187 = vpop.f32.mrf.mxu0
  %188 = vmatprep.mubr.bf16.mxu0 0
  %189 = vmatmul.mubr.bf16.gmra.mxu0 %v99
  %v190 = vpop.f32.mrf.mxu0
  %v191 = vadd.f32 %v37, %v190
  %v192 = vpop.f32.mrf.mxu0
  %v193 = vpop.f32.mrf.mxu0
  %v194 = vadd.f32 %v37, %v193
  %v195 = vpop.f32.mrf.mxu0
  %196 = vmatprep.mubr.bf16.mxu0 0
  %197 = vmatmul.mubr.bf16.gmra.mxu0 %v102
  %v198 = vpop.f32.mrf.mxu0
  %v199 = vadd.f32 %v37, %v198
  %v200 = vpop.f32.mrf.mxu0
  %v201 = vpop.f32.mrf.mxu0
  %v202 = vadd.f32 %v37, %v201
  %v203 = vpop.f32.mrf.mxu0
  %204 = vdwg.mxu0
  %205 = vst [vmem:[%s3] sm:$0xff] %v143
  %206 = vst [vmem:[%s3 + $0x8] sm:$0xff] %v146
  %207 = vst [vmem:[%s3 + $0x10] sm:$0xff] %v151
  %208 = vst [vmem:[%s3 + $0x18] sm:$0xff] %v154
  %209 = vst [vmem:[%s3 + $0x20] sm:$0xff] %v159
  %210 = vst [vmem:[%s3 + $0x28] sm:$0xff] %v162
  %211 = vst [vmem:[%s3 + $0x30] sm:$0xff] %v167
  %212 = vst [vmem:[%s3 + $0x38] sm:$0xff] %v170
  %213 = vst [vmem:[%s3 + $0x40] sm:$0xff] %v175
  %214 = vst [vmem:[%s3 + $0x48] sm:$0xff] %v178
  %215 = vst [vmem:[%s3 + $0x50] sm:$0xff] %v183
  %216 = vst [vmem:[%s3 + $0x58] sm:$0xff] %v186
  %217 = vst [vmem:[%s3 + $0x60] sm:$0xff] %v191
  %218 = vst [vmem:[%s3 + $0x68] sm:$0xff] %v194
  %219 = vst [vmem:[%s3 + $0x70] sm:$0xff] %v199
  %220 = vst [vmem:[%s3 + $0x78] sm:$0xff] %v202
  // Predicated region
  $region14: #{resnet_forward.16} parent=0 // pred_check
    _
  $region15: #{resnet_forward.16} parent=0 // pred_check_branch
    %222 = sbr.rel (0) target = $region17
  $region16: #{resnet_forward.16} parent=0 // pred_region
    _
  $region17: #{resnet_forward.16} parent=0 // pred_fallthru
    _
  // Predicated region
  $region18: #{resnet_forward.16} parent=0 // pred_check
    _
  $region19: #{resnet_forward.16} parent=0 // pred_check_branch
    %224 = sbr.rel (0) target = $region21
  $region20: #{resnet_forward.16} parent=0 // pred_region
    _
  $region21: #{resnet_forward.16} parent=0 // pred_fallthru
    _

// kernel: resnet_forward.17
$region0: #{resnet_forward.17}
  #allocation0 [shape = 'u32[]', space=smem, size = 0x4, offset = 0x4, fixed_abs, tag = 'smem constant byte address 0x4 - core index']
  #allocation1 [shape = 'u32[144,128]{1,0:T(1,128)}', space=vmem, size = 0x12000, scoped, tag = 'internal scratch']
  %s0 = inlined_call_operand.vmem [shape: bf16[128,144], index: 0, kind: input, shape index: {}]
  %s1 = inlined_call_operand.vmem [shape: bf16[144,128], index: 1, kind: input, shape index: {}]
  %s2 = inlined_call_operand.vmem [shape: f32[1,128], index: 2, kind: input, shape index: {}]
  %s3 = inlined_call_operand.vmem [shape: f32[128,128], index: 3, kind: input, shape index: {}]
  %s4 = inlined_call_operand.vmem [shape: f32[128,128], index: 4, kind: output, shape index: {}]
  %s5 = sld [smem:[#allocation0]]
  $region26: #{resnet_forward.17} parent=0
    _
  %s7 = ssub.s32 1, %s5
  %s8 = scalar_select 0, %s7, %s5
  // Predicated region
  $region2: #{resnet_forward.17} parent=0 // pred_check
    _
  $region3: #{resnet_forward.17} parent=0 // pred_check_branch
    %10 = sbr.rel (0) target = $region5
  $region4: #{resnet_forward.17} parent=0 // pred_region
    _
  $region5: #{resnet_forward.17} parent=0 // pred_fallthru
    _
  // Predicated region
  $region6: #{resnet_forward.17} parent=0 // pred_check
    _
  $region7: #{resnet_forward.17} parent=0 // pred_check_branch
    %12 = sbr.rel (0) target = $region9
  $region8: #{resnet_forward.17} parent=0 // pred_region
    _
  $region9: #{resnet_forward.17} parent=0 // pred_fallthru
    _
  // Predicated region
  $region10: #{resnet_forward.17} parent=0 // pred_check
    _
  $region11: #{resnet_forward.17} parent=0 // pred_check_branch
    %14 = sbr.rel (0) target = $region13
  $region12: #{resnet_forward.17} parent=0 // pred_region
    _
  $region13: #{resnet_forward.17} parent=0 // pred_fallthru
    _
  // Predicated region
  $region14: #{resnet_forward.17} parent=0 // pred_check
    _
  $region15: #{resnet_forward.17} parent=0 // pred_check_branch
    %16 = sbr.rel (0) target = $region17
  $region16: #{resnet_forward.17} parent=0 // pred_region
    _
  $region17: #{resnet_forward.17} parent=0 // pred_fallthru
    _
  %v18 = vld [vmem:[%s0] sm:$0xff]
  %v19 = vld [vmem:[%s0 + $0x8] sm:$0xff]
  %v20 = vld [vmem:[%s0 + $0x10] sm:$0xff]
  %v21 = vld [vmem:[%s0 + $0x18] sm:$0xff]
  %v22 = vld [vmem:[%s0 + $0x20] sm:$0xff]
  %v23 = vld [vmem:[%s0 + $0x28] sm:$0xff]
  %v24 = vld [vmem:[%s0 + $0x30] sm:$0xff]
  %v25 = vld [vmem:[%s0 + $0x38] sm:$0xff]
  %v26 = vld [vmem:[%s0 + $0x40] sm:$0xff]
  %v27 = vld [vmem:[%s0 + $0x48] sm:$0xff]
  %v28 = vld [vmem:[%s0 + $0x50] sm:$0xff]
  %v29 = vld [vmem:[%s0 + $0x58] sm:$0xff]
  %v30 = vld [vmem:[%s0 + $0x60] sm:$0xff]
  %v31 = vld [vmem:[%s0 + $0x68] sm:$0xff]
  %v32 = vld [vmem:[%s0 + $0x70] sm:$0xff]
  %v33 = vld [vmem:[%s0 + $0x78] sm:$0xff]
  %v34 = vld [vmem:[%s1] sm:$0xf]
  %v35 = vld [vmem:[%s1 + $0x4] sm:$0xf]
  %v36 = vld [vmem:[%s1 + $0x8] sm:$0xf]
  %v37 = vld [vmem:[%s1 + $0xc] sm:$0xf]
  %v38 = vld [vmem:[%s1 + $0x10] sm:$0xf]
  %v39 = vld [vmem:[%s1 + $0x14] sm:$0xf]
  %v40 = vld [vmem:[%s1 + $0x18] sm:$0xf]
  %v41 = vld [vmem:[%s1 + $0x1c] sm:$0xf]
  %v42 = vld [vmem:[%s1 + $0x20] sm:$0xf]
  %v43 = vld [vmem:[%s1 + $0x24] sm:$0xf]
  %v44 = vld [vmem:[%s1 + $0x28] sm:$0xf]
  %v45 = vld [vmem:[%s1 + $0x2c] sm:$0xf]
  %v46 = vld [vmem:[%s1 + $0x30] sm:$0xf]
  %v47 = vld [vmem:[%s1 + $0x34] sm:$0xf]
  %v48 = vld [vmem:[%s1 + $0x38] sm:$0xf]
  %v49 = vld [vmem:[%s1 + $0x3c] sm:$0xf]
  %v50 = vld [vmem:[%s1 + $0x40] sm:$0xf]
  %v51 = vld [vmem:[%s1 + $0x44] sm:$0xf]
  %v52 = vld [vmem:[%s2] sm:$0x1]
  %v54 = vlaneseq
  %v55 = vshrl.u32 %v54, 7
  %v56 = vsub.s32 0, %v55
  %v57 = vrot.slane %v52, %v56
  %v75 = vunpack.c.l.b16 %v18
  %v76 = vunpack.c.h.b16 %v18
  %v77 = vunpack.c.l.b16 %v19
  %v78 = vunpack.c.h.b16 %v19
  %v79 = vunpack.c.l.b16 %v20
  %v80 = vunpack.c.h.b16 %v20
  %v81 = vunpack.c.l.b16 %v21
  %v82 = vunpack.c.h.b16 %v21
  %v83 = vunpack.c.l.b16 %v22
  %v84 = vunpack.c.h.b16 %v22
  %v85 = vunpack.c.l.b16 %v23
  %v86 = vunpack.c.h.b16 %v23
  %v87 = vunpack.c.l.b16 %v24
  %v88 = vunpack.c.h.b16 %v24
  %v89 = vunpack.c.l.b16 %v25
  %v90 = vunpack.c.h.b16 %v25
  %v91 = vunpack.c.l.b16 %v26
  %v92 = vunpack.c.h.b16 %v26
  %v93 = vunpack.c.l.b16 %v27
  %v94 = vunpack.c.h.b16 %v27
  %v95 = vunpack.c.l.b16 %v28
  %v96 = vunpack.c.h.b16 %v28
  %v97 = vunpack.c.l.b16 %v29
  %v98 = vunpack.c.h.b16 %v29
  %v99 = vunpack.c.l.b16 %v30
  %v100 = vunpack.c.h.b16 %v30
  %v101 = vunpack.c.l.b16 %v31
  %v102 = vunpack.c.h.b16 %v31
  %v103 = vunpack.c.l.b16 %v32
  %v104 = vunpack.c.h.b16 %v32
  %v105 = vunpack.c.l.b16 %v33
  %v106 = vunpack.c.h.b16 %v33
  %v107 = vpack.c.b16 %v77, %v75
  %v108 = vpack.c.b16 %v78, %v76
  %v109 = vpack.c.b16 %v81, %v79
  %v110 = vpack.c.b16 %v82, %v80
  %v111 = vpack.c.b16 %v85, %v83
  %v112 = vpack.c.b16 %v86, %v84
  %v113 = vpack.c.b16 %v89, %v87
  %v114 = vpack.c.b16 %v90, %v88
  %v115 = vpack.c.b16 %v93, %v91
  %v116 = vpack.c.b16 %v94, %v92
  %v117 = vpack.c.b16 %v97, %v95
  %v118 = vpack.c.b16 %v98, %v96
  %v119 = vpack.c.b16 %v101, %v99
  %v120 = vpack.c.b16 %v102, %v100
  %v121 = vpack.c.b16 %v105, %v103
  %v122 = vpack.c.b16 %v106, %v104
  %v149 = vunpack.c.l.b16 %v34
  %v150 = vunpack.c.l.b16 %v35
  %v151 = vunpack.c.l.b16 %v36
  %v152 = vunpack.c.l.b16 %v37
  %v153 = vunpack.c.l.b16 %v38
  %v154 = vunpack.c.l.b16 %v39
  %v155 = vunpack.c.l.b16 %v40
  %v156 = vunpack.c.l.b16 %v41
  %v157 = vunpack.c.l.b16 %v42
  %v158 = vunpack.c.l.b16 %v43
  %v159 = vunpack.c.l.b16 %v44
  %v160 = vunpack.c.l.b16 %v45
  %v161 = vunpack.c.l.b16 %v46
  %v162 = vunpack.c.l.b16 %v47
  %v163 = vunpack.c.l.b16 %v48
  %v164 = vunpack.c.l.b16 %v49
  %v165 = vunpack.c.l.b16 %v50
  %v166 = vunpack.c.l.b16 %v51
  %v167 = vpack.c.b16 %v150, %v149
  %v168 = vpack.c.b16 %v152, %v151
  %v169 = vpack.c.b16 %v154, %v153
  %v170 = vpack.c.b16 %v156, %v155
  %v171 = vpack.c.b16 %v158, %v157
  %v172 = vpack.c.b16 %v160, %v159
  %v173 = vpack.c.b16 %v162, %v161
  %v174 = vpack.c.b16 %v164, %v163
  %v175 = vpack.c.b16 %v166, %v165
  %vm185 = vcmask 130048
  %v187 = vsel %vm185, %v108, 0
  %v190 = vsel %vm185, %v110, 0
  %v193 = vsel %vm185, %v112, 0
  %v196 = vsel %vm185, %v114, 0
  %v199 = vsel %vm185, %v116, 0
  %v202 = vsel %vm185, %v118, 0
  %v205 = vsel %vm185, %v120, 0
  %v208 = vsel %vm185, %v122, 0
  %210 = vmatprep.subr.bf16.mxu0 0
  %211 = vmatpush1.bf16.msra.mxu0 %v174
  %212 = vmatprep.subr.bf16.mxu0 0
  %213 = vmatpush1.bf16.msra.mxu0 %v173
  %214 = vmatprep.subr.bf16.mxu0 0
  %215 = vmatpush1.bf16.msra.mxu0 %v172
  %216 = vmatprep.subr.bf16.mxu0 0
  %217 = vmatpush1.bf16.msra.mxu0 %v171
  %218 = vmatprep.subr.bf16.mxu0 0
  %219 = vmatpush1.bf16.msra.mxu0 %v170
  %220 = vmatprep.subr.bf16.mxu0 0
  %221 = vmatpush1.bf16.msra.mxu0 %v169
  %222 = vmatprep.subr.bf16.mxu0 0
  %223 = vmatpush1.bf16.msra.mxu0 %v168
  %224 = vmatprep.subr.bf16.mxu0 0
  %225 = vmatpush1.bf16.msra.mxu0 %v167
  %226 = vmatprep.subr.bf16.mxu0 0
  %227 = vmatpush2.bf16.msra.mxu0 0
  %228 = vmatprep.subr.bf16.mxu0 0
  %229 = vmatpush2.bf16.msra.mxu0 0
  %230 = vmatprep.subr.bf16.mxu0 0
  %231 = vmatpush2.bf16.msra.mxu0 0
  %232 = vmatprep.subr.bf16.mxu0 0
  %233 = vmatpush2.bf16.msra.mxu0 0
  %234 = vmatprep.subr.bf16.mxu0 0
  %235 = vmatpush2.bf16.msra.mxu0 0
  %236 = vmatprep.subr.bf16.mxu0 0
  %237 = vmatpush2.bf16.msra.mxu0 0
  %238 = vmatprep.subr.bf16.mxu0 0
  %239 = vmatpush2.bf16.msra.mxu0 0
  %240 = vmatprep.subr.bf16.mxu0 0
  %241 = vmatpush2.bf16.msra.mxu0 %v175
  %242 = vmatprep.mubr.bf16.mxu0 %v187
  %243 = vmatmul.mubr.bf16.gmra.mxu0 %v107
  %v244 = vpop.f32.mrf.mxu0
  %v245 = vadd.f32 %v57, %v244
  %v246 = vpop.f32.mrf.mxu0
  %v247 = vpop.f32.mrf.mxu0
  %v248 = vadd.f32 %v57, %v247
  %v249 = vpop.f32.mrf.mxu0
  %250 = vmatprep.mubr.bf16.mxu0 %v190
  %251 = vmatmul.mubr.bf16.gmra.mxu0 %v109
  %v252 = vpop.f32.mrf.mxu0
  %v253 = vadd.f32 %v57, %v252
  %v254 = vpop.f32.mrf.mxu0
  %v255 = vpop.f32.mrf.mxu0
  %v256 = vadd.f32 %v57, %v255
  %v257 = vpop.f32.mrf.mxu0
  %258 = vmatprep.mubr.bf16.mxu0 %v193
  %259 = vmatmul.mubr.bf16.gmra.mxu0 %v111
  %v260 = vpop.f32.mrf.mxu0
  %v261 = vadd.f32 %v57, %v260
  %v262 = vpop.f32.mrf.mxu0
  %v263 = vpop.f32.mrf.mxu0
  %v264 = vadd.f32 %v57, %v263
  %v265 = vpop.f32.mrf.mxu0
  %266 = vmatprep.mubr.bf16.mxu0 %v196
  %267 = vmatmul.mubr.bf16.gmra.mxu0 %v113
  %v268 = vpop.f32.mrf.mxu0
  %v269 = vadd.f32 %v57, %v268
  %v270 = vpop.f32.mrf.mxu0
  %v271 = vpop.f32.mrf.mxu0
  %v272 = vadd.f32 %v57, %v271
  %v273 = vpop.f32.mrf.mxu0
  %274 = vmatprep.mubr.bf16.mxu0 %v199
  %275 = vmatmul.mubr.bf16.gmra.mxu0 %v115
  %v276 = vpop.f32.mrf.mxu0
  %v277 = vadd.f32 %v57, %v276
  %v278 = vpop.f32.mrf.mxu0
  %v279 = vpop.f32.mrf.mxu0
  %v280 = vadd.f32 %v57, %v279
  %v281 = vpop.f32.mrf.mxu0
  %282 = vmatprep.mubr.bf16.mxu0 %v202
  %283 = vmatmul.mubr.bf16.gmra.mxu0 %v117
  %v284 = vpop.f32.mrf.mxu0
  %v285 = vadd.f32 %v57, %v284
  %v286 = vpop.f32.mrf.mxu0
  %v287 = vpop.f32.mrf.mxu0
  %v288 = vadd.f32 %v57, %v287
  %v289 = vpop.f32.mrf.mxu0
  %290 = vmatprep.mubr.bf16.mxu0 %v205
  %291 = vmatmul.mubr.bf16.gmra.mxu0 %v119
  %v292 = vpop.f32.mrf.mxu0
  %v293 = vadd.f32 %v57, %v292
  %v294 = vpop.f32.mrf.mxu0
  %v295 = vpop.f32.mrf.mxu0
  %v296 = vadd.f32 %v57, %v295
  %v297 = vpop.f32.mrf.mxu0
  %298 = vmatprep.mubr.bf16.mxu0 %v208
  %299 = vmatmul.mubr.bf16.gmra.mxu0 %v121
  %v300 = vpop.f32.mrf.mxu0
  %v301 = vadd.f32 %v57, %v300
  %v302 = vpop.f32.mrf.mxu0
  %v303 = vpop.f32.mrf.mxu0
  %v304 = vadd.f32 %v57, %v303
  %v305 = vpop.f32.mrf.mxu0
  %306 = vdwg.mxu0
  %v307 = vld [vmem:[%s3] sm:$0xff]
  %v308 = vld [vmem:[%s3 + $0x8] sm:$0xff]
  %v309 = vld [vmem:[%s3 + $0x10] sm:$0xff]
  %v310 = vld [vmem:[%s3 + $0x18] sm:$0xff]
  %v311 = vld [vmem:[%s3 + $0x20] sm:$0xff]
  %v312 = vld [vmem:[%s3 + $0x28] sm:$0xff]
  %v313 = vld [vmem:[%s3 + $0x30] sm:$0xff]
  %v314 = vld [vmem:[%s3 + $0x38] sm:$0xff]
  %v315 = vld [vmem:[%s3 + $0x40] sm:$0xff]
  %v316 = vld [vmem:[%s3 + $0x48] sm:$0xff]
  %v317 = vld [vmem:[%s3 + $0x50] sm:$0xff]
  %v318 = vld [vmem:[%s3 + $0x58] sm:$0xff]
  %v319 = vld [vmem:[%s3 + $0x60] sm:$0xff]
  %v320 = vld [vmem:[%s3 + $0x68] sm:$0xff]
  %v321 = vld [vmem:[%s3 + $0x70] sm:$0xff]
  %v322 = vld [vmem:[%s3 + $0x78] sm:$0xff]
  %v323 = vadd.f32 %v245, %v307
  %v324 = vadd.f32 %v248, %v308
  %v325 = vadd.f32 %v253, %v309
  %v326 = vadd.f32 %v256, %v310
  %v327 = vadd.f32 %v261, %v311
  %v328 = vadd.f32 %v264, %v312
  %v329 = vadd.f32 %v269, %v313
  %v330 = vadd.f32 %v272, %v314
  %v331 = vadd.f32 %v277, %v315
  %v332 = vadd.f32 %v280, %v316
  %v333 = vadd.f32 %v285, %v317
  %v334 = vadd.f32 %v288, %v318
  %v335 = vadd.f32 %v293, %v319
  %v336 = vadd.f32 %v296, %v320
  %v337 = vadd.f32 %v301, %v321
  %v338 = vadd.f32 %v304, %v322
  %v339 = vmax.f32 %v323, 0.0
  %v340 = vmax.f32 %v324, 0.0
  %v341 = vmax.f32 %v325, 0.0
  %v342 = vmax.f32 %v326, 0.0
  %v343 = vmax.f32 %v327, 0.0
  %v344 = vmax.f32 %v328, 0.0
  %v345 = vmax.f32 %v329, 0.0
  %v346 = vmax.f32 %v330, 0.0
  %v347 = vmax.f32 %v331, 0.0
  %v348 = vmax.f32 %v332, 0.0
  %v349 = vmax.f32 %v333, 0.0
  %v350 = vmax.f32 %v334, 0.0
  %v351 = vmax.f32 %v335, 0.0
  %v352 = vmax.f32 %v336, 0.0
  %v353 = vmax.f32 %v337, 0.0
  %v354 = vmax.f32 %v338, 0.0
  %355 = vst [vmem:[%s4] sm:$0xff] %v339
  %356 = vst [vmem:[%s4 + $0x8] sm:$0xff] %v340
  %357 = vst [vmem:[%s4 + $0x10] sm:$0xff] %v341
  %358 = vst [vmem:[%s4 + $0x18] sm:$0xff] %v342
  %359 = vst [vmem:[%s4 + $0x20] sm:$0xff] %v343
  %360 = vst [vmem:[%s4 + $0x28] sm:$0xff] %v344
  %361 = vst [vmem:[%s4 + $0x30] sm:$0xff] %v345
  %362 = vst [vmem:[%s4 + $0x38] sm:$0xff] %v346
  %363 = vst [vmem:[%s4 + $0x40] sm:$0xff] %v347
  %364 = vst [vmem:[%s4 + $0x48] sm:$0xff] %v348
  %365 = vst [vmem:[%s4 + $0x50] sm:$0xff] %v349
  %366 = vst [vmem:[%s4 + $0x58] sm:$0xff] %v350
  %367 = vst [vmem:[%s4 + $0x60] sm:$0xff] %v351
  %368 = vst [vmem:[%s4 + $0x68] sm:$0xff] %v352
  %369 = vst [vmem:[%s4 + $0x70] sm:$0xff] %v353
  %370 = vst [vmem:[%s4 + $0x78] sm:$0xff] %v354
  // Predicated region
  $region18: #{resnet_forward.17} parent=0 // pred_check
    _
  $region19: #{resnet_forward.17} parent=0 // pred_check_branch
    %372 = sbr.rel (0) target = $region21
  $region20: #{resnet_forward.17} parent=0 // pred_region
    _
  $region21: #{resnet_forward.17} parent=0 // pred_fallthru
    _
  // Predicated region
  $region22: #{resnet_forward.17} parent=0 // pred_check
    _
  $region23: #{resnet_forward.17} parent=0 // pred_check_branch
    %374 = sbr.rel (0) target = $region25
  $region24: #{resnet_forward.17} parent=0 // pred_region
    _
  $region25: #{resnet_forward.17} parent=0 // pred_fallthru
    _

// kernel: resnet_forward.18
$region0: #{resnet_forward.18}
  #allocation0 [shape = 'u32[]', space=smem, size = 0x4, offset = 0x4, fixed_abs, tag = 'smem constant byte address 0x4 - core index']
  #allocation1 [shape = 'u32[144,128]{1,0:T(1,128)}', space=vmem, size = 0x12000, scoped, tag = 'internal scratch']
  %s0 = inlined_call_operand.vmem [shape: bf16[32,144], index: 0, kind: input, shape index: {}]
  %s1 = inlined_call_operand.vmem [shape: bf16[144,128], index: 1, kind: input, shape index: {}]
  %s2 = inlined_call_operand.vmem [shape: f32[1,128], index: 2, kind: input, shape index: {}]
  %s3 = inlined_call_operand.vmem [shape: f32[32,128], index: 3, kind: output, shape index: {}]
  %s4 = sld [smem:[#allocation0]]
  $region22: #{resnet_forward.18} parent=0
    _
  %s6 = ssub.s32 1, %s4
  %s7 = scalar_select 0, %s6, %s4
  // Predicated region
  $region2: #{resnet_forward.18} parent=0 // pred_check
    _
  $region3: #{resnet_forward.18} parent=0 // pred_check_branch
    %9 = sbr.rel (0) target = $region5
  $region4: #{resnet_forward.18} parent=0 // pred_region
    _
  $region5: #{resnet_forward.18} parent=0 // pred_fallthru
    _
  // Predicated region
  $region6: #{resnet_forward.18} parent=0 // pred_check
    _
  $region7: #{resnet_forward.18} parent=0 // pred_check_branch
    %11 = sbr.rel (0) target = $region9
  $region8: #{resnet_forward.18} parent=0 // pred_region
    _
  $region9: #{resnet_forward.18} parent=0 // pred_fallthru
    _
  // Predicated region
  $region10: #{resnet_forward.18} parent=0 // pred_check
    _
  $region11: #{resnet_forward.18} parent=0 // pred_check_branch
    %13 = sbr.rel (0) target = $region13
  $region12: #{resnet_forward.18} parent=0 // pred_region
    _
  $region13: #{resnet_forward.18} parent=0 // pred_fallthru
    _
  %v15 = vld [vmem:[%s0] sm:$0xff]
  %v16 = vld [vmem:[%s0 + $0x8] sm:$0xff]
  %v17 = vld [vmem:[%s0 + $0x10] sm:$0xff]
  %v18 = vld [vmem:[%s0 + $0x18] sm:$0xff]
  %v19 = vld [vmem:[%s1] sm:$0xf]
  %v20 = vld [vmem:[%s1 + $0x4] sm:$0xf]
  %v21 = vld [vmem:[%s1 + $0x8] sm:$0xf]
  %v22 = vld [vmem:[%s1 + $0xc] sm:$0xf]
  %v23 = vld [vmem:[%s1 + $0x10] sm:$0xf]
  %v24 = vld [vmem:[%s1 + $0x14] sm:$0xf]
  %v25 = vld [vmem:[%s1 + $0x18] sm:$0xf]
  %v26 = vld [vmem:[%s1 + $0x1c] sm:$0xf]
  %v27 = vld [vmem:[%s1 + $0x20] sm:$0xf]
  %v28 = vld [vmem:[%s1 + $0x24] sm:$0xf]
  %v29 = vld [vmem:[%s1 + $0x28] sm:$0xf]
  %v30 = vld [vmem:[%s1 + $0x2c] sm:$0xf]
  %v31 = vld [vmem:[%s1 + $0x30] sm:$0xf]
  %v32 = vld [vmem:[%s1 + $0x34] sm:$0xf]
  %v33 = vld [vmem:[%s1 + $0x38] sm:$0xf]
  %v34 = vld [vmem:[%s1 + $0x3c] sm:$0xf]
  %v35 = vld [vmem:[%s1 + $0x40] sm:$0xf]
  %v36 = vld [vmem:[%s1 + $0x44] sm:$0xf]
  %v37 = vld [vmem:[%s2] sm:$0x1]
  %v39 = vlaneseq
  %v40 = vshrl.u32 %v39, 7
  %v41 = vsub.s32 0, %v40
  %v42 = vrot.slane %v37, %v41
  %v48 = vunpack.c.l.b16 %v15
  %v49 = vunpack.c.h.b16 %v15
  %v50 = vunpack.c.l.b16 %v16
  %v51 = vunpack.c.h.b16 %v16
  %v52 = vunpack.c.l.b16 %v17
  %v53 = vunpack.c.h.b16 %v17
  %v54 = vunpack.c.l.b16 %v18
  %v55 = vunpack.c.h.b16 %v18
  %v56 = vpack.c.b16 %v50, %v48
  %v57 = vpack.c.b16 %v51, %v49
  %v58 = vpack.c.b16 %v54, %v52
  %v59 = vpack.c.b16 %v55, %v53
  %v80 = vunpack.c.l.b16 %v19
  %v81 = vunpack.c.l.b16 %v20
  %v82 = vunpack.c.l.b16 %v21
  %v83 = vunpack.c.l.b16 %v22
  %v84 = vunpack.c.l.b16 %v23
  %v85 = vunpack.c.l.b16 %v24
  %v86 = vunpack.c.l.b16 %v25
  %v87 = vunpack.c.l.b16 %v26
  %v88 = vunpack.c.l.b16 %v27
  %v89 = vunpack.c.l.b16 %v28
  %v90 = vunpack.c.l.b16 %v29
  %v91 = vunpack.c.l.b16 %v30
  %v92 = vunpack.c.l.b16 %v31
  %v93 = vunpack.c.l.b16 %v32
  %v94 = vunpack.c.l.b16 %v33
  %v95 = vunpack.c.l.b16 %v34
  %v96 = vunpack.c.l.b16 %v35
  %v97 = vunpack.c.l.b16 %v36
  %v98 = vpack.c.b16 %v81, %v80
  %v99 = vpack.c.b16 %v83, %v82
  %v100 = vpack.c.b16 %v85, %v84
  %v101 = vpack.c.b16 %v87, %v86
  %v102 = vpack.c.b16 %v89, %v88
  %v103 = vpack.c.b16 %v91, %v90
  %v104 = vpack.c.b16 %v93, %v92
  %v105 = vpack.c.b16 %v95, %v94
  %v106 = vpack.c.b16 %v97, %v96
  %vm116 = vcmask 130048
  %v118 = vsel %vm116, %v57, 0
  %v121 = vsel %vm116, %v59, 0
  %123 = vmatprep.subr.bf16.mxu0 0
  %124 = vmatpush1.bf16.msra.mxu0 %v105
  %125 = vmatprep.subr.bf16.mxu0 0
  %126 = vmatpush1.bf16.msra.mxu0 %v104
  %127 = vmatprep.subr.bf16.mxu0 0
  %128 = vmatpush1.bf16.msra.mxu0 %v103
  %129 = vmatprep.subr.bf16.mxu0 0
  %130 = vmatpush1.bf16.msra.mxu0 %v102
  %131 = vmatprep.subr.bf16.mxu0 0
  %132 = vmatpush1.bf16.msra.mxu0 %v101
  %133 = vmatprep.subr.bf16.mxu0 0
  %134 = vmatpush1.bf16.msra.mxu0 %v100
  %135 = vmatprep.subr.bf16.mxu0 0
  %136 = vmatpush1.bf16.msra.mxu0 %v99
  %137 = vmatprep.subr.bf16.mxu0 0
  %138 = vmatpush1.bf16.msra.mxu0 %v98
  %139 = vmatprep.subr.bf16.mxu0 0
  %140 = vmatpush2.bf16.msra.mxu0 0
  %141 = vmatprep.subr.bf16.mxu0 0
  %142 = vmatpush2.bf16.msra.mxu0 0
  %143 = vmatprep.subr.bf16.mxu0 0
  %144 = vmatpush2.bf16.msra.mxu0 0
  %145 = vmatprep.subr.bf16.mxu0 0
  %146 = vmatpush2.bf16.msra.mxu0 0
  %147 = vmatprep.subr.bf16.mxu0 0
  %148 = vmatpush2.bf16.msra.mxu0 0
  %149 = vmatprep.subr.bf16.mxu0 0
  %150 = vmatpush2.bf16.msra.mxu0 0
  %151 = vmatprep.subr.bf16.mxu0 0
  %152 = vmatpush2.bf16.msra.mxu0 0
  %153 = vmatprep.subr.bf16.mxu0 0
  %154 = vmatpush2.bf16.msra.mxu0 %v106
  %155 = vmatprep.mubr.bf16.mxu0 %v118
  %156 = vmatmul.mubr.bf16.gmra.mxu0 %v56
  %v157 = vpop.f32.mrf.mxu0
  %v158 = vadd.f32 %v42, %v157
  %v159 = vpop.f32.mrf.mxu0
  %v160 = vpop.f32.mrf.mxu0
  %v161 = vadd.f32 %v42, %v160
  %v162 = vpop.f32.mrf.mxu0
  %163 = vmatprep.mubr.bf16.mxu0 %v121
  %164 = vmatmul.mubr.bf16.gmra.mxu0 %v58
  %v165 = vpop.f32.mrf.mxu0
  %v166 = vadd.f32 %v42, %v165
  %v167 = vpop.f32.mrf.mxu0
  %v168 = vpop.f32.mrf.mxu0
  %v169 = vadd.f32 %v42, %v168
  %v170 = vpop.f32.mrf.mxu0
  %171 = vdwg.mxu0
  %v172 = vmax.f32 %v158, 0.0
  %v173 = vmax.f32 %v161, 0.0
  %v174 = vmax.f32 %v166, 0.0
  %v175 = vmax.f32 %v169, 0.0
  %176 = vst [vmem:[%s3] sm:$0xff] %v172
  %177 = vst [vmem:[%s3 + $0x8] sm:$0xff] %v173
  %178 = vst [vmem:[%s3 + $0x10] sm:$0xff] %v174
  %179 = vst [vmem:[%s3 + $0x18] sm:$0xff] %v175
  // Predicated region
  $region14: #{resnet_forward.18} parent=0 // pred_check
    _
  $region15: #{resnet_forward.18} parent=0 // pred_check_branch
    %181 = sbr.rel (0) target = $region17
  $region16: #{resnet_forward.18} parent=0 // pred_region
    _
  $region17: #{resnet_forward.18} parent=0 // pred_fallthru
    _
  // Predicated region
  $region18: #{resnet_forward.18} parent=0 // pred_check
    _
  $region19: #{resnet_forward.18} parent=0 // pred_check_branch
    %183 = sbr.rel (0) target = $region21
  $region20: #{resnet_forward.18} parent=0 // pred_region
    _
  $region21: #{resnet_forward.18} parent=0 // pred_fallthru
    _

// kernel: resnet_forward.19
$region0: #{resnet_forward.19}
  #allocation0 [shape = 'u32[]', space=smem, size = 0x4, offset = 0x4, fixed_abs, tag = 'smem constant byte address 0x4 - core index']
  #allocation1 [shape = 'u32[144,128]{1,0:T(1,128)}', space=vmem, size = 0x12000, scoped, tag = 'internal scratch']
  %s0 = inlined_call_operand.vmem [shape: bf16[32,16], index: 0, kind: input, shape index: {}]
  %s1 = inlined_call_operand.vmem [shape: bf16[16,128], index: 1, kind: input, shape index: {}]
  %s2 = inlined_call_operand.vmem [shape: f32[1,128], index: 2, kind: input, shape index: {}]
  %s3 = inlined_call_operand.vmem [shape: f32[32,128], index: 3, kind: output, shape index: {}]
  %s4 = sld [smem:[#allocation0]]
  $region22: #{resnet_forward.19} parent=0
    _
  %s6 = ssub.s32 1, %s4
  %s7 = scalar_select 0, %s6, %s4
  // Predicated region
  $region2: #{resnet_forward.19} parent=0 // pred_check
    _
  $region3: #{resnet_forward.19} parent=0 // pred_check_branch
    %9 = sbr.rel (0) target = $region5
  $region4: #{resnet_forward.19} parent=0 // pred_region
    _
  $region5: #{resnet_forward.19} parent=0 // pred_fallthru
    _
  // Predicated region
  $region6: #{resnet_forward.19} parent=0 // pred_check
    _
  $region7: #{resnet_forward.19} parent=0 // pred_check_branch
    %11 = sbr.rel (0) target = $region9
  $region8: #{resnet_forward.19} parent=0 // pred_region
    _
  $region9: #{resnet_forward.19} parent=0 // pred_fallthru
    _
  // Predicated region
  $region10: #{resnet_forward.19} parent=0 // pred_check
    _
  $region11: #{resnet_forward.19} parent=0 // pred_check_branch
    %13 = sbr.rel (0) target = $region13
  $region12: #{resnet_forward.19} parent=0 // pred_region
    _
  $region13: #{resnet_forward.19} parent=0 // pred_fallthru
    _
  %v15 = vld [vmem:[%s0] sm:$0xf]
  %v16 = vld [vmem:[%s0 + $0x4] sm:$0xf]
  %v17 = vld [vmem:[%s0 + $0x8] sm:$0xf]
  %v18 = vld [vmem:[%s0 + $0xc] sm:$0xf]
  %v19 = vld [vmem:[%s1] sm:$0xf]
  %v20 = vld [vmem:[%s1 + $0x4] sm:$0xf]
  %v21 = vld [vmem:[%s2] sm:$0x1]
  %v23 = vlaneseq
  %v24 = vshrl.u32 %v23, 7
  %v25 = vsub.s32 0, %v24
  %v26 = vrot.slane %v21, %v25
  %v32 = vunpack.c.l.b16 %v15
  %v33 = vunpack.c.l.b16 %v16
  %v34 = vunpack.c.l.b16 %v17
  %v35 = vunpack.c.l.b16 %v18
  %v36 = vpack.c.b16 %v33, %v32
  %v37 = vpack.c.b16 %v35, %v34
  %v40 = vunpack.c.l.b16 %v19
  %v41 = vunpack.c.l.b16 %v20
  %v42 = vpack.c.b16 %v41, %v40
  %vm44 = vcmask 130048
  %v46 = vsel %vm44, %v36, 0
  %v49 = vsel %vm44, %v37, 0
  %51 = vmatprep.subr.bf16.mxu0 0
  %52 = vmatpush1.bf16.msra.mxu0 0
  %53 = vmatprep.subr.bf16.mxu0 0
  %54 = vmatpush1.bf16.msra.mxu0 0
  %55 = vmatprep.subr.bf16.mxu0 0
  %56 = vmatpush1.bf16.msra.mxu0 0
  %57 = vmatprep.subr.bf16.mxu0 0
  %58 = vmatpush1.bf16.msra.mxu0 0
  %59 = vmatprep.subr.bf16.mxu0 0
  %60 = vmatpush1.bf16.msra.mxu0 0
  %61 = vmatprep.subr.bf16.mxu0 0
  %62 = vmatpush1.bf16.msra.mxu0 0
  %63 = vmatprep.subr.bf16.mxu0 0
  %64 = vmatpush1.bf16.msra.mxu0 0
  %65 = vmatprep.subr.bf16.mxu0 0
  %66 = vmatpush1.bf16.msra.mxu0 %v42
  %67 = vmatprep.subr.bf16.mxu0 0
  %68 = vmatpush2.bf16.msra.mxu0 0
  %69 = vmatprep.subr.bf16.mxu0 0
  %70 = vmatpush2.bf16.msra.mxu0 0
  %71 = vmatprep.subr.bf16.mxu0 0
  %72 = vmatpush2.bf16.msra.mxu0 0
  %73 = vmatprep.subr.bf16.mxu0 0
  %74 = vmatpush2.bf16.msra.mxu0 0
  %75 = vmatprep.subr.bf16.mxu0 0
  %76 = vmatpush2.bf16.msra.mxu0 0
  %77 = vmatprep.subr.bf16.mxu0 0
  %78 = vmatpush2.bf16.msra.mxu0 0
  %79 = vmatprep.subr.bf16.mxu0 0
  %80 = vmatpush2.bf16.msra.mxu0 0
  %81 = vmatprep.subr.bf16.mxu0 0
  %82 = vmatpush2.bf16.msra.mxu0 0
  %83 = vmatprep.mubr.bf16.mxu0 0
  %84 = vmatmul.mubr.bf16.gmra.mxu0 %v46
  %v85 = vpop.f32.mrf.mxu0
  %v86 = vadd.f32 %v26, %v85
  %v87 = vpop.f32.mrf.mxu0
  %v88 = vpop.f32.mrf.mxu0
  %v89 = vadd.f32 %v26, %v88
  %v90 = vpop.f32.mrf.mxu0
  %91 = vmatprep.mubr.bf16.mxu0 0
  %92 = vmatmul.mubr.bf16.gmra.mxu0 %v49
  %v93 = vpop.f32.mrf.mxu0
  %v94 = vadd.f32 %v26, %v93
  %v95 = vpop.f32.mrf.mxu0
  %v96 = vpop.f32.mrf.mxu0
  %v97 = vadd.f32 %v26, %v96
  %v98 = vpop.f32.mrf.mxu0
  %99 = vdwg.mxu0
  %100 = vst [vmem:[%s3] sm:$0xff] %v86
  %101 = vst [vmem:[%s3 + $0x8] sm:$0xff] %v89
  %102 = vst [vmem:[%s3 + $0x10] sm:$0xff] %v94
  %103 = vst [vmem:[%s3 + $0x18] sm:$0xff] %v97
  // Predicated region
  $region14: #{resnet_forward.19} parent=0 // pred_check
    _
  $region15: #{resnet_forward.19} parent=0 // pred_check_branch
    %105 = sbr.rel (0) target = $region17
  $region16: #{resnet_forward.19} parent=0 // pred_region
    _
  $region17: #{resnet_forward.19} parent=0 // pred_fallthru
    _
  // Predicated region
  $region18: #{resnet_forward.19} parent=0 // pred_check
    _
  $region19: #{resnet_forward.19} parent=0 // pred_check_branch
    %107 = sbr.rel (0) target = $region21
  $region20: #{resnet_forward.19} parent=0 // pred_region
    _
  $region21: #{resnet_forward.19} parent=0 // pred_fallthru
    _

// kernel: resnet_forward.20
$region0: #{resnet_forward.20}
  #allocation0 [shape = 'u32[]', space=smem, size = 0x4, offset = 0x4, fixed_abs, tag = 'smem constant byte address 0x4 - core index']
  #allocation1 [shape = 'u32[144,128]{1,0:T(1,128)}', space=vmem, size = 0x12000, scoped, tag = 'internal scratch']
  %s0 = inlined_call_operand.vmem [shape: bf16[32,288], index: 0, kind: input, shape index: {}]
  %s1 = inlined_call_operand.vmem [shape: bf16[288,128], index: 1, kind: input, shape index: {}]
  %s2 = inlined_call_operand.vmem [shape: f32[1,128], index: 2, kind: input, shape index: {}]
  %s3 = inlined_call_operand.vmem [shape: f32[32,128], index: 3, kind: input, shape index: {}]
  %s4 = inlined_call_operand.vmem [shape: f32[32,128], index: 4, kind: output, shape index: {}]
  %s5 = sld [smem:[#allocation0]]
  $region26: #{resnet_forward.20} parent=0
    _
  %s7 = ssub.s32 1, %s5
  %s8 = scalar_select 0, %s7, %s5
  // Predicated region
  $region2: #{resnet_forward.20} parent=0 // pred_check
    _
  $region3: #{resnet_forward.20} parent=0 // pred_check_branch
    %10 = sbr.rel (0) target = $region5
  $region4: #{resnet_forward.20} parent=0 // pred_region
    _
  $region5: #{resnet_forward.20} parent=0 // pred_fallthru
    _
  // Predicated region
  $region6: #{resnet_forward.20} parent=0 // pred_check
    _
  $region7: #{resnet_forward.20} parent=0 // pred_check_branch
    %12 = sbr.rel (0) target = $region9
  $region8: #{resnet_forward.20} parent=0 // pred_region
    _
  $region9: #{resnet_forward.20} parent=0 // pred_fallthru
    _
  // Predicated region
  $region10: #{resnet_forward.20} parent=0 // pred_check
    _
  $region11: #{resnet_forward.20} parent=0 // pred_check_branch
    %14 = sbr.rel (0) target = $region13
  $region12: #{resnet_forward.20} parent=0 // pred_region
    _
  $region13: #{resnet_forward.20} parent=0 // pred_fallthru
    _
  // Predicated region
  $region14: #{resnet_forward.20} parent=0 // pred_check
    _
  $region15: #{resnet_forward.20} parent=0 // pred_check_branch
    %16 = sbr.rel (0) target = $region17
  $region16: #{resnet_forward.20} parent=0 // pred_region
    _
  $region17: #{resnet_forward.20} parent=0 // pred_fallthru
    _
  %v18 = vld [vmem:[%s0] sm:$0xff]
  %v19 = vld [vmem:[%s0 + $0x8] sm:$0xf]
  %v20 = vld [vmem:[%s0 + $0xc] sm:$0xff]
  %v21 = vld [vmem:[%s0 + $0x14] sm:$0xf]
  %v22 = vld [vmem:[%s0 + $0x18] sm:$0xff]
  %v23 = vld [vmem:[%s0 + $0x20] sm:$0xf]
  %v24 = vld [vmem:[%s0 + $0x24] sm:$0xff]
  %v25 = vld [vmem:[%s0 + $0x2c] sm:$0xf]
  %v26 = vld [vmem:[%s1] sm:$0xf]
  %v27 = vld [vmem:[%s1 + $0x4] sm:$0xf]
  %v28 = vld [vmem:[%s1 + $0x8] sm:$0xf]
  %v29 = vld [vmem:[%s1 + $0xc] sm:$0xf]
  %v30 = vld [vmem:[%s1 + $0x10] sm:$0xf]
  %v31 = vld [vmem:[%s1 + $0x14] sm:$0xf]
  %v32 = vld [vmem:[%s1 + $0x18] sm:$0xf]
  %v33 = vld [vmem:[%s1 + $0x1c] sm:$0xf]
  %v34 = vld [vmem:[%s1 + $0x20] sm:$0xf]
  %v35 = vld [vmem:[%s1 + $0x24] sm:$0xf]
  %v36 = vld [vmem:[%s1 + $0x28] sm:$0xf]
  %v37 = vld [vmem:[%s1 + $0x2c] sm:$0xf]
  %v38 = vld [vmem:[%s1 + $0x30] sm:$0xf]
  %v39 = vld [vmem:[%s1 + $0x34] sm:$0xf]
  %v40 = vld [vmem:[%s1 + $0x38] sm:$0xf]
  %v41 = vld [vmem:[%s1 + $0x3c] sm:$0xf]
  %v42 = vld [vmem:[%s1 + $0x40] sm:$0xf]
  %v43 = vld [vmem:[%s1 + $0x44] sm:$0xf]
  %v44 = vld [vmem:[%s1 + $0x48] sm:$0xf]
  %v45 = vld [vmem:[%s1 + $0x4c] sm:$0xf]
  %v46 = vld [vmem:[%s1 + $0x50] sm:$0xf]
  %v47 = vld [vmem:[%s1 + $0x54] sm:$0xf]
  %v48 = vld [vmem:[%s1 + $0x58] sm:$0xf]
  %v49 = vld [vmem:[%s1 + $0x5c] sm:$0xf]
  %v50 = vld [vmem:[%s1 + $0x60] sm:$0xf]
  %v51 = vld [vmem:[%s1 + $0x64] sm:$0xf]
  %v52 = vld [vmem:[%s1 + $0x68] sm:$0xf]
  %v53 = vld [vmem:[%s1 + $0x6c] sm:$0xf]
  %v54 = vld [vmem:[%s1 + $0x70] sm:$0xf]
  %v55 = vld [vmem:[%s1 + $0x74] sm:$0xf]
  %v56 = vld [vmem:[%s1 + $0x78] sm:$0xf]
  %v57 = vld [vmem:[%s1 + $0x7c] sm:$0xf]
  %v58 = vld [vmem:[%s1 + $0x80] sm:$0xf]
  %v59 = vld [vmem:[%s1 + $0x84] sm:$0xf]
  %v60 = vld [vmem:[%s1 + $0x88] sm:$0xf]
  %v61 = vld [vmem:[%s1 + $0x8c] sm:$0xf]
  %v62 = vld [vmem:[%s2] sm:$0x1]
  %v64 = vlaneseq
  %v65 = vshrl.u32 %v64, 7
  %v66 = vsub.s32 0, %v65
  %v67 = vrot.slane %v62, %v66
  %v77 = vunpack.c.l.b16 %v18
  %v78 = vunpack.c.h.b16 %v18
  %v79 = vunpack.c.l.b16 %v19
  %v80 = vunpack.c.l.b16 %v20
  %v81 = vunpack.c.h.b16 %v20
  %v82 = vunpack.c.l.b16 %v21
  %v83 = vunpack.c.l.b16 %v22
  %v84 = vunpack.c.h.b16 %v22
  %v85 = vunpack.c.l.b16 %v23
  %v86 = vunpack.c.l.b16 %v24
  %v87 = vunpack.c.h.b16 %v24
  %v88 = vunpack.c.l.b16 %v25
  %v89 = vpack.c.b16 %v80, %v77
  %v90 = vpack.c.b16 %v81, %v78
  %v91 = vpack.c.b16 %v82, %v79
  %v92 = vpack.c.b16 %v86, %v83
  %v93 = vpack.c.b16 %v87, %v84
  %v94 = vpack.c.b16 %v88, %v85
  %v135 = vunpack.c.l.b16 %v26
  %v136 = vunpack.c.l.b16 %v27
  %v137 = vunpack.c.l.b16 %v28
  %v138 = vunpack.c.l.b16 %v29
  %v139 = vunpack.c.l.b16 %v30
  %v140 = vunpack.c.l.b16 %v31
  %v141 = vunpack.c.l.b16 %v32
  %v142 = vunpack.c.l.b16 %v33
  %v143 = vunpack.c.l.b16 %v34
  %v144 = vunpack.c.l.b16 %v35
  %v145 = vunpack.c.l.b16 %v36
  %v146 = vunpack.c.l.b16 %v37
  %v147 = vunpack.c.l.b16 %v38
  %v148 = vunpack.c.l.b16 %v39
  %v149 = vunpack.c.l.b16 %v40
  %v150 = vunpack.c.l.b16 %v41
  %v151 = vunpack.c.l.b16 %v42
  %v152 = vunpack.c.l.b16 %v43
  %v153 = vunpack.c.l.b16 %v44
  %v154 = vunpack.c.l.b16 %v45
  %v155 = vunpack.c.l.b16 %v46
  %v156 = vunpack.c.l.b16 %v47
  %v157 = vunpack.c.l.b16 %v48
  %v158 = vunpack.c.l.b16 %v49
  %v159 = vunpack.c.l.b16 %v50
  %v160 = vunpack.c.l.b16 %v51
  %v161 = vunpack.c.l.b16 %v52
  %v162 = vunpack.c.l.b16 %v53
  %v163 = vunpack.c.l.b16 %v54
  %v164 = vunpack.c.l.b16 %v55
  %v165 = vunpack.c.l.b16 %v56
  %v166 = vunpack.c.l.b16 %v57
  %v167 = vunpack.c.l.b16 %v58
  %v168 = vunpack.c.l.b16 %v59
  %v169 = vunpack.c.l.b16 %v60
  %v170 = vunpack.c.l.b16 %v61
  %v171 = vpack.c.b16 %v136, %v135
  %v172 = vpack.c.b16 %v138, %v137
  %v173 = vpack.c.b16 %v140, %v139
  %v174 = vpack.c.b16 %v142, %v141
  %v175 = vpack.c.b16 %v144, %v143
  %v176 = vpack.c.b16 %v146, %v145
  %v177 = vpack.c.b16 %v148, %v147
  %v178 = vpack.c.b16 %v150, %v149
  %v179 = vpack.c.b16 %v152, %v151
  %v180 = vpack.c.b16 %v154, %v153
  %v181 = vpack.c.b16 %v156, %v155
  %v182 = vpack.c.b16 %v158, %v157
  %v183 = vpack.c.b16 %v160, %v159
  %v184 = vpack.c.b16 %v162, %v161
  %v185 = vpack.c.b16 %v164, %v163
  %v186 = vpack.c.b16 %v166, %v165
  %v187 = vpack.c.b16 %v168, %v167
  %v188 = vpack.c.b16 %v170, %v169
  %vm207 = vcmask 261120
  %v209 = vsel %vm207, %v91, 0
  %v212 = vsel %vm207, %v94, 0
  %214 = vmatprep.subr.bf16.mxu0 0
  %215 = vmatpush1.bf16.msra.mxu0 %v178
  %216 = vmatprep.subr.bf16.mxu0 0
  %217 = vmatpush1.bf16.msra.mxu0 %v177
  %218 = vmatprep.subr.bf16.mxu0 0
  %219 = vmatpush1.bf16.msra.mxu0 %v176
  %220 = vmatprep.subr.bf16.mxu0 0
  %221 = vmatpush1.bf16.msra.mxu0 %v175
  %222 = vmatprep.subr.bf16.mxu0 0
  %223 = vmatpush1.bf16.msra.mxu0 %v174
  %224 = vmatprep.subr.bf16.mxu0 0
  %225 = vmatpush1.bf16.msra.mxu0 %v173
  %226 = vmatprep.subr.bf16.mxu0 0
  %227 = vmatpush1.bf16.msra.mxu0 %v172
  %228 = vmatprep.subr.bf16.mxu0 0
  %229 = vmatpush1.bf16.msra.mxu0 %v171
  %230 = vmatprep.subr.bf16.mxu0 0
  %231 = vmatpush2.bf16.msra.mxu0 %v186
  %232 = vmatprep.subr.bf16.mxu0 0
  %233 = vmatpush2.bf16.msra.mxu0 %v185
  %234 = vmatprep.subr.bf16.mxu0 0
  %235 = vmatpush2.bf16.msra.mxu0 %v184
  %236 = vmatprep.subr.bf16.mxu0 0
  %237 = vmatpush2.bf16.msra.mxu0 %v183
  %238 = vmatprep.subr.bf16.mxu0 0
  %239 = vmatpush2.bf16.msra.mxu0 %v182
  %240 = vmatprep.subr.bf16.mxu0 0
  %241 = vmatpush2.bf16.msra.mxu0 %v181
  %242 = vmatprep.subr.bf16.mxu0 0
  %243 = vmatpush2.bf16.msra.mxu0 %v180
  %244 = vmatprep.subr.bf16.mxu0 0
  %245 = vmatpush2.bf16.msra.mxu0 %v179
  %246 = vmatprep.mubr.bf16.mxu0 %v90
  %247 = vmatmul.mubr.bf16.gmra.mxu0 %v89
  %v248 = vpop.f32.mrf.mxu0
  %v249 = vadd.f32 %v67, %v248
  %v250 = vpop.f32.mrf.mxu0
  %v251 = vpop.f32.mrf.mxu0
  %v252 = vadd.f32 %v67, %v251
  %v253 = vpop.f32.mrf.mxu0
  %254 = vmatprep.mubr.bf16.mxu0 %v93
  %255 = vmatmul.mubr.bf16.gmra.mxu0 %v92
  %v256 = vpop.f32.mrf.mxu0
  %v257 = vadd.f32 %v67, %v256
  %v258 = vpop.f32.mrf.mxu0
  %v259 = vpop.f32.mrf.mxu0
  %v260 = vadd.f32 %v67, %v259
  %v261 = vpop.f32.mrf.mxu0
  %262 = vdwg.mxu0
  %263 = vmatprep.subr.bf16.mxu0 0
  %264 = vmatpush1.bf16.msra.mxu0 0
  %265 = vmatprep.subr.bf16.mxu0 0
  %266 = vmatpush1.bf16.msra.mxu0 0
  %267 = vmatprep.subr.bf16.mxu0 0
  %268 = vmatpush1.bf16.msra.mxu0 0
  %269 = vmatprep.subr.bf16.mxu0 0
  %270 = vmatpush1.bf16.msra.mxu0 0
  %271 = vmatprep.subr.bf16.mxu0 0
  %272 = vmatpush1.bf16.msra.mxu0 0
  %273 = vmatprep.subr.bf16.mxu0 0
  %274 = vmatpush1.bf16.msra.mxu0 0
  %275 = vmatprep.subr.bf16.mxu0 0
  %276 = vmatpush1.bf16.msra.mxu0 %v188
  %277 = vmatprep.subr.bf16.mxu0 0
  %278 = vmatpush1.bf16.msra.mxu0 %v187
  %279 = vmatprep.subr.bf16.mxu0 0
  %280 = vmatpush2.bf16.msra.mxu0 0
  %281 = vmatprep.subr.bf16.mxu0 0
  %282 = vmatpush2.bf16.msra.mxu0 0
  %283 = vmatprep.subr.bf16.mxu0 0
  %284 = vmatpush2.bf16.msra.mxu0 0
  %285 = vmatprep.subr.bf16.mxu0 0
  %286 = vmatpush2.bf16.msra.mxu0 0
  %287 = vmatprep.subr.bf16.mxu0 0
  %288 = vmatpush2.bf16.msra.mxu0 0
  %289 = vmatprep.subr.bf16.mxu0 0
  %290 = vmatpush2.bf16.msra.mxu0 0
  %291 = vmatprep.subr.bf16.mxu0 0
  %292 = vmatpush2.bf16.msra.mxu0 0
  %293 = vmatprep.subr.bf16.mxu0 0
  %294 = vmatpush2.bf16.msra.mxu0 0
  %295 = vmatprep.mubr.bf16.mxu0 0
  %296 = vmatmul.mubr.bf16.gmra.mxu0 %v209
  %v297 = vpop.f32.mrf.mxu0
  %v298 = vadd.f32 %v249, %v297
  %v299 = vpop.f32.mrf.mxu0
  %v300 = vpop.f32.mrf.mxu0
  %v301 = vadd.f32 %v252, %v300
  %v302 = vpop.f32.mrf.mxu0
  %303 = vmatprep.mubr.bf16.mxu0 0
  %304 = vmatmul.mubr.bf16.gmra.mxu0 %v212
  %v305 = vpop.f32.mrf.mxu0
  %v306 = vadd.f32 %v257, %v305
  %v307 = vpop.f32.mrf.mxu0
  %v308 = vpop.f32.mrf.mxu0
  %v309 = vadd.f32 %v260, %v308
  %v310 = vpop.f32.mrf.mxu0
  %311 = vdwg.mxu0
  %v312 = vld [vmem:[%s3] sm:$0xff]
  %v313 = vld [vmem:[%s3 + $0x8] sm:$0xff]
  %v314 = vld [vmem:[%s3 + $0x10] sm:$0xff]
  %v315 = vld [vmem:[%s3 + $0x18] sm:$0xff]
  %v316 = vadd.f32 %v298, %v312
  %v317 = vadd.f32 %v301, %v313
  %v318 = vadd.f32 %v306, %v314
  %v319 = vadd.f32 %v309, %v315
  %v320 = vmax.f32 %v316, 0.0
  %v321 = vmax.f32 %v317, 0.0
  %v322 = vmax.f32 %v318, 0.0
  %v323 = vmax.f32 %v319, 0.0
  %324 = vst [vmem:[%s4] sm:$0xff] %v320
  %325 = vst [vmem:[%s4 + $0x8] sm:$0xff] %v321
  %326 = vst [vmem:[%s4 + $0x10] sm:$0xff] %v322
  %327 = vst [vmem:[%s4 + $0x18] sm:$0xff] %v323
  // Predicated region
  $region18: #{resnet_forward.20} parent=0 // pred_check
    _
  $region19: #{resnet_forward.20} parent=0 // pred_check_branch
    %329 = sbr.rel (0) target = $region21
  $region20: #{resnet_forward.20} parent=0 // pred_region
    _
  $region21: #{resnet_forward.20} parent=0 // pred_fallthru
    _
  // Predicated region
  $region22: #{resnet_forward.20} parent=0 // pred_check
    _
  $region23: #{resnet_forward.20} parent=0 // pred_check_branch
    %331 = sbr.rel (0) target = $region25
  $region24: #{resnet_forward.20} parent=0 // pred_region
    _
  $region25: #{resnet_forward.20} parent=0 // pred_fallthru
    _

// kernel: resnet_forward.21
$region0: #{resnet_forward.21}
  #allocation0 [shape = 'u32[]', space=smem, size = 0x4, offset = 0x4, fixed_abs, tag = 'smem constant byte address 0x4 - core index']
  #allocation1 [shape = 'u32[144,128]{1,0:T(1,128)}', space=vmem, size = 0x12000, scoped, tag = 'internal scratch']
  %s0 = inlined_call_operand.vmem [shape: bf16[8,288], index: 0, kind: input, shape index: {}]
  %s1 = inlined_call_operand.vmem [shape: bf16[288,128], index: 1, kind: input, shape index: {}]
  %s2 = inlined_call_operand.vmem [shape: f32[1,128], index: 2, kind: input, shape index: {}]
  %s3 = inlined_call_operand.vmem [shape: f32[8,128], index: 3, kind: output, shape index: {}]
  %s4 = sld [smem:[#allocation0]]
  $region22: #{resnet_forward.21} parent=0
    _
  %s6 = ssub.s32 1, %s4
  %s7 = scalar_select 0, %s6, %s4
  // Predicated region
  $region2: #{resnet_forward.21} parent=0 // pred_check
    _
  $region3: #{resnet_forward.21} parent=0 // pred_check_branch
    %9 = sbr.rel (0) target = $region5
  $region4: #{resnet_forward.21} parent=0 // pred_region
    _
  $region5: #{resnet_forward.21} parent=0 // pred_fallthru
    _
  // Predicated region
  $region6: #{resnet_forward.21} parent=0 // pred_check
    _
  $region7: #{resnet_forward.21} parent=0 // pred_check_branch
    %11 = sbr.rel (0) target = $region9
  $region8: #{resnet_forward.21} parent=0 // pred_region
    _
  $region9: #{resnet_forward.21} parent=0 // pred_fallthru
    _
  // Predicated region
  $region10: #{resnet_forward.21} parent=0 // pred_check
    _
  $region11: #{resnet_forward.21} parent=0 // pred_check_branch
    %13 = sbr.rel (0) target = $region13
  $region12: #{resnet_forward.21} parent=0 // pred_region
    _
  $region13: #{resnet_forward.21} parent=0 // pred_fallthru
    _
  %v15 = vld [vmem:[%s0] sm:$0xff]
  %v16 = vld [vmem:[%s0 + $0x8] sm:$0xf]
  %v17 = vld [vmem:[%s1] sm:$0xf]
  %v18 = vld [vmem:[%s1 + $0x4] sm:$0xf]
  %v19 = vld [vmem:[%s1 + $0x8] sm:$0xf]
  %v20 = vld [vmem:[%s1 + $0xc] sm:$0xf]
  %v21 = vld [vmem:[%s1 + $0x10] sm:$0xf]
  %v22 = vld [vmem:[%s1 + $0x14] sm:$0xf]
  %v23 = vld [vmem:[%s1 + $0x18] sm:$0xf]
  %v24 = vld [vmem:[%s1 + $0x1c] sm:$0xf]
  %v25 = vld [vmem:[%s1 + $0x20] sm:$0xf]
  %v26 = vld [vmem:[%s1 + $0x24] sm:$0xf]
  %v27 = vld [vmem:[%s1 + $0x28] sm:$0xf]
  %v28 = vld [vmem:[%s1 + $0x2c] sm:$0xf]
  %v29 = vld [vmem:[%s1 + $0x30] sm:$0xf]
  %v30 = vld [vmem:[%s1 + $0x34] sm:$0xf]
  %v31 = vld [vmem:[%s1 + $0x38] sm:$0xf]
  %v32 = vld [vmem:[%s1 + $0x3c] sm:$0xf]
  %v33 = vld [vmem:[%s1 + $0x40] sm:$0xf]
  %v34 = vld [vmem:[%s1 + $0x44] sm:$0xf]
  %v35 = vld [vmem:[%s1 + $0x48] sm:$0xf]
  %v36 = vld [vmem:[%s1 + $0x4c] sm:$0xf]
  %v37 = vld [vmem:[%s1 + $0x50] sm:$0xf]
  %v38 = vld [vmem:[%s1 + $0x54] sm:$0xf]
  %v39 = vld [vmem:[%s1 + $0x58] sm:$0xf]
  %v40 = vld [vmem:[%s1 + $0x5c] sm:$0xf]
  %v41 = vld [vmem:[%s1 + $0x60] sm:$0xf]
  %v42 = vld [vmem:[%s1 + $0x64] sm:$0xf]
  %v43 = vld [vmem:[%s1 + $0x68] sm:$0xf]
  %v44 = vld [vmem:[%s1 + $0x6c] sm:$0xf]
  %v45 = vld [vmem:[%s1 + $0x70] sm:$0xf]
  %v46 = vld [vmem:[%s1 + $0x74] sm:$0xf]
  %v47 = vld [vmem:[%s1 + $0x78] sm:$0xf]
  %v48 = vld [vmem:[%s1 + $0x7c] sm:$0xf]
  %v49 = vld [vmem:[%s1 + $0x80] sm:$0xf]
  %v50 = vld [vmem:[%s1 + $0x84] sm:$0xf]
  %v51 = vld [vmem:[%s1 + $0x88] sm:$0xf]
  %v52 = vld [vmem:[%s1 + $0x8c] sm:$0xf]
  %v53 = vld [vmem:[%s2] sm:$0x1]
  %v55 = vlaneseq
  %v56 = vshrl.u32 %v55, 7
  %v57 = vsub.s32 0, %v56
  %v58 = vrot.slane %v53, %v57
  %v62 = vunpack.c.l.b16 %v15
  %v63 = vunpack.c.h.b16 %v15
  %v64 = vunpack.c.l.b16 %v16
  %v65 = vpack.c.b16 %v62, %v62
  %v66 = vpack.c.b16 %v63, %v63
  %v67 = vpack.c.b16 %v64, %v64
  %v106 = vunpack.c.l.b16 %v17
  %v107 = vunpack.c.l.b16 %v18
  %v108 = vunpack.c.l.b16 %v19
  %v109 = vunpack.c.l.b16 %v20
  %v110 = vunpack.c.l.b16 %v21
  %v111 = vunpack.c.l.b16 %v22
  %v112 = vunpack.c.l.b16 %v23
  %v113 = vunpack.c.l.b16 %v24
  %v114 = vunpack.c.l.b16 %v25
  %v115 = vunpack.c.l.b16 %v26
  %v116 = vunpack.c.l.b16 %v27
  %v117 = vunpack.c.l.b16 %v28
  %v118 = vunpack.c.l.b16 %v29
  %v119 = vunpack.c.l.b16 %v30
  %v120 = vunpack.c.l.b16 %v31
  %v121 = vunpack.c.l.b16 %v32
  %v122 = vunpack.c.l.b16 %v33
  %v123 = vunpack.c.l.b16 %v34
  %v124 = vunpack.c.l.b16 %v35
  %v125 = vunpack.c.l.b16 %v36
  %v126 = vunpack.c.l.b16 %v37
  %v127 = vunpack.c.l.b16 %v38
  %v128 = vunpack.c.l.b16 %v39
  %v129 = vunpack.c.l.b16 %v40
  %v130 = vunpack.c.l.b16 %v41
  %v131 = vunpack.c.l.b16 %v42
  %v132 = vunpack.c.l.b16 %v43
  %v133 = vunpack.c.l.b16 %v44
  %v134 = vunpack.c.l.b16 %v45
  %v135 = vunpack.c.l.b16 %v46
  %v136 = vunpack.c.l.b16 %v47
  %v137 = vunpack.c.l.b16 %v48
  %v138 = vunpack.c.l.b16 %v49
  %v139 = vunpack.c.l.b16 %v50
  %v140 = vunpack.c.l.b16 %v51
  %v141 = vunpack.c.l.b16 %v52
  %v142 = vpack.c.b16 %v107, %v106
  %v143 = vpack.c.b16 %v109, %v108
  %v144 = vpack.c.b16 %v111, %v110
  %v145 = vpack.c.b16 %v113, %v112
  %v146 = vpack.c.b16 %v115, %v114
  %v147 = vpack.c.b16 %v117, %v116
  %v148 = vpack.c.b16 %v119, %v118
  %v149 = vpack.c.b16 %v121, %v120
  %v150 = vpack.c.b16 %v123, %v122
  %v151 = vpack.c.b16 %v125, %v124
  %v152 = vpack.c.b16 %v127, %v126
  %v153 = vpack.c.b16 %v129, %v128
  %v154 = vpack.c.b16 %v131, %v130
  %v155 = vpack.c.b16 %v133, %v132
  %v156 = vpack.c.b16 %v135, %v134
  %v157 = vpack.c.b16 %v137, %v136
  %v158 = vpack.c.b16 %v139, %v138
  %v159 = vpack.c.b16 %v141, %v140
  %vm178 = vcmask 261120
  %v180 = vsel %vm178, %v67, 0
  %182 = vmatprep.subr.bf16.mxu0 0
  %183 = vmatpush1.bf16.msra.mxu0 %v149
  %184 = vmatprep.subr.bf16.mxu0 0
  %185 = vmatpush1.bf16.msra.mxu0 %v148
  %186 = vmatprep.subr.bf16.mxu0 0
  %187 = vmatpush1.bf16.msra.mxu0 %v147
  %188 = vmatprep.subr.bf16.mxu0 0
  %189 = vmatpush1.bf16.msra.mxu0 %v146
  %190 = vmatprep.subr.bf16.mxu0 0
  %191 = vmatpush1.bf16.msra.mxu0 %v145
  %192 = vmatprep.subr.bf16.mxu0 0
  %193 = vmatpush1.bf16.msra.mxu0 %v144
  %194 = vmatprep.subr.bf16.mxu0 0
  %195 = vmatpush1.bf16.msra.mxu0 %v143
  %196 = vmatprep.subr.bf16.mxu0 0
  %197 = vmatpush1.bf16.msra.mxu0 %v142
  %198 = vmatprep.subr.bf16.mxu0 0
  %199 = vmatpush2.bf16.msra.mxu0 %v157
  %200 = vmatprep.subr.bf16.mxu0 0
  %201 = vmatpush2.bf16.msra.mxu0 %v156
  %202 = vmatprep.subr.bf16.mxu0 0
  %203 = vmatpush2.bf16.msra.mxu0 %v155
  %204 = vmatprep.subr.bf16.mxu0 0
  %205 = vmatpush2.bf16.msra.mxu0 %v154
  %206 = vmatprep.subr.bf16.mxu0 0
  %207 = vmatpush2.bf16.msra.mxu0 %v153
  %208 = vmatprep.subr.bf16.mxu0 0
  %209 = vmatpush2.bf16.msra.mxu0 %v152
  %210 = vmatprep.subr.bf16.mxu0 0
  %211 = vmatpush2.bf16.msra.mxu0 %v151
  %212 = vmatprep.subr.bf16.mxu0 0
  %213 = vmatpush2.bf16.msra.mxu0 %v150
  %214 = vmatprep.mubr.bf16.mxu0 %v66
  %215 = vmatmul.mubr.bf16.gmra.mxu0 %v65
  %v216 = vpop.f32.mrf.mxu0
  %v217 = vadd.f32 %v58, %v216
  %v218 = vpop.f32.mrf.mxu0
  %v219 = vpop.f32.mrf.mxu0
  %v220 = vpop.f32.mrf.mxu0
  %221 = vdwg.mxu0
  %222 = vmatprep.subr.bf16.mxu0 0
  %223 = vmatpush1.bf16.msra.mxu0 0
  %224 = vmatprep.subr.bf16.mxu0 0
  %225 = vmatpush1.bf16.msra.mxu0 0
  %226 = vmatprep.subr.bf16.mxu0 0
  %227 = vmatpush1.bf16.msra.mxu0 0
  %228 = vmatprep.subr.bf16.mxu0 0
  %229 = vmatpush1.bf16.msra.mxu0 0
  %230 = vmatprep.subr.bf16.mxu0 0
  %231 = vmatpush1.bf16.msra.mxu0 0
  %232 = vmatprep.subr.bf16.mxu0 0
  %233 = vmatpush1.bf16.msra.mxu0 0
  %234 = vmatprep.subr.bf16.mxu0 0
  %235 = vmatpush1.bf16.msra.mxu0 %v159
  %236 = vmatprep.subr.bf16.mxu0 0
  %237 = vmatpush1.bf16.msra.mxu0 %v158
  %238 = vmatprep.subr.bf16.mxu0 0
  %239 = vmatpush2.bf16.msra.mxu0 0
  %240 = vmatprep.subr.bf16.mxu0 0
  %241 = vmatpush2.bf16.msra.mxu0 0
  %242 = vmatprep.subr.bf16.mxu0 0
  %243 = vmatpush2.bf16.msra.mxu0 0
  %244 = vmatprep.subr.bf16.mxu0 0
  %245 = vmatpush2.bf16.msra.mxu0 0
  %246 = vmatprep.subr.bf16.mxu0 0
  %247 = vmatpush2.bf16.msra.mxu0 0
  %248 = vmatprep.subr.bf16.mxu0 0
  %249 = vmatpush2.bf16.msra.mxu0 0
  %250 = vmatprep.subr.bf16.mxu0 0
  %251 = vmatpush2.bf16.msra.mxu0 0
  %252 = vmatprep.subr.bf16.mxu0 0
  %253 = vmatpush2.bf16.msra.mxu0 0
  %254 = vmatprep.mubr.bf16.mxu0 0
  %255 = vmatmul.mubr.bf16.gmra.mxu0 %v180
  %v256 = vpop.f32.mrf.mxu0
  %v257 = vadd.f32 %v217, %v256
  %v258 = vpop.f32.mrf.mxu0
  %v259 = vpop.f32.mrf.mxu0
  %v260 = vpop.f32.mrf.mxu0
  %261 = vdwg.mxu0
  %v262 = vmax.f32 %v257, 0.0
  %263 = vst [vmem:[%s3] sm:$0xff] %v262
  // Predicated region
  $region14: #{resnet_forward.21} parent=0 // pred_check
    _
  $region15: #{resnet_forward.21} parent=0 // pred_check_branch
    %265 = sbr.rel (0) target = $region17
  $region16: #{resnet_forward.21} parent=0 // pred_region
    _
  $region17: #{resnet_forward.21} parent=0 // pred_fallthru
    _
  // Predicated region
  $region18: #{resnet_forward.21} parent=0 // pred_check
    _
  $region19: #{resnet_forward.21} parent=0 // pred_check_branch
    %267 = sbr.rel (0) target = $region21
  $region20: #{resnet_forward.21} parent=0 // pred_region
    _
  $region21: #{resnet_forward.21} parent=0 // pred_fallthru
    _

// kernel: resnet_forward.22
$region0: #{resnet_forward.22}
  #allocation0 [shape = 'u32[]', space=smem, size = 0x4, offset = 0x4, fixed_abs, tag = 'smem constant byte address 0x4 - core index']
  #allocation1 [shape = 'u32[144,128]{1,0:T(1,128)}', space=vmem, size = 0x12000, scoped, tag = 'internal scratch']
  %s0 = inlined_call_operand.vmem [shape: bf16[8,32], index: 0, kind: input, shape index: {}]
  %s1 = inlined_call_operand.vmem [shape: bf16[32,128], index: 1, kind: input, shape index: {}]
  %s2 = inlined_call_operand.vmem [shape: f32[1,128], index: 2, kind: input, shape index: {}]
  %s3 = inlined_call_operand.vmem [shape: f32[8,128], index: 3, kind: output, shape index: {}]
  %s4 = sld [smem:[#allocation0]]
  $region22: #{resnet_forward.22} parent=0
    _
  %s6 = ssub.s32 1, %s4
  %s7 = scalar_select 0, %s6, %s4
  // Predicated region
  $region2: #{resnet_forward.22} parent=0 // pred_check
    _
  $region3: #{resnet_forward.22} parent=0 // pred_check_branch
    %9 = sbr.rel (0) target = $region5
  $region4: #{resnet_forward.22} parent=0 // pred_region
    _
  $region5: #{resnet_forward.22} parent=0 // pred_fallthru
    _
  // Predicated region
  $region6: #{resnet_forward.22} parent=0 // pred_check
    _
  $region7: #{resnet_forward.22} parent=0 // pred_check_branch
    %11 = sbr.rel (0) target = $region9
  $region8: #{resnet_forward.22} parent=0 // pred_region
    _
  $region9: #{resnet_forward.22} parent=0 // pred_fallthru
    _
  // Predicated region
  $region10: #{resnet_forward.22} parent=0 // pred_check
    _
  $region11: #{resnet_forward.22} parent=0 // pred_check_branch
    %13 = sbr.rel (0) target = $region13
  $region12: #{resnet_forward.22} parent=0 // pred_region
    _
  $region13: #{resnet_forward.22} parent=0 // pred_fallthru
    _
  %v15 = vld [vmem:[%s0] sm:$0xf]
  %v16 = vld [vmem:[%s1] sm:$0xf]
  %v17 = vld [vmem:[%s1 + $0x4] sm:$0xf]
  %v18 = vld [vmem:[%s1 + $0x8] sm:$0xf]
  %v19 = vld [vmem:[%s1 + $0xc] sm:$0xf]
  %v20 = vld [vmem:[%s2] sm:$0x1]
  %v22 = vlaneseq
  %v23 = vshrl.u32 %v22, 7
  %v24 = vsub.s32 0, %v23
  %v25 = vrot.slane %v20, %v24
  %v31 = vunpack.c.l.b16 %v16
  %v32 = vunpack.c.l.b16 %v17
  %v33 = vunpack.c.l.b16 %v18
  %v34 = vunpack.c.l.b16 %v19
  %v35 = vpack.c.b16 %v32, %v31
  %v36 = vpack.c.b16 %v34, %v33
  %vm39 = vcmask 261120
  %v41 = vsel %vm39, %v15, 0
  %43 = vmatprep.subr.bf16.mxu0 0
  %44 = vmatpush1.bf16.msra.mxu0 0
  %45 = vmatprep.subr.bf16.mxu0 0
  %46 = vmatpush1.bf16.msra.mxu0 0
  %47 = vmatprep.subr.bf16.mxu0 0
  %48 = vmatpush1.bf16.msra.mxu0 0
  %49 = vmatprep.subr.bf16.mxu0 0
  %50 = vmatpush1.bf16.msra.mxu0 0
  %51 = vmatprep.subr.bf16.mxu0 0
  %52 = vmatpush1.bf16.msra.mxu0 0
  %53 = vmatprep.subr.bf16.mxu0 0
  %54 = vmatpush1.bf16.msra.mxu0 0
  %55 = vmatprep.subr.bf16.mxu0 0
  %56 = vmatpush1.bf16.msra.mxu0 %v36
  %57 = vmatprep.subr.bf16.mxu0 0
  %58 = vmatpush1.bf16.msra.mxu0 %v35
  %59 = vmatprep.subr.bf16.mxu0 0
  %60 = vmatpush2.bf16.msra.mxu0 0
  %61 = vmatprep.subr.bf16.mxu0 0
  %62 = vmatpush2.bf16.msra.mxu0 0
  %63 = vmatprep.subr.bf16.mxu0 0
  %64 = vmatpush2.bf16.msra.mxu0 0
  %65 = vmatprep.subr.bf16.mxu0 0
  %66 = vmatpush2.bf16.msra.mxu0 0
  %67 = vmatprep.subr.bf16.mxu0 0
  %68 = vmatpush2.bf16.msra.mxu0 0
  %69 = vmatprep.subr.bf16.mxu0 0
  %70 = vmatpush2.bf16.msra.mxu0 0
  %71 = vmatprep.subr.bf16.mxu0 0
  %72 = vmatpush2.bf16.msra.mxu0 0
  %73 = vmatprep.subr.bf16.mxu0 0
  %74 = vmatpush2.bf16.msra.mxu0 0
  %75 = vmatprep.mubr.bf16.mxu0 0
  %76 = vmatmul.mubr.bf16.gmra.mxu0 %v41
  %v77 = vpop.f32.mrf.mxu0
  %v78 = vadd.f32 %v25, %v77
  %v79 = vpop.f32.mrf.mxu0
  %v80 = vpop.f32.mrf.mxu0
  %v81 = vpop.f32.mrf.mxu0
  %82 = vdwg.mxu0
  %83 = vst [vmem:[%s3] sm:$0xff] %v78
  // Predicated region
  $region14: #{resnet_forward.22} parent=0 // pred_check
    _
  $region15: #{resnet_forward.22} parent=0 // pred_check_branch
    %85 = sbr.rel (0) target = $region17
  $region16: #{resnet_forward.22} parent=0 // pred_region
    _
  $region17: #{resnet_forward.22} parent=0 // pred_fallthru
    _
  // Predicated region
  $region18: #{resnet_forward.22} parent=0 // pred_check
    _
  $region19: #{resnet_forward.22} parent=0 // pred_check_branch
    %87 = sbr.rel (0) target = $region21
  $region20: #{resnet_forward.22} parent=0 // pred_region
    _
  $region21: #{resnet_forward.22} parent=0 // pred_fallthru
    _

// kernel: resnet_forward.23
$region0: #{resnet_forward.23}
  #allocation0 [shape = 'u32[]', space=smem, size = 0x4, offset = 0x4, fixed_abs, tag = 'smem constant byte address 0x4 - core index']
  #allocation1 [shape = 'u32[144,128]{1,0:T(1,128)}', space=vmem, size = 0x12000, scoped, tag = 'internal scratch']
  %s0 = inlined_call_operand.vmem [shape: bf16[8,576], index: 0, kind: input, shape index: {}]
  %s1 = inlined_call_operand.vmem [shape: bf16[576,128], index: 1, kind: input, shape index: {}]
  %s2 = inlined_call_operand.vmem [shape: f32[1,128], index: 2, kind: input, shape index: {}]
  %s3 = inlined_call_operand.vmem [shape: f32[8,128], index: 3, kind: input, shape index: {}]
  %s4 = inlined_call_operand.vmem [shape: f32[2,8], index: 4, kind: input, shape index: {}]
  %s5 = inlined_call_operand.vmem [shape: f32[128,128], index: 5, kind: input, shape index: {}]
  %s6 = inlined_call_operand.vmem [shape: f32[1,128], index: 6, kind: input, shape index: {}]
  %s7 = inlined_call_operand.hbm [shape: f32[2,128], index: 7, kind: output, shape index: {}]
  %s8 = sld [smem:[#allocation0]]
  $region38: #{resnet_forward.23} parent=0
    _
  %s10 = ssub.s32 1, %s8
  %s11 = scalar_select 0, %s10, %s8
  $region1: #{resnet_forward.23} parent=0
    #allocation2 [shape = 'u8[1024]{0}', space=vmem, size = 0x400, scoped, tag = 'output window, operand 0, single buffered']
    #allocation3 [shape = 's32[1]{0}', space=sflag, size = 0x4, scoped, tag = 'scoped memory for resnet_forward.23']
    %12 = vsyncpa [#allocation3], 0
    // Predicated region
    $region2: #{resnet_forward.23} parent=1 // pred_check
      _
    $region3: #{resnet_forward.23} parent=1 // pred_check_branch
      %14 = sbr.rel (0) target = $region5
    $region4: #{resnet_forward.23} parent=1 // pred_region
      _
    $region5: #{resnet_forward.23} parent=1 // pred_fallthru
      _
    // Predicated region
    $region6: #{resnet_forward.23} parent=1 // pred_check
      _
    $region7: #{resnet_forward.23} parent=1 // pred_check_branch
      %16 = sbr.rel (0) target = $region9
    $region8: #{resnet_forward.23} parent=1 // pred_region
      _
    $region9: #{resnet_forward.23} parent=1 // pred_fallthru
      _
    // Predicated region
    $region10: #{resnet_forward.23} parent=1 // pred_check
      _
    $region11: #{resnet_forward.23} parent=1 // pred_check_branch
      %18 = sbr.rel (0) target = $region13
    $region12: #{resnet_forward.23} parent=1 // pred_region
      _
    $region13: #{resnet_forward.23} parent=1 // pred_fallthru
      _
    // Predicated region
    $region14: #{resnet_forward.23} parent=1 // pred_check
      _
    $region15: #{resnet_forward.23} parent=1 // pred_check_branch
      %20 = sbr.rel (0) target = $region17
    $region16: #{resnet_forward.23} parent=1 // pred_region
      _
    $region17: #{resnet_forward.23} parent=1 // pred_fallthru
      _
    // Predicated region
    $region18: #{resnet_forward.23} parent=1 // pred_check
      _
    $region19: #{resnet_forward.23} parent=1 // pred_check_branch
      %22 = sbr.rel (0) target = $region21
    $region20: #{resnet_forward.23} parent=1 // pred_region
      _
    $region21: #{resnet_forward.23} parent=1 // pred_fallthru
      _
    // Predicated region
    $region22: #{resnet_forward.23} parent=1 // pred_check
      _
    $region23: #{resnet_forward.23} parent=1 // pred_check_branch
      %24 = sbr.rel (0) target = $region25
    $region24: #{resnet_forward.23} parent=1 // pred_region
      _
    $region25: #{resnet_forward.23} parent=1 // pred_fallthru
      _
    // Predicated region
    $region26: #{resnet_forward.23} parent=1 // pred_check
      _
    $region27: #{resnet_forward.23} parent=1 // pred_check_branch
      %26 = sbr.rel (0) target = $region29
    $region28: #{resnet_forward.23} parent=1 // pred_region
      _
    $region29: #{resnet_forward.23} parent=1 // pred_fallthru
      _
    %v28 = vld [vmem:[%s0] sm:$0xff]
    %v29 = vld [vmem:[%s0 + $0x8] sm:$0xff]
    %v30 = vld [vmem:[%s0 + $0x10] sm:$0xf]
    %v31 = vld [vmem:[%s1] sm:$0xf]
    %v32 = vld [vmem:[%s1 + $0x4] sm:$0xf]
    %v33 = vld [vmem:[%s1 + $0x8] sm:$0xf]
    %v34 = vld [vmem:[%s1 + $0xc] sm:$0xf]
    %v35 = vld [vmem:[%s1 + $0x10] sm:$0xf]
    %v36 = vld [vmem:[%s1 + $0x14] sm:$0xf]
    %v37 = vld [vmem:[%s1 + $0x18] sm:$0xf]
    %v38 = vld [vmem:[%s1 + $0x1c] sm:$0xf]
    %v39 = vld [vmem:[%s1 + $0x20] sm:$0xf]
    %v40 = vld [vmem:[%s1 + $0x24] sm:$0xf]
    %v41 = vld [vmem:[%s1 + $0x28] sm:$0xf]
    %v42 = vld [vmem:[%s1 + $0x2c] sm:$0xf]
    %v43 = vld [vmem:[%s1 + $0x30] sm:$0xf]
    %v44 = vld [vmem:[%s1 + $0x34] sm:$0xf]
    %v45 = vld [vmem:[%s1 + $0x38] sm:$0xf]
    %v46 = vld [vmem:[%s1 + $0x3c] sm:$0xf]
    %v47 = vld [vmem:[%s1 + $0x40] sm:$0xf]
    %v48 = vld [vmem:[%s1 + $0x44] sm:$0xf]
    %v49 = vld [vmem:[%s1 + $0x48] sm:$0xf]
    %v50 = vld [vmem:[%s1 + $0x4c] sm:$0xf]
    %v51 = vld [vmem:[%s1 + $0x50] sm:$0xf]
    %v52 = vld [vmem:[%s1 + $0x54] sm:$0xf]
    %v53 = vld [vmem:[%s1 + $0x58] sm:$0xf]
    %v54 = vld [vmem:[%s1 + $0x5c] sm:$0xf]
    %v55 = vld [vmem:[%s1 + $0x60] sm:$0xf]
    %v56 = vld [vmem:[%s1 + $0x64] sm:$0xf]
    %v57 = vld [vmem:[%s1 + $0x68] sm:$0xf]
    %v58 = vld [vmem:[%s1 + $0x6c] sm:$0xf]
    %v59 = vld [vmem:[%s1 + $0x70] sm:$0xf]
    %v60 = vld [vmem:[%s1 + $0x74] sm:$0xf]
    %v61 = vld [vmem:[%s1 + $0x78] sm:$0xf]
    %v62 = vld [vmem:[%s1 + $0x7c] sm:$0xf]
    %v63 = vld [vmem:[%s1 + $0x80] sm:$0xf]
    %v64 = vld [vmem:[%s1 + $0x84] sm:$0xf]
    %v65 = vld [vmem:[%s1 + $0x88] sm:$0xf]
    %v66 = vld [vmem:[%s1 + $0x8c] sm:$0xf]
    %v67 = vld [vmem:[%s1 + $0x90] sm:$0xf]
    %v68 = vld [vmem:[%s1 + $0x94] sm:$0xf]
    %v69 = vld [vmem:[%s1 + $0x98] sm:$0xf]
    %v70 = vld [vmem:[%s1 + $0x9c] sm:$0xf]
    %v71 = vld [vmem:[%s1 + $0xa0] sm:$0xf]
    %v72 = vld [vmem:[%s1 + $0xa4] sm:$0xf]
    %v73 = vld [vmem:[%s1 + $0xa8] sm:$0xf]
    %v74 = vld [vmem:[%s1 + $0xac] sm:$0xf]
    %v75 = vld [vmem:[%s1 + $0xb0] sm:$0xf]
    %v76 = vld [vmem:[%s1 + $0xb4] sm:$0xf]
    %v77 = vld [vmem:[%s1 + $0xb8] sm:$0xf]
    %v78 = vld [vmem:[%s1 + $0xbc] sm:$0xf]
    %v79 = vld [vmem:[%s1 + $0xc0] sm:$0xf]
    %v80 = vld [vmem:[%s1 + $0xc4] sm:$0xf]
    %v81 = vld [vmem:[%s1 + $0xc8] sm:$0xf]
    %v82 = vld [vmem:[%s1 + $0xcc] sm:$0xf]
    %v83 = vld [vmem:[%s1 + $0xd0] sm:$0xf]
    %v84 = vld [vmem:[%s1 + $0xd4] sm:$0xf]
    %v85 = vld [vmem:[%s1 + $0xd8] sm:$0xf]
    %v86 = vld [vmem:[%s1 + $0xdc] sm:$0xf]
    %v87 = vld [vmem:[%s1 + $0xe0] sm:$0xf]
    %v88 = vld [vmem:[%s1 + $0xe4] sm:$0xf]
    %v89 = vld [vmem:[%s1 + $0xe8] sm:$0xf]
    %v90 = vld [vmem:[%s1 + $0xec] sm:$0xf]
    %v91 = vld [vmem:[%s1 + $0xf0] sm:$0xf]
    %v92 = vld [vmem:[%s1 + $0xf4] sm:$0xf]
    %v93 = vld [vmem:[%s1 + $0xf8] sm:$0xf]
    %v94 = vld [vmem:[%s1 + $0xfc] sm:$0xf]
    %v95 = vld [vmem:[%s1 + $0x100] sm:$0xf]
    %v96 = vld [vmem:[%s1 + $0x104] sm:$0xf]
    %v97 = vld [vmem:[%s1 + $0x108] sm:$0xf]
    %v98 = vld [vmem:[%s1 + $0x10c] sm:$0xf]
    %v99 = vld [vmem:[%s1 + $0x110] sm:$0xf]
    %v100 = vld [vmem:[%s1 + $0x114] sm:$0xf]
    %v101 = vld [vmem:[%s1 + $0x118] sm:$0xf]
    %v102 = vld [vmem:[%s1 + $0x11c] sm:$0xf]
    %v103 = vld [vmem:[%s2] sm:$0x1]
    %v105 = vlaneseq
    %v106 = vshrl.u32 %v105, 7
    %v107 = vsub.s32 0, %v106
    %v108 = vrot.slane %v103, %v107
    %v113 = vunpack.c.l.b16 %v28
    %v114 = vunpack.c.h.b16 %v28
    %v115 = vunpack.c.l.b16 %v29
    %v116 = vunpack.c.h.b16 %v29
    %v117 = vunpack.c.l.b16 %v30
    %v118 = vpack.c.b16 %v113, %v113
    %v119 = vpack.c.b16 %v114, %v114
    %v120 = vpack.c.b16 %v115, %v115
    %v121 = vpack.c.b16 %v116, %v116
    %v122 = vpack.c.b16 %v117, %v117
    %v199 = vunpack.c.l.b16 %v31
    %v200 = vunpack.c.l.b16 %v32
    %v201 = vunpack.c.l.b16 %v33
    %v202 = vunpack.c.l.b16 %v34
    %v203 = vunpack.c.l.b16 %v35
    %v204 = vunpack.c.l.b16 %v36
    %v205 = vunpack.c.l.b16 %v37
    %v206 = vunpack.c.l.b16 %v38
    %v207 = vunpack.c.l.b16 %v39
    %v208 = vunpack.c.l.b16 %v40
    %v209 = vunpack.c.l.b16 %v41
    %v210 = vunpack.c.l.b16 %v42
    %v211 = vunpack.c.l.b16 %v43
    %v212 = vunpack.c.l.b16 %v44
    %v213 = vunpack.c.l.b16 %v45
    %v214 = vunpack.c.l.b16 %v46
    %v215 = vunpack.c.l.b16 %v47
    %v216 = vunpack.c.l.b16 %v48
    %v217 = vunpack.c.l.b16 %v49
    %v218 = vunpack.c.l.b16 %v50
    %v219 = vunpack.c.l.b16 %v51
    %v220 = vunpack.c.l.b16 %v52
    %v221 = vunpack.c.l.b16 %v53
    %v222 = vunpack.c.l.b16 %v54
    %v223 = vunpack.c.l.b16 %v55
    %v224 = vunpack.c.l.b16 %v56
    %v225 = vunpack.c.l.b16 %v57
    %v226 = vunpack.c.l.b16 %v58
    %v227 = vunpack.c.l.b16 %v59
    %v228 = vunpack.c.l.b16 %v60
    %v229 = vunpack.c.l.b16 %v61
    %v230 = vunpack.c.l.b16 %v62
    %v231 = vunpack.c.l.b16 %v63
    %v232 = vunpack.c.l.b16 %v64
    %v233 = vunpack.c.l.b16 %v65
    %v234 = vunpack.c.l.b16 %v66
    %v235 = vunpack.c.l.b16 %v67
    %v236 = vunpack.c.l.b16 %v68
    %v237 = vunpack.c.l.b16 %v69
    %v238 = vunpack.c.l.b16 %v70
    %v239 = vunpack.c.l.b16 %v71
    %v240 = vunpack.c.l.b16 %v72
    %v241 = vunpack.c.l.b16 %v73
    %v242 = vunpack.c.l.b16 %v74
    %v243 = vunpack.c.l.b16 %v75
    %v244 = vunpack.c.l.b16 %v76
    %v245 = vunpack.c.l.b16 %v77
    %v246 = vunpack.c.l.b16 %v78
    %v247 = vunpack.c.l.b16 %v79
    %v248 = vunpack.c.l.b16 %v80
    %v249 = vunpack.c.l.b16 %v81
    %v250 = vunpack.c.l.b16 %v82
    %v251 = vunpack.c.l.b16 %v83
    %v252 = vunpack.c.l.b16 %v84
    %v253 = vunpack.c.l.b16 %v85
    %v254 = vunpack.c.l.b16 %v86
    %v255 = vunpack.c.l.b16 %v87
    %v256 = vunpack.c.l.b16 %v88
    %v257 = vunpack.c.l.b16 %v89
    %v258 = vunpack.c.l.b16 %v90
    %v259 = vunpack.c.l.b16 %v91
    %v260 = vunpack.c.l.b16 %v92
    %v261 = vunpack.c.l.b16 %v93
    %v262 = vunpack.c.l.b16 %v94
    %v263 = vunpack.c.l.b16 %v95
    %v264 = vunpack.c.l.b16 %v96
    %v265 = vunpack.c.l.b16 %v97
    %v266 = vunpack.c.l.b16 %v98
    %v267 = vunpack.c.l.b16 %v99
    %v268 = vunpack.c.l.b16 %v100
    %v269 = vunpack.c.l.b16 %v101
    %v270 = vunpack.c.l.b16 %v102
    %v271 = vpack.c.b16 %v200, %v199
    %v272 = vpack.c.b16 %v202, %v201
    %v273 = vpack.c.b16 %v204, %v203
    %v274 = vpack.c.b16 %v206, %v205
    %v275 = vpack.c.b16 %v208, %v207
    %v276 = vpack.c.b16 %v210, %v209
    %v277 = vpack.c.b16 %v212, %v211
    %v278 = vpack.c.b16 %v214, %v213
    %v279 = vpack.c.b16 %v216, %v215
    %v280 = vpack.c.b16 %v218, %v217
    %v281 = vpack.c.b16 %v220, %v219
    %v282 = vpack.c.b16 %v222, %v221
    %v283 = vpack.c.b16 %v224, %v223
    %v284 = vpack.c.b16 %v226, %v225
    %v285 = vpack.c.b16 %v228, %v227
    %v286 = vpack.c.b16 %v230, %v229
    %v287 = vpack.c.b16 %v232, %v231
    %v288 = vpack.c.b16 %v234, %v233
    %v289 = vpack.c.b16 %v236, %v235
    %v290 = vpack.c.b16 %v238, %v237
    %v291 = vpack.c.b16 %v240, %v239
    %v292 = vpack.c.b16 %v242, %v241
    %v293 = vpack.c.b16 %v244, %v243
    %v294 = vpack.c.b16 %v246, %v245
    %v295 = vpack.c.b16 %v248, %v247
    %v296 = vpack.c.b16 %v250, %v249
    %v297 = vpack.c.b16 %v252, %v251
    %v298 = vpack.c.b16 %v254, %v253
    %v299 = vpack.c.b16 %v256, %v255
    %v300 = vpack.c.b16 %v258, %v257
    %v301 = vpack.c.b16 %v260, %v259
    %v302 = vpack.c.b16 %v262, %v261
    %v303 = vpack.c.b16 %v264, %v263
    %v304 = vpack.c.b16 %v266, %v265
    %v305 = vpack.c.b16 %v268, %v267
    %v306 = vpack.c.b16 %v270, %v269
    %vm343 = vcmask 523264
    %v345 = vsel %vm343, %v122, 0
    %347 = vmatprep.subr.bf16.mxu0 0
    %348 = vmatpush1.bf16.msra.mxu0 %v278
    %349 = vmatprep.subr.bf16.mxu0 0
    %350 = vmatpush1.bf16.msra.mxu0 %v277
    %351 = vmatprep.subr.bf16.mxu0 0
    %352 = vmatpush1.bf16.msra.mxu0 %v276
    %353 = vmatprep.subr.bf16.mxu0 0
    %354 = vmatpush1.bf16.msra.mxu0 %v275
    %355 = vmatprep.subr.bf16.mxu0 0
    %356 = vmatpush1.bf16.msra.mxu0 %v274
    %357 = vmatprep.subr.bf16.mxu0 0
    %358 = vmatpush1.bf16.msra.mxu0 %v273
    %359 = vmatprep.subr.bf16.mxu0 0
    %360 = vmatpush1.bf16.msra.mxu0 %v272
    %361 = vmatprep.subr.bf16.mxu0 0
    %362 = vmatpush1.bf16.msra.mxu0 %v271
    %363 = vmatprep.subr.bf16.mxu0 0
    %364 = vmatpush2.bf16.msra.mxu0 %v286
    %365 = vmatprep.subr.bf16.mxu0 0
    %366 = vmatpush2.bf16.msra.mxu0 %v285
    %367 = vmatprep.subr.bf16.mxu0 0
    %368 = vmatpush2.bf16.msra.mxu0 %v284
    %369 = vmatprep.subr.bf16.mxu0 0
    %370 = vmatpush2.bf16.msra.mxu0 %v283
    %371 = vmatprep.subr.bf16.mxu0 0
    %372 = vmatpush2.bf16.msra.mxu0 %v282
    %373 = vmatprep.subr.bf16.mxu0 0
    %374 = vmatpush2.bf16.msra.mxu0 %v281
    %375 = vmatprep.subr.bf16.mxu0 0
    %376 = vmatpush2.bf16.msra.mxu0 %v280
    %377 = vmatprep.subr.bf16.mxu0 0
    %378 = vmatpush2.bf16.msra.mxu0 %v279
    %379 = vmatprep.mubr.bf16.mxu0 %v119
    %380 = vmatmul.mubr.bf16.gmra.mxu0 %v118
    %v381 = vpop.f32.mrf.mxu0
    %v382 = vadd.f32 %v108, %v381
    %v383 = vpop.f32.mrf.mxu0
    %v384 = vpop.f32.mrf.mxu0
    %v385 = vpop.f32.mrf.mxu0
    %386 = vdwg.mxu0
    %387 = vmatprep.subr.bf16.mxu0 0
    %388 = vmatpush1.bf16.msra.mxu0 %v294
    %389 = vmatprep.subr.bf16.mxu0 0
    %390 = vmatpush1.bf16.msra.mxu0 %v293
    %391 = vmatprep.subr.bf16.mxu0 0
    %392 = vmatpush1.bf16.msra.mxu0 %v292
    %393 = vmatprep.subr.bf16.mxu0 0
    %394 = vmatpush1.bf16.msra.mxu0 %v291
    %395 = vmatprep.subr.bf16.mxu0 0
    %396 = vmatpush1.bf16.msra.mxu0 %v290
    %397 = vmatprep.subr.bf16.mxu0 0
    %398 = vmatpush1.bf16.msra.mxu0 %v289
    %399 = vmatprep.subr.bf16.mxu0 0
    %400 = vmatpush1.bf16.msra.mxu0 %v288
    %401 = vmatprep.subr.bf16.mxu0 0
    %402 = vmatpush1.bf16.msra.mxu0 %v287
    %403 = vmatprep.subr.bf16.mxu0 0
    %404 = vmatpush2.bf16.msra.mxu0 %v302
    %405 = vmatprep.subr.bf16.mxu0 0
    %406 = vmatpush2.bf16.msra.mxu0 %v301
    %407 = vmatprep.subr.bf16.mxu0 0
    %408 = vmatpush2.bf16.msra.mxu0 %v300
    %409 = vmatprep.subr.bf16.mxu0 0
    %410 = vmatpush2.bf16.msra.mxu0 %v299
    %411 = vmatprep.subr.bf16.mxu0 0
    %412 = vmatpush2.bf16.msra.mxu0 %v298
    %413 = vmatprep.subr.bf16.mxu0 0
    %414 = vmatpush2.bf16.msra.mxu0 %v297
    %415 = vmatprep.subr.bf16.mxu0 0
    %416 = vmatpush2.bf16.msra.mxu0 %v296
    %417 = vmatprep.subr.bf16.mxu0 0
    %418 = vmatpush2.bf16.msra.mxu0 %v295
    %419 = vmatprep.mubr.bf16.mxu0 %v121
    %420 = vmatmul.mubr.bf16.gmra.mxu0 %v120
    %v421 = vpop.f32.mrf.mxu0
    %v422 = vadd.f32 %v382, %v421
    %v423 = vpop.f32.mrf.mxu0
    %v424 = vpop.f32.mrf.mxu0
    %v425 = vpop.f32.mrf.mxu0
    %426 = vdwg.mxu0
    %427 = vmatprep.subr.bf16.mxu0 0
    %428 = vmatpush1.bf16.msra.mxu0 0
    %429 = vmatprep.subr.bf16.mxu0 0
    %430 = vmatpush1.bf16.msra.mxu0 0
    %431 = vmatprep.subr.bf16.mxu0 0
    %432 = vmatpush1.bf16.msra.mxu0 0
    %433 = vmatprep.subr.bf16.mxu0 0
    %434 = vmatpush1.bf16.msra.mxu0 0
    %435 = vmatprep.subr.bf16.mxu0 0
    %436 = vmatpush1.bf16.msra.mxu0 %v306
    %437 = vmatprep.subr.bf16.mxu0 0
    %438 = vmatpush1.bf16.msra.mxu0 %v305
    %439 = vmatprep.subr.bf16.mxu0 0
    %440 = vmatpush1.bf16.msra.mxu0 %v304
    %441 = vmatprep.subr.bf16.mxu0 0
    %442 = vmatpush1.bf16.msra.mxu0 %v303
    %443 = vmatprep.subr.bf16.mxu0 0
    %444 = vmatpush2.bf16.msra.mxu0 0
    %445 = vmatprep.subr.bf16.mxu0 0
    %446 = vmatpush2.bf16.msra.mxu0 0
    %447 = vmatprep.subr.bf16.mxu0 0
    %448 = vmatpush2.bf16.msra.mxu0 0
    %449 = vmatprep.subr.bf16.mxu0 0
    %450 = vmatpush2.bf16.msra.mxu0 0
    %451 = vmatprep.subr.bf16.mxu0 0
    %452 = vmatpush2.bf16.msra.mxu0 0
    %453 = vmatprep.subr.bf16.mxu0 0
    %454 = vmatpush2.bf16.msra.mxu0 0
    %455 = vmatprep.subr.bf16.mxu0 0
    %456 = vmatpush2.bf16.msra.mxu0 0
    %457 = vmatprep.subr.bf16.mxu0 0
    %458 = vmatpush2.bf16.msra.mxu0 0
    %459 = vmatprep.mubr.bf16.mxu0 0
    %460 = vmatmul.mubr.bf16.gmra.mxu0 %v345
    %v461 = vpop.f32.mrf.mxu0
    %v462 = vadd.f32 %v422, %v461
    %v463 = vpop.f32.mrf.mxu0
    %v464 = vpop.f32.mrf.mxu0
    %v465 = vpop.f32.mrf.mxu0
    %466 = vdwg.mxu0
    %v467 = vld [vmem:[%s3] sm:$0xff]
    %v468 = vadd.f32 %v462, %v467
    %v469 = vmax.f32 %v468, 0.0
    %v470 = vld [vmem:[%s4] sm:$0x3]
    %vm471 = vcmask 64512
    %v473 = vsel %vm471, %v470, 0
    %475 = vmatprep.subr.mxu0 0.0
    %476 = vmatpush1.msra.mxu0 0.0
    %477 = vmatprep.subr.mxu0 0.0
    %478 = vmatpush1.msra.mxu0 0.0
    %479 = vmatprep.subr.mxu0 0.0
    %480 = vmatpush1.msra.mxu0 0.0
    %481 = vmatprep.subr.mxu0 0.0
    %482 = vmatpush1.msra.mxu0 0.0
    %483 = vmatprep.subr.mxu0 0.0
    %484 = vmatpush1.msra.mxu0 0.0
    %485 = vmatprep.subr.mxu0 0.0
    %486 = vmatpush1.msra.mxu0 0.0
    %487 = vmatprep.subr.mxu0 0.0
    %488 = vmatpush1.msra.mxu0 0.0
    %489 = vmatprep.subr.mxu0 0.0
    %490 = vmatpush1.msra.mxu0 0.0
    %491 = vmatprep.subr.mxu0 0.0
    %492 = vmatpush1.msra.mxu0 0.0
    %493 = vmatprep.subr.mxu0 0.0
    %494 = vmatpush1.msra.mxu0 0.0
    %495 = vmatprep.subr.mxu0 0.0
    %496 = vmatpush1.msra.mxu0 0.0
    %497 = vmatprep.subr.mxu0 0.0
    %498 = vmatpush1.msra.mxu0 0.0
    %499 = vmatprep.subr.mxu0 0.0
    %500 = vmatpush1.msra.mxu0 0.0
    %501 = vmatprep.subr.mxu0 0.0
    %502 = vmatpush1.msra.mxu0 0.0
    %503 = vmatprep.subr.mxu0 0.0
    %504 = vmatpush1.msra.mxu0 0.0
    %505 = vmatprep.subr.mxu0 0.0
    %506 = vmatpush1.msra.mxu0 %v469
    %507 = vmatprep.subr.mxu0 0.0
    %508 = vmatpush2.msra.mxu0 0.0
    %509 = vmatprep.subr.mxu0 0.0
    %510 = vmatpush2.msra.mxu0 0.0
    %511 = vmatprep.subr.mxu0 0.0
    %512 = vmatpush2.msra.mxu0 0.0
    %513 = vmatprep.subr.mxu0 0.0
    %514 = vmatpush2.msra.mxu0 0.0
    %515 = vmatprep.subr.mxu0 0.0
    %516 = vmatpush2.msra.mxu0 0.0
    %517 = vmatprep.subr.mxu0 0.0
    %518 = vmatpush2.msra.mxu0 0.0
    %519 = vmatprep.subr.mxu0 0.0
    %520 = vmatpush2.msra.mxu0 0.0
    %521 = vmatprep.subr.mxu0 0.0
    %522 = vmatpush2.msra.mxu0 0.0
    %523 = vmatprep.subr.mxu0 0.0
    %524 = vmatpush2.msra.mxu0 0.0
    %525 = vmatprep.subr.mxu0 0.0
    %526 = vmatpush2.msra.mxu0 0.0
    %527 = vmatprep.subr.mxu0 0.0
    %528 = vmatpush2.msra.mxu0 0.0
    %529 = vmatprep.subr.mxu0 0.0
    %530 = vmatpush2.msra.mxu0 0.0
    %531 = vmatprep.subr.mxu0 0.0
    %532 = vmatpush2.msra.mxu0 0.0
    %533 = vmatprep.subr.mxu0 0.0
    %534 = vmatpush2.msra.mxu0 0.0
    %535 = vmatprep.subr.mxu0 0.0
    %536 = vmatpush2.msra.mxu0 0.0
    %537 = vmatprep.subr.mxu0 0.0
    %538 = vmatpush2.msra.mxu0 0.0
    %539 = vmatprep.mubr.f32.mxu0 0.0
    %540 = vmatmul.mubr.f32.gmra.mxu0 %v473
    %v541 = vpop.f32.mrf.mxu0
    %v542 = vadd.f32 0.0, %v541
    %v543 = vpop.f32.mrf.mxu0
    %544 = vdwg.mxu0
    %v545 = vld [vmem:[%s5] sm:$0xff]
    %v546 = vld [vmem:[%s5 + $0x8] sm:$0xff]
    %v547 = vld [vmem:[%s5 + $0x10] sm:$0xff]
    %v548 = vld [vmem:[%s5 + $0x18] sm:$0xff]
    %v549 = vld [vmem:[%s5 + $0x20] sm:$0xff]
    %v550 = vld [vmem:[%s5 + $0x28] sm:$0xff]
    %v551 = vld [vmem:[%s5 + $0x30] sm:$0xff]
    %v552 = vld [vmem:[%s5 + $0x38] sm:$0xff]
    %v553 = vld [vmem:[%s5 + $0x40] sm:$0xff]
    %v554 = vld [vmem:[%s5 + $0x48] sm:$0xff]
    %v555 = vld [vmem:[%s5 + $0x50] sm:$0xff]
    %v556 = vld [vmem:[%s5 + $0x58] sm:$0xff]
    %v557 = vld [vmem:[%s5 + $0x60] sm:$0xff]
    %v558 = vld [vmem:[%s5 + $0x68] sm:$0xff]
    %v559 = vld [vmem:[%s5 + $0x70] sm:$0xff]
    %v560 = vld [vmem:[%s5 + $0x78] sm:$0xff]
    %v561 = vld [vmem:[%s6] sm:$0x1]
    %v563 = vlaneseq
    %v564 = vshrl.u32 %v563, 7
    %v565 = vsub.s32 0, %v564
    %v566 = vrot.slane %v561, %v565
    %568 = vmatprep.subr.mxu0 0.0
    %569 = vmatpush1.msra.mxu0 %v560
    %570 = vmatprep.subr.mxu0 0.0
    %571 = vmatpush1.msra.mxu0 %v559
    %572 = vmatprep.subr.mxu0 0.0
    %573 = vmatpush1.msra.mxu0 %v558
    %574 = vmatprep.subr.mxu0 0.0
    %575 = vmatpush1.msra.mxu0 %v557
    %576 = vmatprep.subr.mxu0 0.0
    %577 = vmatpush1.msra.mxu0 %v556
    %578 = vmatprep.subr.mxu0 0.0
    %579 = vmatpush1.msra.mxu0 %v555
    %580 = vmatprep.subr.mxu0 0.0
    %581 = vmatpush1.msra.mxu0 %v554
    %582 = vmatprep.subr.mxu0 0.0
    %583 = vmatpush1.msra.mxu0 %v553
    %584 = vmatprep.subr.mxu0 0.0
    %585 = vmatpush1.msra.mxu0 %v552
    %586 = vmatprep.subr.mxu0 0.0
    %587 = vmatpush1.msra.mxu0 %v551
    %588 = vmatprep.subr.mxu0 0.0
    %589 = vmatpush1.msra.mxu0 %v550
    %590 = vmatprep.subr.mxu0 0.0
    %591 = vmatpush1.msra.mxu0 %v549
    %592 = vmatprep.subr.mxu0 0.0
    %593 = vmatpush1.msra.mxu0 %v548
    %594 = vmatprep.subr.mxu0 0.0
    %595 = vmatpush1.msra.mxu0 %v547
    %596 = vmatprep.subr.mxu0 0.0
    %597 = vmatpush1.msra.mxu0 %v546
    %598 = vmatprep.subr.mxu0 0.0
    %599 = vmatpush1.msra.mxu0 %v545
    %600 = vmatprep.subr.mxu0 0.0
    %601 = vmatpush2.msra.mxu0 0.0
    %602 = vmatprep.subr.mxu0 0.0
    %603 = vmatpush2.msra.mxu0 0.0
    %604 = vmatprep.subr.mxu0 0.0
    %605 = vmatpush2.msra.mxu0 0.0
    %606 = vmatprep.subr.mxu0 0.0
    %607 = vmatpush2.msra.mxu0 0.0
    %608 = vmatprep.subr.mxu0 0.0
    %609 = vmatpush2.msra.mxu0 0.0
    %610 = vmatprep.subr.mxu0 0.0
    %611 = vmatpush2.msra.mxu0 0.0
    %612 = vmatprep.subr.mxu0 0.0
    %613 = vmatpush2.msra.mxu0 0.0
    %614 = vmatprep.subr.mxu0 0.0
    %615 = vmatpush2.msra.mxu0 0.0
    %616 = vmatprep.subr.mxu0 0.0
    %617 = vmatpush2.msra.mxu0 0.0
    %618 = vmatprep.subr.mxu0 0.0
    %619 = vmatpush2.msra.mxu0 0.0
    %620 = vmatprep.subr.mxu0 0.0
    %621 = vmatpush2.msra.mxu0 0.0
    %622 = vmatprep.subr.mxu0 0.0
    %623 = vmatpush2.msra.mxu0 0.0
    %624 = vmatprep.subr.mxu0 0.0
    %625 = vmatpush2.msra.mxu0 0.0
    %626 = vmatprep.subr.mxu0 0.0
    %627 = vmatpush2.msra.mxu0 0.0
    %628 = vmatprep.subr.mxu0 0.0
    %629 = vmatpush2.msra.mxu0 0.0
    %630 = vmatprep.subr.mxu0 0.0
    %631 = vmatpush2.msra.mxu0 0.0
    %632 = vmatprep.mubr.f32.mxu0 0.0
    %633 = vmatmul.mubr.f32.gmra.mxu0 %v542
    %v634 = vpop.f32.mrf.mxu0
    %v635 = vadd.f32 %v566, %v634
    %v636 = vpop.f32.mrf.mxu0
    %637 = vdwg.mxu0
    %638 = vst [vmem:[#allocation2] sm:$0x3] %v635
    // Predicated region
    $region30: #{resnet_forward.23} parent=1 // pred_check
      _
    $region31: #{resnet_forward.23} parent=1 // pred_check_branch
      %640 = sbr.rel (0) target = $region33
    $region32: #{resnet_forward.23} parent=1 // pred_region
      %s642 = ssub.s32 32, 32
      %643 = vsyncadd [#allocation3], %s642
      %s645 = sshll.u32 [#allocation2], 4
      %s646 = int_to_ptr.vmem [resolvable:$true] %s645
      %648 = dma.vmem_to_hbm [thread:$0]  %s646, 32, %s7, [#allocation3]
    $region33: #{resnet_forward.23} parent=1 // pred_fallthru
      _
    // Predicated region
    $region34: #{resnet_forward.23} parent=1 // pred_check
      _
    $region35: #{resnet_forward.23} parent=1 // pred_check_branch
      %650 = sbr.rel (0) target = $region37
    $region36: #{resnet_forward.23} parent=1 // pred_region
      %651 = dma.done [#allocation3], 32
    $region37: #{resnet_forward.23} parent=1 // pred_fallthru
      _
    %652 = vsyncpa [#allocation3], 1

</llo_original>
